<compile_context>
chip_gen: v5e
topology: v5e:2x2
jax: 0.10.0
libtpu: 0.0.40
codegen_flags: <defaults>
</compile_context>

<pallas_src>
import functools
import math

import jax
import jax.numpy as jnp
import numpy as np
from jax import lax
from jax.experimental import pallas as pl
from jax.experimental.pallas import tpu as pltpu

_TAPS_2X2 = ((0, 0), (0, 1), (1, 0), (1, 1))


# ----------------------------------------------------------------------------
# In-kernel helper: one column-parity class of a 2x2 stride-1 conv (+bias+ReLU)
# computed as 4 slab matmuls with f32 accumulation (per-tap accumulation).
# ----------------------------------------------------------------------------
def _conv2x2_relu(read_tap, w_ref, b_ref, *, q, rows, wcols, cin):
    """read_tap(cls, dh, joff) -> (rows, wcols, cin) f32 slab.

    w_ref: (4*cin, cout) bf16, tap-major (dh, dw);  b_ref: (1, cout) f32.
    Returns the (rows*wcols, cout) f32 post-ReLU activations for output columns
    of parity class `q` (output col = 2*j + q).
    """
    acc = None
    for t, (dh, dw) in enumerate(_TAPS_2X2):
        cls, joff = (q + dw) % 2, (q + dw) // 2
        tap = read_tap(cls, dh, joff).reshape(rows * wcols, cin).astype(jnp.bfloat16)
        part = jnp.dot(tap, w_ref[pl.ds(t * cin, cin), :],
                       preferred_element_type=jnp.float32)
        acc = part if acc is None else acc + part
    return jnp.maximum(acc + b_ref[...], 0.0)


# ----------------------------------------------------------------------------
# Fused HGStem kernel (one batch element per grid step).
#
# x_ref : (1, 2*(Ho1+1), Wo3+1, 4*c1)   column-parity-split s2d of pad(x, 1)
#         row index = cls*(Ho1+1) + u, i.e. x_s2d[u, 2*j + cls, :]
# ca    : (2, Ho1+1, Wo3+1, cm)         canvas A = F.pad(stem1(x), [0,1,0,1]),
#                                       A[q, r, j] = Apad[r, 2*j + q]
# cb    : (2, Ho1+1, Wo3+1, cm//2)      canvas B = F.pad(stem2a(A), [0,1,0,1])
# cc    : (4, Ho3+1, Wo3+1, 2*cm)       zero-bordered concat [pool(A); stem2b(B)]
#                                       in s2d layout: index rho*2+sig, where
#                                       rho/sig are the row/col parity of the
#                                       *padded* concat (class-1 blocks shifted
#                                       by +1 so the pad=1 border sits at 0).
# o_ref : (1, Ho3*Wo3, c2)              final activations (single block store)
# ----------------------------------------------------------------------------
def _hgstem_kernel(x_ref, w1_ref, b1_ref, w2a_ref, b2a_ref, w2b_ref, b2b_ref,
                   w3_ref, b3_ref, w4_ref, b4_ref, o_ref, ca, cb, cc,
                   *, Ho1, Ho3, Wo3, cm, c1):
    f32 = jnp.float32
    half = cm // 2
    cin1 = 4 * c1

    # ---- stem1: 3x3 stride-2 conv == 2x2 stride-1 conv over the s2d input ----
    for q in (0, 1):
        y1 = _conv2x2_relu(
            lambda cls, dh, joff: x_ref[0, pl.ds(cls * (Ho1 + 1) + dh, Ho1),
                                        pl.ds(joff, Wo3), :],
            w1_ref, b1_ref, q=q, rows=Ho1, wcols=Wo3, cin=cin1)
        ca[q, pl.ds(0, Ho1), pl.ds(0, Wo3), :] = y1.reshape(Ho1, Wo3, cm)
    # F.pad([0,1,0,1]) borders of canvas A (zero bottom row / right column).
    ca[:, Ho1, :, :] = jnp.zeros((2, Wo3 + 1, cm), f32)
    ca[:, :, Wo3, :] = jnp.zeros((2, Ho1 + 1, cm), f32)

    # ---- stem2a: 2x2 stride-1 conv, cm -> cm/2 -> canvas B -------------------
    for q in (0, 1):
        y2a = _conv2x2_relu(
            lambda cls, dh, joff: ca[cls, pl.ds(dh, Ho1), pl.ds(joff, Wo3), :],
            w2a_ref, b2a_ref, q=q, rows=Ho1, wcols=Wo3, cin=cm)
        cb[q, pl.ds(0, Ho1), pl.ds(0, Wo3), :] = y2a.reshape(Ho1, Wo3, half)
    cb[:, Ho1, :, :] = jnp.zeros((2, Wo3 + 1, half), f32)
    cb[:, :, Wo3, :] = jnp.zeros((2, Ho1 + 1, half), f32)

    # ---- stem2b + fused 2x2/stride-1 maxpool + channel concat -> canvas C ----
    for q in (0, 1):
        y2b = _conv2x2_relu(
            lambda cls, dh, joff: cb[cls, pl.ds(dh, Ho1), pl.ds(joff, Wo3), :],
            w2b_ref, b2b_ref, q=q, rows=Ho1, wcols=Wo3, cin=half)
        pool = None
        for dh, dw in _TAPS_2X2:                      # maxpool over canvas A (f32)
            cls, joff = (q + dw) % 2, (q + dw) // 2
            tap = ca[cls, pl.ds(dh, Ho1), pl.ds(joff, Wo3), :]
            pool = tap if pool is None else jnp.maximum(pool, tap)
        v = jnp.concatenate([pool, y2b.reshape(Ho1, Wo3, cm)], axis=-1)
        vr = v.reshape(Ho3, 2, Wo3, 2 * cm)           # row-parity split (free relabel)
        cc[0 + q, pl.ds(0, Ho3), pl.ds(q, Wo3), :] = vr[:, 0]   # even rows
        cc[2 + q, pl.ds(1, Ho3), pl.ds(q, Wo3), :] = vr[:, 1]   # odd rows (+1 shift)
    # stem3's pad=1 borders: top padded row (row-parity 1, index 0) and left
    # padded column (col-parity 1, index 0).
    cc[pl.ds(2, 2), 0, :, :] = jnp.zeros((2, Wo3 + 1, 2 * cm), f32)
    cc[1, :, 0, :] = jnp.zeros((Ho3 + 1, 2 * cm), f32)
    cc[3, :, 0, :] = jnp.zeros((Ho3 + 1, 2 * cm), f32)

    # ---- stem3: 3x3 stride-2 conv read straight from the s2d concat canvas ---
    acc3 = None
    for dh in range(3):
        rho, koff = ((1, 0), (0, 0), (1, 1))[dh]
        for dw in range(3):
            sig, moff = ((1, 0), (0, 0), (1, 1))[dw]
            tap = cc[rho * 2 + sig, pl.ds(koff, Ho3), pl.ds(moff, Wo3), :]
            tap = tap.reshape(Ho3 * Wo3, 2 * cm).astype(jnp.bfloat16)
            part = jnp.dot(tap, w3_ref[pl.ds((dh * 3 + dw) * 2 * cm, 2 * cm), :],
                           preferred_element_type=jnp.float32)
            acc3 = part if acc3 is None else acc3 + part
    y3 = jnp.maximum(acc3 + b3_ref[...], 0.0)

    # ---- stem4: 1x1 conv, single contiguous output store ---------------------
    y4 = jnp.dot(y3.astype(jnp.bfloat16), w4_ref[...],
                 preferred_element_type=jnp.float32) + b4_ref[...]
    o_ref[0] = jnp.maximum(y4, 0.0)


# ----------------------------------------------------------------------------
# Forward wrapper
# ----------------------------------------------------------------------------
def hgstem_forward(x_nhwc, p):
    """HGStem forward.  x_nhwc: (N, H, W, c1) with H, W divisible by 4."""
    n, h, w, c1 = x_nhwc.shape
    assert h % 4 == 0 and w % 4 == 0, "HGStem kernel assumes H, W divisible by 4"
    ho1, wo1, ho3, wo3 = h // 2, w // 2, h // 4, w // 4
    cm = p["stem1"][0].shape[-1]
    c2 = p["stem4"][0].shape[-1]

    # One-time XLA input prep (on the smallest tensor of the pipeline):
    # pad=1 + factor-2 space-to-depth (stride-2 stem1 -> stride-1 2x2 conv) +
    # column-parity split so every in-kernel access is an unstrided slab slice.
    xp = jnp.pad(x_nhwc, ((0, 0), (1, 1), (1, 1), (0, 0)))
    xs = xp.reshape(n, ho1 + 1, 2, wo1 + 1, 2, c1).transpose(0, 1, 3, 2, 4, 5)
    xs = xs.reshape(n, ho1 + 1, wo1 + 1, 4 * c1)
    xs = jnp.pad(xs, ((0, 0), (0, 0), (0, 1), (0, 0)))   # even #cols; pad col never read
    xq = xs.reshape(n, ho1 + 1, wo3 + 1, 2, 4 * c1).transpose(0, 3, 1, 2, 4)
    xq = xq.reshape(n, 2 * (ho1 + 1), wo3 + 1, 4 * c1)   # row = cls*(ho1+1) + u

    (w1, b1), (w2a, b2a) = p["stem1"], p["stem2a"]
    (w2b, b2b), (w3, b3), (w4, b4) = p["stem2b"], p["stem3"], p["stem4"]

    def full(a):
        return pl.BlockSpec(a.shape, lambda i: (0,) * a.ndim)

    out = pl.pallas_call(
        functools.partial(_hgstem_kernel, Ho1=ho1, Ho3=ho3, Wo3=wo3, cm=cm, c1=c1),
        out_shape=jax.ShapeDtypeStruct((n, ho3 * wo3, c2), jnp.float32),
        grid=(n,),
        in_specs=[pl.BlockSpec((1, 2 * (ho1 + 1), wo3 + 1, 4 * c1),
                               lambda i: (i, 0, 0, 0))]
                 + [full(a) for a in (w1, b1, w2a, b2a, w2b, b2b, w3, b3, w4, b4)],
        out_specs=pl.BlockSpec((1, ho3 * wo3, c2), lambda i: (i, 0, 0)),
        scratch_shapes=[
            pltpu.VMEM((2, ho1 + 1, wo3 + 1, cm), jnp.float32),        # canvas A
            pltpu.VMEM((2, ho1 + 1, wo3 + 1, cm // 2), jnp.float32),   # canvas B
            pltpu.VMEM((4, ho3 + 1, wo3 + 1, 2 * cm), jnp.float32),    # s2d concat
        ],
        compiler_params=pltpu.CompilerParams(
            dimension_semantics=("parallel",),
            vmem_limit_bytes=32 * 1024 * 1024),
    )(xq, w1, b1, w2a, b2a, w2b, b2b, w3, b3, w4, b4)
    return out.reshape(n, ho3, wo3, c2)


# ----------------------------------------------------------------------------
# Parameter construction (BN folded, eval semantics) + one-time host-side prep
# ----------------------------------------------------------------------------
def make_conv_bn_params(key, cin, cout, k, eps=1e-5):
    """Deterministic Conv+BN init; returns BN-folded (w, b); w: (k,k,Cin,Cout) HWIO."""
    kw_, kg, kb_, km, kv = jax.random.split(key, 5)
    w = jax.random.normal(kw_, (k, k, cin, cout), jnp.float32) / math.sqrt(k * k * cin)
    gamma = 1.0 + 0.1 * jax.random.normal(kg, (cout,), jnp.float32)
    beta = 0.1 * jax.random.normal(kb_, (cout,), jnp.float32)
    mean = 0.1 * jax.random.normal(km, (cout,), jnp.float32)
    var = 1.0 + 0.1 * jax.random.uniform(kv, (cout,), jnp.float32)
    scale = gamma / jnp.sqrt(var + eps)
    return w * scale[None, None, None, :], beta - mean * scale


def make_hgstem_params(key, c1, cm, c2):
    ks = jax.random.split(key, 5)
    return {
        "stem1": make_conv_bn_params(ks[0], c1, cm, 3),
        "stem2a": make_conv_bn_params(ks[1], cm, cm // 2, 2),
        "stem2b": make_conv_bn_params(ks[2], cm // 2, cm, 2),
        "stem3": make_conv_bn_params(ks[3], cm * 2, cm, 3),
        "stem4": make_conv_bn_params(ks[4], cm, c2, 1),
    }


def _s2d_weights_np(w, s=2):
    """(k,k,Cin,Cout) stride-s conv -> stride-1 conv weights over a space-to-depth
    input, flattened tap-major to (kb*kb * s*s*Cin, Cout).  Host-side numpy."""
    k = w.shape[0]
    cin, cout = w.shape[2], w.shape[3]
    kb = -(-k // s)
    w_e = np.zeros((kb, kb, s, s, cin, cout), w.dtype)
    for kh in range(k):
        for kw in range(k):
            w_e[kh // s, kw // s, kh % s, kw % s] = w[kh, kw]
    return w_e.reshape(kb * kb * s * s * cin, cout)


def prepare_kernel_params(raw):
    """One-time host-side weight prep: stem1 rewritten as a stride-1 conv over a
    space-to-depth input, every conv flattened tap-major, weights cast to bf16
    (MXU operands); biases stay f32 as (1, Cout)."""
    out = {}
    for name, (w, b) in raw.items():
        w_np = np.asarray(w, np.float32)
        if name == "stem1":
            w_flat = _s2d_weights_np(w_np)                      # (4*4*c1, cm)
        else:
            k, _, cin, cout = w_np.shape
            w_flat = w_np.reshape(k * k * cin, cout)            # tap-major (kh, kw, cin)
        out[name] = (jnp.asarray(w_flat, jnp.bfloat16),
                     jnp.asarray(np.asarray(b, np.float32).reshape(1, -1)))
    return out


# ----------------------------------------------------------------------------
# Pure-JAX reference (mirrors the kernel's bf16 MXU-operand rounding so the
# check stays tight while the matmuls use bf16 inputs / f32 accumulation).
# ----------------------------------------------------------------------------
def _bf16_round(t):
    return t.astype(jnp.bfloat16).astype(jnp.float32)


def _conv_ref(x, w, b, stride, pad):
    y = lax.conv_general_dilated(
        _bf16_round(x), _bf16_round(w), (stride, stride), [(pad, pad), (pad, pad)],
        dimension_numbers=("NHWC", "HWIO", "NHWC"),
        precision=lax.Precision.HIGHEST)
    return jax.nn.relu(y + b[None, None, None, :])


def hgstem_ref(x, p):
    x = _conv_ref(x, *p["stem1"], 2, 1)
    x = jnp.pad(x, ((0, 0), (0, 1), (0, 1), (0, 0)))
    x2 = _conv_ref(x, *p["stem2a"], 1, 0)
    x2 = jnp.pad(x2, ((0, 0), (0, 1), (0, 1), (0, 0)))
    x2 = _conv_ref(x2, *p["stem2b"], 1, 0)
    x1 = lax.reduce_window(x, -jnp.inf, lax.max, (1, 2, 2, 1), (1, 1, 1, 1), "VALID")
    x = jnp.concatenate([x1, x2], axis=-1)
    x = _conv_ref(x, *p["stem3"], 2, 1)
    x = _conv_ref(x, *p["stem4"], 1, 0)
    return x


# ----------------------------------------------------------------------------
if __name__ == "__main__":
    # Small HGStem-consistent shapes.  Spatial 32 keeps W/4 a multiple of 8 so
    # every in-kernel reshape is a pure (free) sublane relabel.
    N, C1, CM, C2, H, W = 2, 4, 16, 32, 32, 32

    key = jax.random.PRNGKey(0)
    kx, kp = jax.random.split(key)
    x_nchw = jax.random.normal(kx, (N, C1, H, W), jnp.float32)   # PyTorch layout
    x_nhwc = jnp.transpose(x_nchw, (0, 2, 3, 1))                 # kernel layout

    raw_params = make_hgstem_params(kp, C1, CM, C2)
    kernel_params = prepare_kernel_params(raw_params)            # one-time host prep

    out_nhwc = jax.jit(hgstem_forward)(x_nhwc, kernel_params)
    out_nhwc = jax.block_until_ready(out_nhwc)

    ref_nhwc = jax.block_until_ready(jax.jit(hgstem_ref)(x_nhwc, raw_params))
    assert out_nhwc.shape == (N, H // 4, W // 4, C2), out_nhwc.shape
    # Tolerance accounts for bf16-boundary flips caused by f32 summation-order
    # differences between the MXU kernel and the XLA reference.
    np.testing.assert_allclose(np.asarray(out_nhwc), np.asarray(ref_nhwc),
                               rtol=2e-2, atol=2e-2)

    print("KERNEL_OK")
</pallas_src>

<mosaic_0001>
module attributes {stable_mosaic.version = 11 : i64} {
  func.func @_hgstem_kernel(%arg0: i32, %arg1: memref<1x34x9x16xf32, #tpu.memory_space<vmem>>, %arg2: memref<64x16xbf16, #tpu.memory_space<vmem>>, %arg3: memref<1x16xf32, #tpu.memory_space<vmem>>, %arg4: memref<64x8xbf16, #tpu.memory_space<vmem>>, %arg5: memref<1x8xf32, #tpu.memory_space<vmem>>, %arg6: memref<32x16xbf16, #tpu.memory_space<vmem>>, %arg7: memref<1x16xf32, #tpu.memory_space<vmem>>, %arg8: memref<288x16xbf16, #tpu.memory_space<vmem>>, %arg9: memref<1x16xf32, #tpu.memory_space<vmem>>, %arg10: memref<16x32xbf16, #tpu.memory_space<vmem>>, %arg11: memref<1x32xf32, #tpu.memory_space<vmem>>, %arg12: memref<1x64x32xf32, #tpu.memory_space<vmem>>, %arg13: memref<2x17x9x16xf32, #tpu.memory_space<vmem>>, %arg14: memref<2x17x9x8xf32, #tpu.memory_space<vmem>>, %arg15: memref<4x9x9x32xf32, #tpu.memory_space<vmem>>) attributes {dimension_semantics = [#tpu.dimension_semantics<parallel>], iteration_bounds = array<i64: 2>, scalar_prefetch = 0 : i64, scratch_operands = 3 : i64, tpu.core_type = #tpu.core_type<tc>, window_params = [{transform_indices = @transform_0, window_bounds = array<i64: 1, 34, 9, 16>}, {pipeline_mode = #tpu.pipeline_mode<synchronous>, transform_indices = @transform_1, window_bounds = array<i64: 64, 16>}, {pipeline_mode = #tpu.pipeline_mode<synchronous>, transform_indices = @transform_2, window_bounds = array<i64: 1, 16>}, {pipeline_mode = #tpu.pipeline_mode<synchronous>, transform_indices = @transform_3, window_bounds = array<i64: 64, 8>}, {pipeline_mode = #tpu.pipeline_mode<synchronous>, transform_indices = @transform_4, window_bounds = array<i64: 1, 8>}, {pipeline_mode = #tpu.pipeline_mode<synchronous>, transform_indices = @transform_5, window_bounds = array<i64: 32, 16>}, {pipeline_mode = #tpu.pipeline_mode<synchronous>, transform_indices = @transform_6, window_bounds = array<i64: 1, 16>}, {pipeline_mode = #tpu.pipeline_mode<synchronous>, transform_indices = @transform_7, window_bounds = array<i64: 288, 16>}, {pipeline_mode = #tpu.pipeline_mode<synchronous>, transform_indices = @transform_8, window_bounds = array<i64: 1, 16>}, {pipeline_mode = #tpu.pipeline_mode<synchronous>, transform_indices = @transform_9, window_bounds = array<i64: 16, 32>}, {pipeline_mode = #tpu.pipeline_mode<synchronous>, transform_indices = @transform_10, window_bounds = array<i64: 1, 32>}, {transform_indices = @transform_11, window_bounds = array<i64: 1, 64, 32>}]} {
    %c0 = arith.constant 0 : index
    %c0_0 = arith.constant 0 : index
    %c0_1 = arith.constant 0 : index
    %c0_2 = arith.constant 0 : index
    %0 = vector.load %arg1[%c0, %c0_0, %c0_1, %c0_2] : memref<1x34x9x16xf32, #tpu.memory_space<vmem>>, vector<1x16x8x16xf32>
    %1 = vector.shape_cast %0 : vector<1x16x8x16xf32> to vector<16x8x16xf32>
    %2 = vector.shape_cast %1 : vector<16x8x16xf32> to vector<128x16xf32>
    %3 = arith.truncf %2 : vector<128x16xf32> to vector<128x16xbf16>
    %c0_3 = arith.constant 0 : index
    %c0_4 = arith.constant 0 : index
    %4 = vector.load %arg2[%c0_3, %c0_4] : memref<64x16xbf16, #tpu.memory_space<vmem>>, vector<16x16xbf16>
    %cst = arith.constant dense<0.000000e+00> : vector<128x16xf32>
    %5 = tpu.matmul %3, %4, %cst {dimension_numbers = #tpu.dot_dimension_numbers<[1], [0], [0], [1], [0, 0, 1, 1], [], []>} : vector<128x16xbf16>, vector<16x16xbf16>, vector<128x16xf32> -> vector<128x16xf32>
    %c0_5 = arith.constant 0 : index
    %c17 = arith.constant 17 : index
    %c0_6 = arith.constant 0 : index
    %c0_7 = arith.constant 0 : index
    %6 = vector.load %arg1[%c0_5, %c17, %c0_6, %c0_7] : memref<1x34x9x16xf32, #tpu.memory_space<vmem>>, vector<1x16x8x16xf32>
    %7 = vector.shape_cast %6 : vector<1x16x8x16xf32> to vector<16x8x16xf32>
    %8 = vector.shape_cast %7 : vector<16x8x16xf32> to vector<128x16xf32>
    %9 = arith.truncf %8 : vector<128x16xf32> to vector<128x16xbf16>
    %c16 = arith.constant 16 : index
    %c0_8 = arith.constant 0 : index
    %10 = vector.load %arg2[%c16, %c0_8] : memref<64x16xbf16, #tpu.memory_space<vmem>>, vector<16x16xbf16>
    %cst_9 = arith.constant dense<0.000000e+00> : vector<128x16xf32>
    %11 = tpu.matmul %9, %10, %cst_9 {dimension_numbers = #tpu.dot_dimension_numbers<[1], [0], [0], [1], [0, 0, 1, 1], [], []>} : vector<128x16xbf16>, vector<16x16xbf16>, vector<128x16xf32> -> vector<128x16xf32>
    %12 = arith.addf %5, %11 : vector<128x16xf32>
    %c0_10 = arith.constant 0 : index
    %c1 = arith.constant 1 : index
    %c0_11 = arith.constant 0 : index
    %c0_12 = arith.constant 0 : index
    %13 = vector.load %arg1[%c0_10, %c1, %c0_11, %c0_12] : memref<1x34x9x16xf32, #tpu.memory_space<vmem>>, vector<1x16x8x16xf32>
    %14 = vector.shape_cast %13 : vector<1x16x8x16xf32> to vector<16x8x16xf32>
    %15 = vector.shape_cast %14 : vector<16x8x16xf32> to vector<128x16xf32>
    %16 = arith.truncf %15 : vector<128x16xf32> to vector<128x16xbf16>
    %c32 = arith.constant 32 : index
    %c0_13 = arith.constant 0 : index
    %17 = vector.load %arg2[%c32, %c0_13] : memref<64x16xbf16, #tpu.memory_space<vmem>>, vector<16x16xbf16>
    %cst_14 = arith.constant dense<0.000000e+00> : vector<128x16xf32>
    %18 = tpu.matmul %16, %17, %cst_14 {dimension_numbers = #tpu.dot_dimension_numbers<[1], [0], [0], [1], [0, 0, 1, 1], [], []>} : vector<128x16xbf16>, vector<16x16xbf16>, vector<128x16xf32> -> vector<128x16xf32>
    %19 = arith.addf %12, %18 : vector<128x16xf32>
    %c0_15 = arith.constant 0 : index
    %c18 = arith.constant 18 : index
    %c0_16 = arith.constant 0 : index
    %c0_17 = arith.constant 0 : index
    %20 = vector.load %arg1[%c0_15, %c18, %c0_16, %c0_17] : memref<1x34x9x16xf32, #tpu.memory_space<vmem>>, vector<1x16x8x16xf32>
    %21 = vector.shape_cast %20 : vector<1x16x8x16xf32> to vector<16x8x16xf32>
    %22 = vector.shape_cast %21 : vector<16x8x16xf32> to vector<128x16xf32>
    %23 = arith.truncf %22 : vector<128x16xf32> to vector<128x16xbf16>
    %c48 = arith.constant 48 : index
    %c0_18 = arith.constant 0 : index
    %24 = vector.load %arg2[%c48, %c0_18] : memref<64x16xbf16, #tpu.memory_space<vmem>>, vector<16x16xbf16>
    %cst_19 = arith.constant dense<0.000000e+00> : vector<128x16xf32>
    %25 = tpu.matmul %23, %24, %cst_19 {dimension_numbers = #tpu.dot_dimension_numbers<[1], [0], [0], [1], [0, 0, 1, 1], [], []>} : vector<128x16xbf16>, vector<16x16xbf16>, vector<128x16xf32> -> vector<128x16xf32>
    %26 = arith.addf %19, %25 : vector<128x16xf32>
    %c0_20 = arith.constant 0 : index
    %c0_21 = arith.constant 0 : index
    %27 = vector.load %arg3[%c0_20, %c0_21] : memref<1x16xf32, #tpu.memory_space<vmem>>, vector<1x16xf32>
    %28 = vector.broadcast %27 : vector<1x16xf32> to vector<128x16xf32>
    %29 = arith.addf %26, %28 : vector<128x16xf32>
    %cst_22 = arith.constant 0.000000e+00 : f32
    %30 = vector.broadcast %cst_22 : f32 to vector<128x16xf32>
    %31 = arith.maximumf %29, %30 : vector<128x16xf32>
    %32 = vector.shape_cast %31 : vector<128x16xf32> to vector<16x8x16xf32>
    %c0_23 = arith.constant 0 : index
    %c0_24 = arith.constant 0 : index
    %c0_25 = arith.constant 0 : index
    %c0_26 = arith.constant 0 : index
    %33 = vector.load %arg13[%c0_23, %c0_24, %c0_25, %c0_26] : memref<2x17x9x16xf32, #tpu.memory_space<vmem>>, vector<1x16x8x16xf32>
    %34 = vector.shape_cast %33 : vector<1x16x8x16xf32> to vector<16x8x16xf32>
    %35 = vector.shape_cast %32 : vector<16x8x16xf32> to vector<1x16x8x16xf32>
    tpu.vector_store %arg13[%c0_23, %c0_24, %c0_25, %c0_26], %35 {strides = array<i32>} : memref<2x17x9x16xf32, #tpu.memory_space<vmem>>, vector<1x16x8x16xf32>,
    %c0_27 = arith.constant 0 : index
    %c17_28 = arith.constant 17 : index
    %c0_29 = arith.constant 0 : index
    %c0_30 = arith.constant 0 : index
    %36 = vector.load %arg1[%c0_27, %c17_28, %c0_29, %c0_30] : memref<1x34x9x16xf32, #tpu.memory_space<vmem>>, vector<1x16x8x16xf32>
    %37 = vector.shape_cast %36 : vector<1x16x8x16xf32> to vector<16x8x16xf32>
    %38 = vector.shape_cast %37 : vector<16x8x16xf32> to vector<128x16xf32>
    %39 = arith.truncf %38 : vector<128x16xf32> to vector<128x16xbf16>
    %c0_31 = arith.constant 0 : index
    %c0_32 = arith.constant 0 : index
    %40 = vector.load %arg2[%c0_31, %c0_32] : memref<64x16xbf16, #tpu.memory_space<vmem>>, vector<16x16xbf16>
    %cst_33 = arith.constant dense<0.000000e+00> : vector<128x16xf32>
    %41 = tpu.matmul %39, %40, %cst_33 {dimension_numbers = #tpu.dot_dimension_numbers<[1], [0], [0], [1], [0, 0, 1, 1], [], []>} : vector<128x16xbf16>, vector<16x16xbf16>, vector<128x16xf32> -> vector<128x16xf32>
    %c0_34 = arith.constant 0 : index
    %c0_35 = arith.constant 0 : index
    %c1_36 = arith.constant 1 : index
    %c0_37 = arith.constant 0 : index
    %42 = vector.load %arg1[%c0_34, %c0_35, %c1_36, %c0_37] : memref<1x34x9x16xf32, #tpu.memory_space<vmem>>, vector<1x16x8x16xf32>
    %43 = vector.shape_cast %42 : vector<1x16x8x16xf32> to vector<16x8x16xf32>
    %44 = vector.shape_cast %43 : vector<16x8x16xf32> to vector<128x16xf32>
    %45 = arith.truncf %44 : vector<128x16xf32> to vector<128x16xbf16>
    %c16_38 = arith.constant 16 : index
    %c0_39 = arith.constant 0 : index
    %46 = vector.load %arg2[%c16_38, %c0_39] : memref<64x16xbf16, #tpu.memory_space<vmem>>, vector<16x16xbf16>
    %cst_40 = arith.constant dense<0.000000e+00> : vector<128x16xf32>
    %47 = tpu.matmul %45, %46, %cst_40 {dimension_numbers = #tpu.dot_dimension_numbers<[1], [0], [0], [1], [0, 0, 1, 1], [], []>} : vector<128x16xbf16>, vector<16x16xbf16>, vector<128x16xf32> -> vector<128x16xf32>
    %48 = arith.addf %41, %47 : vector<128x16xf32>
    %c0_41 = arith.constant 0 : index
    %c18_42 = arith.constant 18 : index
    %c0_43 = arith.constant 0 : index
    %c0_44 = arith.constant 0 : index
    %49 = vector.load %arg1[%c0_41, %c18_42, %c0_43, %c0_44] : memref<1x34x9x16xf32, #tpu.memory_space<vmem>>, vector<1x16x8x16xf32>
    %50 = vector.shape_cast %49 : vector<1x16x8x16xf32> to vector<16x8x16xf32>
    %51 = vector.shape_cast %50 : vector<16x8x16xf32> to vector<128x16xf32>
    %52 = arith.truncf %51 : vector<128x16xf32> to vector<128x16xbf16>
    %c32_45 = arith.constant 32 : index
    %c0_46 = arith.constant 0 : index
    %53 = vector.load %arg2[%c32_45, %c0_46] : memref<64x16xbf16, #tpu.memory_space<vmem>>, vector<16x16xbf16>
    %cst_47 = arith.constant dense<0.000000e+00> : vector<128x16xf32>
    %54 = tpu.matmul %52, %53, %cst_47 {dimension_numbers = #tpu.dot_dimension_numbers<[1], [0], [0], [1], [0, 0, 1, 1], [], []>} : vector<128x16xbf16>, vector<16x16xbf16>, vector<128x16xf32> -> vector<128x16xf32>
    %55 = arith.addf %48, %54 : vector<128x16xf32>
    %c0_48 = arith.constant 0 : index
    %c1_49 = arith.constant 1 : index
    %c1_50 = arith.constant 1 : index
    %c0_51 = arith.constant 0 : index
    %56 = vector.load %arg1[%c0_48, %c1_49, %c1_50, %c0_51] : memref<1x34x9x16xf32, #tpu.memory_space<vmem>>, vector<1x16x8x16xf32>
    %57 = vector.shape_cast %56 : vector<1x16x8x16xf32> to vector<16x8x16xf32>
    %58 = vector.shape_cast %57 : vector<16x8x16xf32> to vector<128x16xf32>
    %59 = arith.truncf %58 : vector<128x16xf32> to vector<128x16xbf16>
    %c48_52 = arith.constant 48 : index
    %c0_53 = arith.constant 0 : index
    %60 = vector.load %arg2[%c48_52, %c0_53] : memref<64x16xbf16, #tpu.memory_space<vmem>>, vector<16x16xbf16>
    %cst_54 = arith.constant dense<0.000000e+00> : vector<128x16xf32>
    %61 = tpu.matmul %59, %60, %cst_54 {dimension_numbers = #tpu.dot_dimension_numbers<[1], [0], [0], [1], [0, 0, 1, 1], [], []>} : vector<128x16xbf16>, vector<16x16xbf16>, vector<128x16xf32> -> vector<128x16xf32>
    %62 = arith.addf %55, %61 : vector<128x16xf32>
    %c0_55 = arith.constant 0 : index
    %c0_56 = arith.constant 0 : index
    %63 = vector.load %arg3[%c0_55, %c0_56] : memref<1x16xf32, #tpu.memory_space<vmem>>, vector<1x16xf32>
    %64 = vector.broadcast %63 : vector<1x16xf32> to vector<128x16xf32>
    %65 = arith.addf %62, %64 : vector<128x16xf32>
    %cst_57 = arith.constant 0.000000e+00 : f32
    %66 = vector.broadcast %cst_57 : f32 to vector<128x16xf32>
    %67 = arith.maximumf %65, %66 : vector<128x16xf32>
    %68 = vector.shape_cast %67 : vector<128x16xf32> to vector<16x8x16xf32>
    %c1_58 = arith.constant 1 : index
    %c0_59 = arith.constant 0 : index
    %c0_60 = arith.constant 0 : index
    %c0_61 = arith.constant 0 : index
    %69 = vector.load %arg13[%c1_58, %c0_59, %c0_60, %c0_61] : memref<2x17x9x16xf32, #tpu.memory_space<vmem>>, vector<1x16x8x16xf32>
    %70 = vector.shape_cast %69 : vector<1x16x8x16xf32> to vector<16x8x16xf32>
    %71 = vector.shape_cast %68 : vector<16x8x16xf32> to vector<1x16x8x16xf32>
    tpu.vector_store %arg13[%c1_58, %c0_59, %c0_60, %c0_61], %71 {strides = array<i32>} : memref<2x17x9x16xf32, #tpu.memory_space<vmem>>, vector<1x16x8x16xf32>,
    %cst_62 = arith.constant 0.000000e+00 : f32
    %72 = vector.broadcast %cst_62 : f32 to vector<2x9x16xf32>
    %c0_63 = arith.constant 0 : index
    %c16_64 = arith.constant 16 : index
    %c0_65 = arith.constant 0 : index
    %c0_66 = arith.constant 0 : index
    %73 = vector.load %arg13[%c0_63, %c16_64, %c0_65, %c0_66] : memref<2x17x9x16xf32, #tpu.memory_space<vmem>>, vector<2x1x9x16xf32>
    %74 = vector.shape_cast %73 : vector<2x1x9x16xf32> to vector<2x9x16xf32>
    %75 = vector.shape_cast %72 : vector<2x9x16xf32> to vector<2x1x9x16xf32>
    tpu.vector_store %arg13[%c0_63, %c16_64, %c0_65, %c0_66], %75 {strides = array<i32>} : memref<2x17x9x16xf32, #tpu.memory_space<vmem>>, vector<2x1x9x16xf32>,
    %cst_67 = arith.constant 0.000000e+00 : f32
    %76 = vector.broadcast %cst_67 : f32 to vector<2x17x16xf32>
    %c0_68 = arith.constant 0 : index
    %c0_69 = arith.constant 0 : index
    %c8 = arith.constant 8 : index
    %c0_70 = arith.constant 0 : index
    %77 = vector.load %arg13[%c0_68, %c0_69, %c8, %c0_70] : memref<2x17x9x16xf32, #tpu.memory_space<vmem>>, vector<2x17x1x16xf32>
    %78 = vector.shape_cast %77 : vector<2x17x1x16xf32> to vector<2x17x16xf32>
    %79 = vector.shape_cast %76 : vector<2x17x16xf32> to vector<2x17x1x16xf32>
    tpu.vector_store %arg13[%c0_68, %c0_69, %c8, %c0_70], %79 {strides = array<i32>} : memref<2x17x9x16xf32, #tpu.memory_space<vmem>>, vector<2x17x1x16xf32>,
    %c0_71 = arith.constant 0 : index
    %c0_72 = arith.constant 0 : index
    %c0_73 = arith.constant 0 : index
    %c0_74 = arith.constant 0 : index
    %80 = vector.load %arg13[%c0_71, %c0_72, %c0_73, %c0_74] : memref<2x17x9x16xf32, #tpu.memory_space<vmem>>, vector<1x16x8x16xf32>
    %81 = vector.shape_cast %80 : vector<1x16x8x16xf32> to vector<16x8x16xf32>
    %82 = vector.shape_cast %81 : vector<16x8x16xf32> to vector<128x16xf32>
    %83 = arith.truncf %82 : vector<128x16xf32> to vector<128x16xbf16>
    %c0_75 = arith.constant 0 : index
    %c0_76 = arith.constant 0 : index
    %84 = vector.load %arg4[%c0_75, %c0_76] : memref<64x8xbf16, #tpu.memory_space<vmem>>, vector<16x8xbf16>
    %cst_77 = arith.constant dense<0.000000e+00> : vector<128x8xf32>
    %85 = tpu.matmul %83, %84, %cst_77 {dimension_numbers = #tpu.dot_dimension_numbers<[1], [0], [0], [1], [0, 0, 1, 1], [], []>} : vector<128x16xbf16>, vector<16x8xbf16>, vector<128x8xf32> -> vector<128x8xf32>
    %c1_78 = arith.constant 1 : index
    %c0_79 = arith.constant 0 : index
    %c0_80 = arith.constant 0 : index
    %c0_81 = arith.constant 0 : index
    %86 = vector.load %arg13[%c1_78, %c0_79, %c0_80, %c0_81] : memref<2x17x9x16xf32, #tpu.memory_space<vmem>>, vector<1x16x8x16xf32>
    %87 = vector.shape_cast %86 : vector<1x16x8x16xf32> to vector<16x8x16xf32>
    %88 = vector.shape_cast %87 : vector<16x8x16xf32> to vector<128x16xf32>
    %89 = arith.truncf %88 : vector<128x16xf32> to vector<128x16xbf16>
    %c16_82 = arith.constant 16 : index
    %c0_83 = arith.constant 0 : index
    %90 = vector.load %arg4[%c16_82, %c0_83] : memref<64x8xbf16, #tpu.memory_space<vmem>>, vector<16x8xbf16>
    %cst_84 = arith.constant dense<0.000000e+00> : vector<128x8xf32>
    %91 = tpu.matmul %89, %90, %cst_84 {dimension_numbers = #tpu.dot_dimension_numbers<[1], [0], [0], [1], [0, 0, 1, 1], [], []>} : vector<128x16xbf16>, vector<16x8xbf16>, vector<128x8xf32> -> vector<128x8xf32>
    %92 = arith.addf %85, %91 : vector<128x8xf32>
    %c0_85 = arith.constant 0 : index
    %c1_86 = arith.constant 1 : index
    %c0_87 = arith.constant 0 : index
    %c0_88 = arith.constant 0 : index
    %93 = vector.load %arg13[%c0_85, %c1_86, %c0_87, %c0_88] : memref<2x17x9x16xf32, #tpu.memory_space<vmem>>, vector<1x16x8x16xf32>
    %94 = vector.shape_cast %93 : vector<1x16x8x16xf32> to vector<16x8x16xf32>
    %95 = vector.shape_cast %94 : vector<16x8x16xf32> to vector<128x16xf32>
    %96 = arith.truncf %95 : vector<128x16xf32> to vector<128x16xbf16>
    %c32_89 = arith.constant 32 : index
    %c0_90 = arith.constant 0 : index
    %97 = vector.load %arg4[%c32_89, %c0_90] : memref<64x8xbf16, #tpu.memory_space<vmem>>, vector<16x8xbf16>
    %cst_91 = arith.constant dense<0.000000e+00> : vector<128x8xf32>
    %98 = tpu.matmul %96, %97, %cst_91 {dimension_numbers = #tpu.dot_dimension_numbers<[1], [0], [0], [1], [0, 0, 1, 1], [], []>} : vector<128x16xbf16>, vector<16x8xbf16>, vector<128x8xf32> -> vector<128x8xf32>
    %99 = arith.addf %92, %98 : vector<128x8xf32>
    %c1_92 = arith.constant 1 : index
    %c1_93 = arith.constant 1 : index
    %c0_94 = arith.constant 0 : index
    %c0_95 = arith.constant 0 : index
    %100 = vector.load %arg13[%c1_92, %c1_93, %c0_94, %c0_95] : memref<2x17x9x16xf32, #tpu.memory_space<vmem>>, vector<1x16x8x16xf32>
    %101 = vector.shape_cast %100 : vector<1x16x8x16xf32> to vector<16x8x16xf32>
    %102 = vector.shape_cast %101 : vector<16x8x16xf32> to vector<128x16xf32>
    %103 = arith.truncf %102 : vector<128x16xf32> to vector<128x16xbf16>
    %c48_96 = arith.constant 48 : index
    %c0_97 = arith.constant 0 : index
    %104 = vector.load %arg4[%c48_96, %c0_97] : memref<64x8xbf16, #tpu.memory_space<vmem>>, vector<16x8xbf16>
    %cst_98 = arith.constant dense<0.000000e+00> : vector<128x8xf32>
    %105 = tpu.matmul %103, %104, %cst_98 {dimension_numbers = #tpu.dot_dimension_numbers<[1], [0], [0], [1], [0, 0, 1, 1], [], []>} : vector<128x16xbf16>, vector<16x8xbf16>, vector<128x8xf32> -> vector<128x8xf32>
    %106 = arith.addf %99, %105 : vector<128x8xf32>
    %c0_99 = arith.constant 0 : index
    %c0_100 = arith.constant 0 : index
    %107 = vector.load %arg5[%c0_99, %c0_100] : memref<1x8xf32, #tpu.memory_space<vmem>>, vector<1x8xf32>
    %108 = vector.broadcast %107 : vector<1x8xf32> to vector<128x8xf32>
    %109 = arith.addf %106, %108 : vector<128x8xf32>
    %cst_101 = arith.constant 0.000000e+00 : f32
    %110 = vector.broadcast %cst_101 : f32 to vector<128x8xf32>
    %111 = arith.maximumf %109, %110 : vector<128x8xf32>
    %112 = vector.shape_cast %111 : vector<128x8xf32> to vector<16x8x8xf32>
    %c0_102 = arith.constant 0 : index
    %c0_103 = arith.constant 0 : index
    %c0_104 = arith.constant 0 : index
    %c0_105 = arith.constant 0 : index
    %113 = vector.load %arg14[%c0_102, %c0_103, %c0_104, %c0_105] : memref<2x17x9x8xf32, #tpu.memory_space<vmem>>, vector<1x16x8x8xf32>
    %114 = vector.shape_cast %113 : vector<1x16x8x8xf32> to vector<16x8x8xf32>
    %115 = vector.shape_cast %112 : vector<16x8x8xf32> to vector<1x16x8x8xf32>
    tpu.vector_store %arg14[%c0_102, %c0_103, %c0_104, %c0_105], %115 {strides = array<i32>} : memref<2x17x9x8xf32, #tpu.memory_space<vmem>>, vector<1x16x8x8xf32>,
    %c1_106 = arith.constant 1 : index
    %c0_107 = arith.constant 0 : index
    %c0_108 = arith.constant 0 : index
    %c0_109 = arith.constant 0 : index
    %116 = vector.load %arg13[%c1_106, %c0_107, %c0_108, %c0_109] : memref<2x17x9x16xf32, #tpu.memory_space<vmem>>, vector<1x16x8x16xf32>
    %117 = vector.shape_cast %116 : vector<1x16x8x16xf32> to vector<16x8x16xf32>
    %118 = vector.shape_cast %117 : vector<16x8x16xf32> to vector<128x16xf32>
    %119 = arith.truncf %118 : vector<128x16xf32> to vector<128x16xbf16>
    %c0_110 = arith.constant 0 : index
    %c0_111 = arith.constant 0 : index
    %120 = vector.load %arg4[%c0_110, %c0_111] : memref<64x8xbf16, #tpu.memory_space<vmem>>, vector<16x8xbf16>
    %cst_112 = arith.constant dense<0.000000e+00> : vector<128x8xf32>
    %121 = tpu.matmul %119, %120, %cst_112 {dimension_numbers = #tpu.dot_dimension_numbers<[1], [0], [0], [1], [0, 0, 1, 1], [], []>} : vector<128x16xbf16>, vector<16x8xbf16>, vector<128x8xf32> -> vector<128x8xf32>
    %c0_113 = arith.constant 0 : index
    %c0_114 = arith.constant 0 : index
    %c1_115 = arith.constant 1 : index
    %c0_116 = arith.constant 0 : index
    %122 = vector.load %arg13[%c0_113, %c0_114, %c1_115, %c0_116] : memref<2x17x9x16xf32, #tpu.memory_space<vmem>>, vector<1x16x8x16xf32>
    %123 = vector.shape_cast %122 : vector<1x16x8x16xf32> to vector<16x8x16xf32>
    %124 = vector.shape_cast %123 : vector<16x8x16xf32> to vector<128x16xf32>
    %125 = arith.truncf %124 : vector<128x16xf32> to vector<128x16xbf16>
    %c16_117 = arith.constant 16 : index
    %c0_118 = arith.constant 0 : index
    %126 = vector.load %arg4[%c16_117, %c0_118] : memref<64x8xbf16, #tpu.memory_space<vmem>>, vector<16x8xbf16>
    %cst_119 = arith.constant dense<0.000000e+00> : vector<128x8xf32>
    %127 = tpu.matmul %125, %126, %cst_119 {dimension_numbers = #tpu.dot_dimension_numbers<[1], [0], [0], [1], [0, 0, 1, 1], [], []>} : vector<128x16xbf16>, vector<16x8xbf16>, vector<128x8xf32> -> vector<128x8xf32>
    %128 = arith.addf %121, %127 : vector<128x8xf32>
    %c1_120 = arith.constant 1 : index
    %c1_121 = arith.constant 1 : index
    %c0_122 = arith.constant 0 : index
    %c0_123 = arith.constant 0 : index
    %129 = vector.load %arg13[%c1_120, %c1_121, %c0_122, %c0_123] : memref<2x17x9x16xf32, #tpu.memory_space<vmem>>, vector<1x16x8x16xf32>
    %130 = vector.shape_cast %129 : vector<1x16x8x16xf32> to vector<16x8x16xf32>
    %131 = vector.shape_cast %130 : vector<16x8x16xf32> to vector<128x16xf32>
    %132 = arith.truncf %131 : vector<128x16xf32> to vector<128x16xbf16>
    %c32_124 = arith.constant 32 : index
    %c0_125 = arith.constant 0 : index
    %133 = vector.load %arg4[%c32_124, %c0_125] : memref<64x8xbf16, #tpu.memory_space<vmem>>, vector<16x8xbf16>
    %cst_126 = arith.constant dense<0.000000e+00> : vector<128x8xf32>
    %134 = tpu.matmul %132, %133, %cst_126 {dimension_numbers = #tpu.dot_dimension_numbers<[1], [0], [0], [1], [0, 0, 1, 1], [], []>} : vector<128x16xbf16>, vector<16x8xbf16>, vector<128x8xf32> -> vector<128x8xf32>
    %135 = arith.addf %128, %134 : vector<128x8xf32>
    %c0_127 = arith.constant 0 : index
    %c1_128 = arith.constant 1 : index
    %c1_129 = arith.constant 1 : index
    %c0_130 = arith.constant 0 : index
    %136 = vector.load %arg13[%c0_127, %c1_128, %c1_129, %c0_130] : memref<2x17x9x16xf32, #tpu.memory_space<vmem>>, vector<1x16x8x16xf32>
    %137 = vector.shape_cast %136 : vector<1x16x8x16xf32> to vector<16x8x16xf32>
    %138 = vector.shape_cast %137 : vector<16x8x16xf32> to vector<128x16xf32>
    %139 = arith.truncf %138 : vector<128x16xf32> to vector<128x16xbf16>
    %c48_131 = arith.constant 48 : index
    %c0_132 = arith.constant 0 : index
    %140 = vector.load %arg4[%c48_131, %c0_132] : memref<64x8xbf16, #tpu.memory_space<vmem>>, vector<16x8xbf16>
    %cst_133 = arith.constant dense<0.000000e+00> : vector<128x8xf32>
    %141 = tpu.matmul %139, %140, %cst_133 {dimension_numbers = #tpu.dot_dimension_numbers<[1], [0], [0], [1], [0, 0, 1, 1], [], []>} : vector<128x16xbf16>, vector<16x8xbf16>, vector<128x8xf32> -> vector<128x8xf32>
    %142 = arith.addf %135, %141 : vector<128x8xf32>
    %c0_134 = arith.constant 0 : index
    %c0_135 = arith.constant 0 : index
    %143 = vector.load %arg5[%c0_134, %c0_135] : memref<1x8xf32, #tpu.memory_space<vmem>>, vector<1x8xf32>
    %144 = vector.broadcast %143 : vector<1x8xf32> to vector<128x8xf32>
    %145 = arith.addf %142, %144 : vector<128x8xf32>
    %cst_136 = arith.constant 0.000000e+00 : f32
    %146 = vector.broadcast %cst_136 : f32 to vector<128x8xf32>
    %147 = arith.maximumf %145, %146 : vector<128x8xf32>
    %148 = vector.shape_cast %147 : vector<128x8xf32> to vector<16x8x8xf32>
    %c1_137 = arith.constant 1 : index
    %c0_138 = arith.constant 0 : index
    %c0_139 = arith.constant 0 : index
    %c0_140 = arith.constant 0 : index
    %149 = vector.load %arg14[%c1_137, %c0_138, %c0_139, %c0_140] : memref<2x17x9x8xf32, #tpu.memory_space<vmem>>, vector<1x16x8x8xf32>
    %150 = vector.shape_cast %149 : vector<1x16x8x8xf32> to vector<16x8x8xf32>
    %151 = vector.shape_cast %148 : vector<16x8x8xf32> to vector<1x16x8x8xf32>
    tpu.vector_store %arg14[%c1_137, %c0_138, %c0_139, %c0_140], %151 {strides = array<i32>} : memref<2x17x9x8xf32, #tpu.memory_space<vmem>>, vector<1x16x8x8xf32>,
    %cst_141 = arith.constant 0.000000e+00 : f32
    %152 = vector.broadcast %cst_141 : f32 to vector<2x9x8xf32>
    %c0_142 = arith.constant 0 : index
    %c16_143 = arith.constant 16 : index
    %c0_144 = arith.constant 0 : index
    %c0_145 = arith.constant 0 : index
    %153 = vector.load %arg14[%c0_142, %c16_143, %c0_144, %c0_145] : memref<2x17x9x8xf32, #tpu.memory_space<vmem>>, vector<2x1x9x8xf32>
    %154 = vector.shape_cast %153 : vector<2x1x9x8xf32> to vector<2x9x8xf32>
    %155 = vector.shape_cast %152 : vector<2x9x8xf32> to vector<2x1x9x8xf32>
    tpu.vector_store %arg14[%c0_142, %c16_143, %c0_144, %c0_145], %155 {strides = array<i32>} : memref<2x17x9x8xf32, #tpu.memory_space<vmem>>, vector<2x1x9x8xf32>,
    %cst_146 = arith.constant 0.000000e+00 : f32
    %156 = vector.broadcast %cst_146 : f32 to vector<2x17x8xf32>
    %c0_147 = arith.constant 0 : index
    %c0_148 = arith.constant 0 : index
    %c8_149 = arith.constant 8 : index
    %c0_150 = arith.constant 0 : index
    %157 = vector.load %arg14[%c0_147, %c0_148, %c8_149, %c0_150] : memref<2x17x9x8xf32, #tpu.memory_space<vmem>>, vector<2x17x1x8xf32>
    %158 = vector.shape_cast %157 : vector<2x17x1x8xf32> to vector<2x17x8xf32>
    %159 = vector.shape_cast %156 : vector<2x17x8xf32> to vector<2x17x1x8xf32>
    tpu.vector_store %arg14[%c0_147, %c0_148, %c8_149, %c0_150], %159 {strides = array<i32>} : memref<2x17x9x8xf32, #tpu.memory_space<vmem>>, vector<2x17x1x8xf32>,
    %c0_151 = arith.constant 0 : index
    %c0_152 = arith.constant 0 : index
    %c0_153 = arith.constant 0 : index
    %c0_154 = arith.constant 0 : index
    %160 = vector.load %arg14[%c0_151, %c0_152, %c0_153, %c0_154] : memref<2x17x9x8xf32, #tpu.memory_space<vmem>>, vector<1x16x8x8xf32>
    %161 = vector.shape_cast %160 : vector<1x16x8x8xf32> to vector<16x8x8xf32>
    %162 = vector.shape_cast %161 : vector<16x8x8xf32> to vector<128x8xf32>
    %163 = arith.truncf %162 : vector<128x8xf32> to vector<128x8xbf16>
    %c0_155 = arith.constant 0 : index
    %c0_156 = arith.constant 0 : index
    %164 = vector.load %arg6[%c0_155, %c0_156] : memref<32x16xbf16, #tpu.memory_space<vmem>>, vector<8x16xbf16>
    %cst_157 = arith.constant dense<0.000000e+00> : vector<128x16xf32>
    %165 = tpu.matmul %163, %164, %cst_157 {dimension_numbers = #tpu.dot_dimension_numbers<[1], [0], [0], [1], [0, 0, 1, 1], [], []>} : vector<128x8xbf16>, vector<8x16xbf16>, vector<128x16xf32> -> vector<128x16xf32>
    %c1_158 = arith.constant 1 : index
    %c0_159 = arith.constant 0 : index
    %c0_160 = arith.constant 0 : index
    %c0_161 = arith.constant 0 : index
    %166 = vector.load %arg14[%c1_158, %c0_159, %c0_160, %c0_161] : memref<2x17x9x8xf32, #tpu.memory_space<vmem>>, vector<1x16x8x8xf32>
    %167 = vector.shape_cast %166 : vector<1x16x8x8xf32> to vector<16x8x8xf32>
    %168 = vector.shape_cast %167 : vector<16x8x8xf32> to vector<128x8xf32>
    %169 = arith.truncf %168 : vector<128x8xf32> to vector<128x8xbf16>
    %c8_162 = arith.constant 8 : index
    %c0_163 = arith.constant 0 : index
    %170 = vector.load %arg6[%c8_162, %c0_163] : memref<32x16xbf16, #tpu.memory_space<vmem>>, vector<8x16xbf16>
    %cst_164 = arith.constant dense<0.000000e+00> : vector<128x16xf32>
    %171 = tpu.matmul %169, %170, %cst_164 {dimension_numbers = #tpu.dot_dimension_numbers<[1], [0], [0], [1], [0, 0, 1, 1], [], []>} : vector<128x8xbf16>, vector<8x16xbf16>, vector<128x16xf32> -> vector<128x16xf32>
    %172 = arith.addf %165, %171 : vector<128x16xf32>
    %c0_165 = arith.constant 0 : index
    %c1_166 = arith.constant 1 : index
    %c0_167 = arith.constant 0 : index
    %c0_168 = arith.constant 0 : index
    %173 = vector.load %arg14[%c0_165, %c1_166, %c0_167, %c0_168] : memref<2x17x9x8xf32, #tpu.memory_space<vmem>>, vector<1x16x8x8xf32>
    %174 = vector.shape_cast %173 : vector<1x16x8x8xf32> to vector<16x8x8xf32>
    %175 = vector.shape_cast %174 : vector<16x8x8xf32> to vector<128x8xf32>
    %176 = arith.truncf %175 : vector<128x8xf32> to vector<128x8xbf16>
    %c16_169 = arith.constant 16 : index
    %c0_170 = arith.constant 0 : index
    %177 = vector.load %arg6[%c16_169, %c0_170] : memref<32x16xbf16, #tpu.memory_space<vmem>>, vector<8x16xbf16>
    %cst_171 = arith.constant dense<0.000000e+00> : vector<128x16xf32>
    %178 = tpu.matmul %176, %177, %cst_171 {dimension_numbers = #tpu.dot_dimension_numbers<[1], [0], [0], [1], [0, 0, 1, 1], [], []>} : vector<128x8xbf16>, vector<8x16xbf16>, vector<128x16xf32> -> vector<128x16xf32>
    %179 = arith.addf %172, %178 : vector<128x16xf32>
    %c1_172 = arith.constant 1 : index
    %c1_173 = arith.constant 1 : index
    %c0_174 = arith.constant 0 : index
    %c0_175 = arith.constant 0 : index
    %180 = vector.load %arg14[%c1_172, %c1_173, %c0_174, %c0_175] : memref<2x17x9x8xf32, #tpu.memory_space<vmem>>, vector<1x16x8x8xf32>
    %181 = vector.shape_cast %180 : vector<1x16x8x8xf32> to vector<16x8x8xf32>
    %182 = vector.shape_cast %181 : vector<16x8x8xf32> to vector<128x8xf32>
    %183 = arith.truncf %182 : vector<128x8xf32> to vector<128x8xbf16>
    %c24 = arith.constant 24 : index
    %c0_176 = arith.constant 0 : index
    %184 = vector.load %arg6[%c24, %c0_176] : memref<32x16xbf16, #tpu.memory_space<vmem>>, vector<8x16xbf16>
    %cst_177 = arith.constant dense<0.000000e+00> : vector<128x16xf32>
    %185 = tpu.matmul %183, %184, %cst_177 {dimension_numbers = #tpu.dot_dimension_numbers<[1], [0], [0], [1], [0, 0, 1, 1], [], []>} : vector<128x8xbf16>, vector<8x16xbf16>, vector<128x16xf32> -> vector<128x16xf32>
    %186 = arith.addf %179, %185 : vector<128x16xf32>
    %c0_178 = arith.constant 0 : index
    %c0_179 = arith.constant 0 : index
    %187 = vector.load %arg7[%c0_178, %c0_179] : memref<1x16xf32, #tpu.memory_space<vmem>>, vector<1x16xf32>
    %188 = vector.broadcast %187 : vector<1x16xf32> to vector<128x16xf32>
    %189 = arith.addf %186, %188 : vector<128x16xf32>
    %cst_180 = arith.constant 0.000000e+00 : f32
    %190 = vector.broadcast %cst_180 : f32 to vector<128x16xf32>
    %191 = arith.maximumf %189, %190 : vector<128x16xf32>
    %c0_181 = arith.constant 0 : index
    %c0_182 = arith.constant 0 : index
    %c0_183 = arith.constant 0 : index
    %c0_184 = arith.constant 0 : index
    %192 = vector.load %arg13[%c0_181, %c0_182, %c0_183, %c0_184] : memref<2x17x9x16xf32, #tpu.memory_space<vmem>>, vector<1x16x8x16xf32>
    %193 = vector.shape_cast %192 : vector<1x16x8x16xf32> to vector<16x8x16xf32>
    %c1_185 = arith.constant 1 : index
    %c0_186 = arith.constant 0 : index
    %c0_187 = arith.constant 0 : index
    %c0_188 = arith.constant 0 : index
    %194 = vector.load %arg13[%c1_185, %c0_186, %c0_187, %c0_188] : memref<2x17x9x16xf32, #tpu.memory_space<vmem>>, vector<1x16x8x16xf32>
    %195 = vector.shape_cast %194 : vector<1x16x8x16xf32> to vector<16x8x16xf32>
    %196 = arith.maximumf %193, %195 : vector<16x8x16xf32>
    %c0_189 = arith.constant 0 : index
    %c1_190 = arith.constant 1 : index
    %c0_191 = arith.constant 0 : index
    %c0_192 = arith.constant 0 : index
    %197 = vector.load %arg13[%c0_189, %c1_190, %c0_191, %c0_192] : memref<2x17x9x16xf32, #tpu.memory_space<vmem>>, vector<1x16x8x16xf32>
    %198 = vector.shape_cast %197 : vector<1x16x8x16xf32> to vector<16x8x16xf32>
    %199 = arith.maximumf %196, %198 : vector<16x8x16xf32>
    %c1_193 = arith.constant 1 : index
    %c1_194 = arith.constant 1 : index
    %c0_195 = arith.constant 0 : index
    %c0_196 = arith.constant 0 : index
    %200 = vector.load %arg13[%c1_193, %c1_194, %c0_195, %c0_196] : memref<2x17x9x16xf32, #tpu.memory_space<vmem>>, vector<1x16x8x16xf32>
    %201 = vector.shape_cast %200 : vector<1x16x8x16xf32> to vector<16x8x16xf32>
    %202 = arith.maximumf %199, %201 : vector<16x8x16xf32>
    %203 = vector.shape_cast %191 : vector<128x16xf32> to vector<16x8x16xf32>
    %204 = tpu.concatenate %202, %203 in 2 : vector<16x8x16xf32>, vector<16x8x16xf32> -> vector<16x8x32xf32>
    %205 = vector.shape_cast %204 : vector<16x8x32xf32> to vector<8x2x8x32xf32>
    %206 = vector.extract_strided_slice %205 {offsets = [0, 0, 0, 0], sizes = [8, 1, 8, 32], strides = [1, 1, 1, 1]} : vector<8x2x8x32xf32> to vector<8x1x8x32xf32>
    %207 = vector.shape_cast %206 : vector<8x1x8x32xf32> to vector<8x8x32xf32>
    %c0_197 = arith.constant 0 : index
    %c0_198 = arith.constant 0 : index
    %c0_199 = arith.constant 0 : index
    %c0_200 = arith.constant 0 : index
    %208 = vector.load %arg15[%c0_197, %c0_198, %c0_199, %c0_200] : memref<4x9x9x32xf32, #tpu.memory_space<vmem>>, vector<1x8x8x32xf32>
    %209 = vector.shape_cast %208 : vector<1x8x8x32xf32> to vector<8x8x32xf32>
    %210 = vector.shape_cast %207 : vector<8x8x32xf32> to vector<1x8x8x32xf32>
    tpu.vector_store %arg15[%c0_197, %c0_198, %c0_199, %c0_200], %210 {strides = array<i32>} : memref<4x9x9x32xf32, #tpu.memory_space<vmem>>, vector<1x8x8x32xf32>,
    %211 = vector.extract_strided_slice %205 {offsets = [0, 1, 0, 0], sizes = [8, 1, 8, 32], strides = [1, 1, 1, 1]} : vector<8x2x8x32xf32> to vector<8x1x8x32xf32>
    %212 = vector.shape_cast %211 : vector<8x1x8x32xf32> to vector<8x8x32xf32>
    %c2 = arith.constant 2 : index
    %c1_201 = arith.constant 1 : index
    %c0_202 = arith.constant 0 : index
    %c0_203 = arith.constant 0 : index
    %213 = vector.load %arg15[%c2, %c1_201, %c0_202, %c0_203] : memref<4x9x9x32xf32, #tpu.memory_space<vmem>>, vector<1x8x8x32xf32>
    %214 = vector.shape_cast %213 : vector<1x8x8x32xf32> to vector<8x8x32xf32>
    %215 = vector.shape_cast %212 : vector<8x8x32xf32> to vector<1x8x8x32xf32>
    tpu.vector_store %arg15[%c2, %c1_201, %c0_202, %c0_203], %215 {strides = array<i32>} : memref<4x9x9x32xf32, #tpu.memory_space<vmem>>, vector<1x8x8x32xf32>,
    %c1_204 = arith.constant 1 : index
    %c0_205 = arith.constant 0 : index
    %c0_206 = arith.constant 0 : index
    %c0_207 = arith.constant 0 : index
    %216 = vector.load %arg14[%c1_204, %c0_205, %c0_206, %c0_207] : memref<2x17x9x8xf32, #tpu.memory_space<vmem>>, vector<1x16x8x8xf32>
    %217 = vector.shape_cast %216 : vector<1x16x8x8xf32> to vector<16x8x8xf32>
    %218 = vector.shape_cast %217 : vector<16x8x8xf32> to vector<128x8xf32>
    %219 = arith.truncf %218 : vector<128x8xf32> to vector<128x8xbf16>
    %c0_208 = arith.constant 0 : index
    %c0_209 = arith.constant 0 : index
    %220 = vector.load %arg6[%c0_208, %c0_209] : memref<32x16xbf16, #tpu.memory_space<vmem>>, vector<8x16xbf16>
    %cst_210 = arith.constant dense<0.000000e+00> : vector<128x16xf32>
    %221 = tpu.matmul %219, %220, %cst_210 {dimension_numbers = #tpu.dot_dimension_numbers<[1], [0], [0], [1], [0, 0, 1, 1], [], []>} : vector<128x8xbf16>, vector<8x16xbf16>, vector<128x16xf32> -> vector<128x16xf32>
    %c0_211 = arith.constant 0 : index
    %c0_212 = arith.constant 0 : index
    %c1_213 = arith.constant 1 : index
    %c0_214 = arith.constant 0 : index
    %222 = vector.load %arg14[%c0_211, %c0_212, %c1_213, %c0_214] : memref<2x17x9x8xf32, #tpu.memory_space<vmem>>, vector<1x16x8x8xf32>
    %223 = vector.shape_cast %222 : vector<1x16x8x8xf32> to vector<16x8x8xf32>
    %224 = vector.shape_cast %223 : vector<16x8x8xf32> to vector<128x8xf32>
    %225 = arith.truncf %224 : vector<128x8xf32> to vector<128x8xbf16>
    %c8_215 = arith.constant 8 : index
    %c0_216 = arith.constant 0 : index
    %226 = vector.load %arg6[%c8_215, %c0_216] : memref<32x16xbf16, #tpu.memory_space<vmem>>, vector<8x16xbf16>
    %cst_217 = arith.constant dense<0.000000e+00> : vector<128x16xf32>
    %227 = tpu.matmul %225, %226, %cst_217 {dimension_numbers = #tpu.dot_dimension_numbers<[1], [0], [0], [1], [0, 0, 1, 1], [], []>} : vector<128x8xbf16>, vector<8x16xbf16>, vector<128x16xf32> -> vector<128x16xf32>
    %228 = arith.addf %221, %227 : vector<128x16xf32>
    %c1_218 = arith.constant 1 : index
    %c1_219 = arith.constant 1 : index
    %c0_220 = arith.constant 0 : index
    %c0_221 = arith.constant 0 : index
    %229 = vector.load %arg14[%c1_218, %c1_219, %c0_220, %c0_221] : memref<2x17x9x8xf32, #tpu.memory_space<vmem>>, vector<1x16x8x8xf32>
    %230 = vector.shape_cast %229 : vector<1x16x8x8xf32> to vector<16x8x8xf32>
    %231 = vector.shape_cast %230 : vector<16x8x8xf32> to vector<128x8xf32>
    %232 = arith.truncf %231 : vector<128x8xf32> to vector<128x8xbf16>
    %c16_222 = arith.constant 16 : index
    %c0_223 = arith.constant 0 : index
    %233 = vector.load %arg6[%c16_222, %c0_223] : memref<32x16xbf16, #tpu.memory_space<vmem>>, vector<8x16xbf16>
    %cst_224 = arith.constant dense<0.000000e+00> : vector<128x16xf32>
    %234 = tpu.matmul %232, %233, %cst_224 {dimension_numbers = #tpu.dot_dimension_numbers<[1], [0], [0], [1], [0, 0, 1, 1], [], []>} : vector<128x8xbf16>, vector<8x16xbf16>, vector<128x16xf32> -> vector<128x16xf32>
    %235 = arith.addf %228, %234 : vector<128x16xf32>
    %c0_225 = arith.constant 0 : index
    %c1_226 = arith.constant 1 : index
    %c1_227 = arith.constant 1 : index
    %c0_228 = arith.constant 0 : index
    %236 = vector.load %arg14[%c0_225, %c1_226, %c1_227, %c0_228] : memref<2x17x9x8xf32, #tpu.memory_space<vmem>>, vector<1x16x8x8xf32>
    %237 = vector.shape_cast %236 : vector<1x16x8x8xf32> to vector<16x8x8xf32>
    %238 = vector.shape_cast %237 : vector<16x8x8xf32> to vector<128x8xf32>
    %239 = arith.truncf %238 : vector<128x8xf32> to vector<128x8xbf16>
    %c24_229 = arith.constant 24 : index
    %c0_230 = arith.constant 0 : index
    %240 = vector.load %arg6[%c24_229, %c0_230] : memref<32x16xbf16, #tpu.memory_space<vmem>>, vector<8x16xbf16>
    %cst_231 = arith.constant dense<0.000000e+00> : vector<128x16xf32>
    %241 = tpu.matmul %239, %240, %cst_231 {dimension_numbers = #tpu.dot_dimension_numbers<[1], [0], [0], [1], [0, 0, 1, 1], [], []>} : vector<128x8xbf16>, vector<8x16xbf16>, vector<128x16xf32> -> vector<128x16xf32>
    %242 = arith.addf %235, %241 : vector<128x16xf32>
    %c0_232 = arith.constant 0 : index
    %c0_233 = arith.constant 0 : index
    %243 = vector.load %arg7[%c0_232, %c0_233] : memref<1x16xf32, #tpu.memory_space<vmem>>, vector<1x16xf32>
    %244 = vector.broadcast %243 : vector<1x16xf32> to vector<128x16xf32>
    %245 = arith.addf %242, %244 : vector<128x16xf32>
    %cst_234 = arith.constant 0.000000e+00 : f32
    %246 = vector.broadcast %cst_234 : f32 to vector<128x16xf32>
    %247 = arith.maximumf %245, %246 : vector<128x16xf32>
    %c1_235 = arith.constant 1 : index
    %c0_236 = arith.constant 0 : index
    %c0_237 = arith.constant 0 : index
    %c0_238 = arith.constant 0 : index
    %248 = vector.load %arg13[%c1_235, %c0_236, %c0_237, %c0_238] : memref<2x17x9x16xf32, #tpu.memory_space<vmem>>, vector<1x16x8x16xf32>
    %249 = vector.shape_cast %248 : vector<1x16x8x16xf32> to vector<16x8x16xf32>
    %c0_239 = arith.constant 0 : index
    %c0_240 = arith.constant 0 : index
    %c1_241 = arith.constant 1 : index
    %c0_242 = arith.constant 0 : index
    %250 = vector.load %arg13[%c0_239, %c0_240, %c1_241, %c0_242] : memref<2x17x9x16xf32, #tpu.memory_space<vmem>>, vector<1x16x8x16xf32>
    %251 = vector.shape_cast %250 : vector<1x16x8x16xf32> to vector<16x8x16xf32>
    %252 = arith.maximumf %249, %251 : vector<16x8x16xf32>
    %c1_243 = arith.constant 1 : index
    %c1_244 = arith.constant 1 : index
    %c0_245 = arith.constant 0 : index
    %c0_246 = arith.constant 0 : index
    %253 = vector.load %arg13[%c1_243, %c1_244, %c0_245, %c0_246] : memref<2x17x9x16xf32, #tpu.memory_space<vmem>>, vector<1x16x8x16xf32>
    %254 = vector.shape_cast %253 : vector<1x16x8x16xf32> to vector<16x8x16xf32>
    %255 = arith.maximumf %252, %254 : vector<16x8x16xf32>
    %c0_247 = arith.constant 0 : index
    %c1_248 = arith.constant 1 : index
    %c1_249 = arith.constant 1 : index
    %c0_250 = arith.constant 0 : index
    %256 = vector.load %arg13[%c0_247, %c1_248, %c1_249, %c0_250] : memref<2x17x9x16xf32, #tpu.memory_space<vmem>>, vector<1x16x8x16xf32>
    %257 = vector.shape_cast %256 : vector<1x16x8x16xf32> to vector<16x8x16xf32>
    %258 = arith.maximumf %255, %257 : vector<16x8x16xf32>
    %259 = vector.shape_cast %247 : vector<128x16xf32> to vector<16x8x16xf32>
    %260 = tpu.concatenate %258, %259 in 2 : vector<16x8x16xf32>, vector<16x8x16xf32> -> vector<16x8x32xf32>
    %261 = vector.shape_cast %260 : vector<16x8x32xf32> to vector<8x2x8x32xf32>
    %262 = vector.extract_strided_slice %261 {offsets = [0, 0, 0, 0], sizes = [8, 1, 8, 32], strides = [1, 1, 1, 1]} : vector<8x2x8x32xf32> to vector<8x1x8x32xf32>
    %263 = vector.shape_cast %262 : vector<8x1x8x32xf32> to vector<8x8x32xf32>
    %c1_251 = arith.constant 1 : index
    %c0_252 = arith.constant 0 : index
    %c1_253 = arith.constant 1 : index
    %c0_254 = arith.constant 0 : index
    %264 = vector.load %arg15[%c1_251, %c0_252, %c1_253, %c0_254] : memref<4x9x9x32xf32, #tpu.memory_space<vmem>>, vector<1x8x8x32xf32>
    %265 = vector.shape_cast %264 : vector<1x8x8x32xf32> to vector<8x8x32xf32>
    %266 = vector.shape_cast %263 : vector<8x8x32xf32> to vector<1x8x8x32xf32>
    tpu.vector_store %arg15[%c1_251, %c0_252, %c1_253, %c0_254], %266 {strides = array<i32>} : memref<4x9x9x32xf32, #tpu.memory_space<vmem>>, vector<1x8x8x32xf32>,
    %267 = vector.extract_strided_slice %261 {offsets = [0, 1, 0, 0], sizes = [8, 1, 8, 32], strides = [1, 1, 1, 1]} : vector<8x2x8x32xf32> to vector<8x1x8x32xf32>
    %268 = vector.shape_cast %267 : vector<8x1x8x32xf32> to vector<8x8x32xf32>
    %c3 = arith.constant 3 : index
    %c1_255 = arith.constant 1 : index
    %c1_256 = arith.constant 1 : index
    %c0_257 = arith.constant 0 : index
    %269 = vector.load %arg15[%c3, %c1_255, %c1_256, %c0_257] : memref<4x9x9x32xf32, #tpu.memory_space<vmem>>, vector<1x8x8x32xf32>
    %270 = vector.shape_cast %269 : vector<1x8x8x32xf32> to vector<8x8x32xf32>
    %271 = vector.shape_cast %268 : vector<8x8x32xf32> to vector<1x8x8x32xf32>
    tpu.vector_store %arg15[%c3, %c1_255, %c1_256, %c0_257], %271 {strides = array<i32>} : memref<4x9x9x32xf32, #tpu.memory_space<vmem>>, vector<1x8x8x32xf32>,
    %cst_258 = arith.constant 0.000000e+00 : f32
    %272 = vector.broadcast %cst_258 : f32 to vector<2x9x32xf32>
    %c2_259 = arith.constant 2 : index
    %c0_260 = arith.constant 0 : index
    %c0_261 = arith.constant 0 : index
    %c0_262 = arith.constant 0 : index
    %273 = vector.load %arg15[%c2_259, %c0_260, %c0_261, %c0_262] : memref<4x9x9x32xf32, #tpu.memory_space<vmem>>, vector<2x1x9x32xf32>
    %274 = vector.shape_cast %273 : vector<2x1x9x32xf32> to vector<2x9x32xf32>
    %275 = vector.shape_cast %272 : vector<2x9x32xf32> to vector<2x1x9x32xf32>
    tpu.vector_store %arg15[%c2_259, %c0_260, %c0_261, %c0_262], %275 {strides = array<i32>} : memref<4x9x9x32xf32, #tpu.memory_space<vmem>>, vector<2x1x9x32xf32>,
    %cst_263 = arith.constant 0.000000e+00 : f32
    %276 = vector.broadcast %cst_263 : f32 to vector<9x32xf32>
    %c1_264 = arith.constant 1 : index
    %c0_265 = arith.constant 0 : index
    %c0_266 = arith.constant 0 : index
    %c0_267 = arith.constant 0 : index
    %277 = vector.load %arg15[%c1_264, %c0_265, %c0_266, %c0_267] : memref<4x9x9x32xf32, #tpu.memory_space<vmem>>, vector<1x9x1x32xf32>
    %278 = vector.shape_cast %277 : vector<1x9x1x32xf32> to vector<9x32xf32>
    %279 = vector.shape_cast %276 : vector<9x32xf32> to vector<1x9x1x32xf32>
    tpu.vector_store %arg15[%c1_264, %c0_265, %c0_266, %c0_267], %279 {strides = array<i32>} : memref<4x9x9x32xf32, #tpu.memory_space<vmem>>, vector<1x9x1x32xf32>,
    %cst_268 = arith.constant 0.000000e+00 : f32
    %280 = vector.broadcast %cst_268 : f32 to vector<9x32xf32>
    %c3_269 = arith.constant 3 : index
    %c0_270 = arith.constant 0 : index
    %c0_271 = arith.constant 0 : index
    %c0_272 = arith.constant 0 : index
    %281 = vector.load %arg15[%c3_269, %c0_270, %c0_271, %c0_272] : memref<4x9x9x32xf32, #tpu.memory_space<vmem>>, vector<1x9x1x32xf32>
    %282 = vector.shape_cast %281 : vector<1x9x1x32xf32> to vector<9x32xf32>
    %283 = vector.shape_cast %280 : vector<9x32xf32> to vector<1x9x1x32xf32>
    tpu.vector_store %arg15[%c3_269, %c0_270, %c0_271, %c0_272], %283 {strides = array<i32>} : memref<4x9x9x32xf32, #tpu.memory_space<vmem>>, vector<1x9x1x32xf32>,
    %c3_273 = arith.constant 3 : index
    %c0_274 = arith.constant 0 : index
    %c0_275 = arith.constant 0 : index
    %c0_276 = arith.constant 0 : index
    %284 = vector.load %arg15[%c3_273, %c0_274, %c0_275, %c0_276] : memref<4x9x9x32xf32, #tpu.memory_space<vmem>>, vector<1x8x8x32xf32>
    %285 = vector.shape_cast %284 : vector<1x8x8x32xf32> to vector<8x8x32xf32>
    %286 = vector.shape_cast %285 : vector<8x8x32xf32> to vector<64x32xf32>
    %287 = arith.truncf %286 : vector<64x32xf32> to vector<64x32xbf16>
    %c0_277 = arith.constant 0 : index
    %c0_278 = arith.constant 0 : index
    %288 = vector.load %arg8[%c0_277, %c0_278] : memref<288x16xbf16, #tpu.memory_space<vmem>>, vector<32x16xbf16>
    %cst_279 = arith.constant dense<0.000000e+00> : vector<64x16xf32>
    %289 = tpu.matmul %287, %288, %cst_279 {dimension_numbers = #tpu.dot_dimension_numbers<[1], [0], [0], [1], [0, 0, 1, 1], [], []>} : vector<64x32xbf16>, vector<32x16xbf16>, vector<64x16xf32> -> vector<64x16xf32>
    %c2_280 = arith.constant 2 : index
    %c0_281 = arith.constant 0 : index
    %c0_282 = arith.constant 0 : index
    %c0_283 = arith.constant 0 : index
    %290 = vector.load %arg15[%c2_280, %c0_281, %c0_282, %c0_283] : memref<4x9x9x32xf32, #tpu.memory_space<vmem>>, vector<1x8x8x32xf32>
    %291 = vector.shape_cast %290 : vector<1x8x8x32xf32> to vector<8x8x32xf32>
    %292 = vector.shape_cast %291 : vector<8x8x32xf32> to vector<64x32xf32>
    %293 = arith.truncf %292 : vector<64x32xf32> to vector<64x32xbf16>
    %c32_284 = arith.constant 32 : index
    %c0_285 = arith.constant 0 : index
    %294 = vector.load %arg8[%c32_284, %c0_285] : memref<288x16xbf16, #tpu.memory_space<vmem>>, vector<32x16xbf16>
    %cst_286 = arith.constant dense<0.000000e+00> : vector<64x16xf32>
    %295 = tpu.matmul %293, %294, %cst_286 {dimension_numbers = #tpu.dot_dimension_numbers<[1], [0], [0], [1], [0, 0, 1, 1], [], []>} : vector<64x32xbf16>, vector<32x16xbf16>, vector<64x16xf32> -> vector<64x16xf32>
    %296 = arith.addf %289, %295 : vector<64x16xf32>
    %c3_287 = arith.constant 3 : index
    %c0_288 = arith.constant 0 : index
    %c1_289 = arith.constant 1 : index
    %c0_290 = arith.constant 0 : index
    %297 = vector.load %arg15[%c3_287, %c0_288, %c1_289, %c0_290] : memref<4x9x9x32xf32, #tpu.memory_space<vmem>>, vector<1x8x8x32xf32>
    %298 = vector.shape_cast %297 : vector<1x8x8x32xf32> to vector<8x8x32xf32>
    %299 = vector.shape_cast %298 : vector<8x8x32xf32> to vector<64x32xf32>
    %300 = arith.truncf %299 : vector<64x32xf32> to vector<64x32xbf16>
    %c64 = arith.constant 64 : index
    %c0_291 = arith.constant 0 : index
    %301 = vector.load %arg8[%c64, %c0_291] : memref<288x16xbf16, #tpu.memory_space<vmem>>, vector<32x16xbf16>
    %cst_292 = arith.constant dense<0.000000e+00> : vector<64x16xf32>
    %302 = tpu.matmul %300, %301, %cst_292 {dimension_numbers = #tpu.dot_dimension_numbers<[1], [0], [0], [1], [0, 0, 1, 1], [], []>} : vector<64x32xbf16>, vector<32x16xbf16>, vector<64x16xf32> -> vector<64x16xf32>
    %303 = arith.addf %296, %302 : vector<64x16xf32>
    %c1_293 = arith.constant 1 : index
    %c0_294 = arith.constant 0 : index
    %c0_295 = arith.constant 0 : index
    %c0_296 = arith.constant 0 : index
    %304 = vector.load %arg15[%c1_293, %c0_294, %c0_295, %c0_296] : memref<4x9x9x32xf32, #tpu.memory_space<vmem>>, vector<1x8x8x32xf32>
    %305 = vector.shape_cast %304 : vector<1x8x8x32xf32> to vector<8x8x32xf32>
    %306 = vector.shape_cast %305 : vector<8x8x32xf32> to vector<64x32xf32>
    %307 = arith.truncf %306 : vector<64x32xf32> to vector<64x32xbf16>
    %c96 = arith.constant 96 : index
    %c0_297 = arith.constant 0 : index
    %308 = vector.load %arg8[%c96, %c0_297] : memref<288x16xbf16, #tpu.memory_space<vmem>>, vector<32x16xbf16>
    %cst_298 = arith.constant dense<0.000000e+00> : vector<64x16xf32>
    %309 = tpu.matmul %307, %308, %cst_298 {dimension_numbers = #tpu.dot_dimension_numbers<[1], [0], [0], [1], [0, 0, 1, 1], [], []>} : vector<64x32xbf16>, vector<32x16xbf16>, vector<64x16xf32> -> vector<64x16xf32>
    %310 = arith.addf %303, %309 : vector<64x16xf32>
    %c0_299 = arith.constant 0 : index
    %c0_300 = arith.constant 0 : index
    %c0_301 = arith.constant 0 : index
    %c0_302 = arith.constant 0 : index
    %311 = vector.load %arg15[%c0_299, %c0_300, %c0_301, %c0_302] : memref<4x9x9x32xf32, #tpu.memory_space<vmem>>, vector<1x8x8x32xf32>
    %312 = vector.shape_cast %311 : vector<1x8x8x32xf32> to vector<8x8x32xf32>
    %313 = vector.shape_cast %312 : vector<8x8x32xf32> to vector<64x32xf32>
    %314 = arith.truncf %313 : vector<64x32xf32> to vector<64x32xbf16>
    %c128 = arith.constant 128 : index
    %c0_303 = arith.constant 0 : index
    %315 = vector.load %arg8[%c128, %c0_303] : memref<288x16xbf16, #tpu.memory_space<vmem>>, vector<32x16xbf16>
    %cst_304 = arith.constant dense<0.000000e+00> : vector<64x16xf32>
    %316 = tpu.matmul %314, %315, %cst_304 {dimension_numbers = #tpu.dot_dimension_numbers<[1], [0], [0], [1], [0, 0, 1, 1], [], []>} : vector<64x32xbf16>, vector<32x16xbf16>, vector<64x16xf32> -> vector<64x16xf32>
    %317 = arith.addf %310, %316 : vector<64x16xf32>
    %c1_305 = arith.constant 1 : index
    %c0_306 = arith.constant 0 : index
    %c1_307 = arith.constant 1 : index
    %c0_308 = arith.constant 0 : index
    %318 = vector.load %arg15[%c1_305, %c0_306, %c1_307, %c0_308] : memref<4x9x9x32xf32, #tpu.memory_space<vmem>>, vector<1x8x8x32xf32>
    %319 = vector.shape_cast %318 : vector<1x8x8x32xf32> to vector<8x8x32xf32>
    %320 = vector.shape_cast %319 : vector<8x8x32xf32> to vector<64x32xf32>
    %321 = arith.truncf %320 : vector<64x32xf32> to vector<64x32xbf16>
    %c160 = arith.constant 160 : index
    %c0_309 = arith.constant 0 : index
    %322 = vector.load %arg8[%c160, %c0_309] : memref<288x16xbf16, #tpu.memory_space<vmem>>, vector<32x16xbf16>
    %cst_310 = arith.constant dense<0.000000e+00> : vector<64x16xf32>
    %323 = tpu.matmul %321, %322, %cst_310 {dimension_numbers = #tpu.dot_dimension_numbers<[1], [0], [0], [1], [0, 0, 1, 1], [], []>} : vector<64x32xbf16>, vector<32x16xbf16>, vector<64x16xf32> -> vector<64x16xf32>
    %324 = arith.addf %317, %323 : vector<64x16xf32>
    %c3_311 = arith.constant 3 : index
    %c1_312 = arith.constant 1 : index
    %c0_313 = arith.constant 0 : index
    %c0_314 = arith.constant 0 : index
    %325 = vector.load %arg15[%c3_311, %c1_312, %c0_313, %c0_314] : memref<4x9x9x32xf32, #tpu.memory_space<vmem>>, vector<1x8x8x32xf32>
    %326 = vector.shape_cast %325 : vector<1x8x8x32xf32> to vector<8x8x32xf32>
    %327 = vector.shape_cast %326 : vector<8x8x32xf32> to vector<64x32xf32>
    %328 = arith.truncf %327 : vector<64x32xf32> to vector<64x32xbf16>
    %c192 = arith.constant 192 : index
    %c0_315 = arith.constant 0 : index
    %329 = vector.load %arg8[%c192, %c0_315] : memref<288x16xbf16, #tpu.memory_space<vmem>>, vector<32x16xbf16>
    %cst_316 = arith.constant dense<0.000000e+00> : vector<64x16xf32>
    %330 = tpu.matmul %328, %329, %cst_316 {dimension_numbers = #tpu.dot_dimension_numbers<[1], [0], [0], [1], [0, 0, 1, 1], [], []>} : vector<64x32xbf16>, vector<32x16xbf16>, vector<64x16xf32> -> vector<64x16xf32>
    %331 = arith.addf %324, %330 : vector<64x16xf32>
    %c2_317 = arith.constant 2 : index
    %c1_318 = arith.constant 1 : index
    %c0_319 = arith.constant 0 : index
    %c0_320 = arith.constant 0 : index
    %332 = vector.load %arg15[%c2_317, %c1_318, %c0_319, %c0_320] : memref<4x9x9x32xf32, #tpu.memory_space<vmem>>, vector<1x8x8x32xf32>
    %333 = vector.shape_cast %332 : vector<1x8x8x32xf32> to vector<8x8x32xf32>
    %334 = vector.shape_cast %333 : vector<8x8x32xf32> to vector<64x32xf32>
    %335 = arith.truncf %334 : vector<64x32xf32> to vector<64x32xbf16>
    %c224 = arith.constant 224 : index
    %c0_321 = arith.constant 0 : index
    %336 = vector.load %arg8[%c224, %c0_321] : memref<288x16xbf16, #tpu.memory_space<vmem>>, vector<32x16xbf16>
    %cst_322 = arith.constant dense<0.000000e+00> : vector<64x16xf32>
    %337 = tpu.matmul %335, %336, %cst_322 {dimension_numbers = #tpu.dot_dimension_numbers<[1], [0], [0], [1], [0, 0, 1, 1], [], []>} : vector<64x32xbf16>, vector<32x16xbf16>, vector<64x16xf32> -> vector<64x16xf32>
    %338 = arith.addf %331, %337 : vector<64x16xf32>
    %c3_323 = arith.constant 3 : index
    %c1_324 = arith.constant 1 : index
    %c1_325 = arith.constant 1 : index
    %c0_326 = arith.constant 0 : index
    %339 = vector.load %arg15[%c3_323, %c1_324, %c1_325, %c0_326] : memref<4x9x9x32xf32, #tpu.memory_space<vmem>>, vector<1x8x8x32xf32>
    %340 = vector.shape_cast %339 : vector<1x8x8x32xf32> to vector<8x8x32xf32>
    %341 = vector.shape_cast %340 : vector<8x8x32xf32> to vector<64x32xf32>
    %342 = arith.truncf %341 : vector<64x32xf32> to vector<64x32xbf16>
    %c256 = arith.constant 256 : index
    %c0_327 = arith.constant 0 : index
    %343 = vector.load %arg8[%c256, %c0_327] : memref<288x16xbf16, #tpu.memory_space<vmem>>, vector<32x16xbf16>
    %cst_328 = arith.constant dense<0.000000e+00> : vector<64x16xf32>
    %344 = tpu.matmul %342, %343, %cst_328 {dimension_numbers = #tpu.dot_dimension_numbers<[1], [0], [0], [1], [0, 0, 1, 1], [], []>} : vector<64x32xbf16>, vector<32x16xbf16>, vector<64x16xf32> -> vector<64x16xf32>
    %345 = arith.addf %338, %344 : vector<64x16xf32>
    %c0_329 = arith.constant 0 : index
    %c0_330 = arith.constant 0 : index
    %346 = vector.load %arg9[%c0_329, %c0_330] : memref<1x16xf32, #tpu.memory_space<vmem>>, vector<1x16xf32>
    %347 = vector.broadcast %346 : vector<1x16xf32> to vector<64x16xf32>
    %348 = arith.addf %345, %347 : vector<64x16xf32>
    %cst_331 = arith.constant 0.000000e+00 : f32
    %349 = vector.broadcast %cst_331 : f32 to vector<64x16xf32>
    %350 = arith.maximumf %348, %349 : vector<64x16xf32>
    %351 = arith.truncf %350 : vector<64x16xf32> to vector<64x16xbf16>
    %c0_332 = arith.constant 0 : index
    %c0_333 = arith.constant 0 : index
    %352 = vector.load %arg10[%c0_332, %c0_333] : memref<16x32xbf16, #tpu.memory_space<vmem>>, vector<16x32xbf16>
    %cst_334 = arith.constant dense<0.000000e+00> : vector<64x32xf32>
    %353 = tpu.matmul %351, %352, %cst_334 {dimension_numbers = #tpu.dot_dimension_numbers<[1], [0], [0], [1], [0, 0, 1, 1], [], []>} : vector<64x16xbf16>, vector<16x32xbf16>, vector<64x32xf32> -> vector<64x32xf32>
    %c0_335 = arith.constant 0 : index
    %c0_336 = arith.constant 0 : index
    %354 = vector.load %arg11[%c0_335, %c0_336] : memref<1x32xf32, #tpu.memory_space<vmem>>, vector<1x32xf32>
    %355 = vector.broadcast %354 : vector<1x32xf32> to vector<64x32xf32>
    %356 = arith.addf %353, %355 : vector<64x32xf32>
    %cst_337 = arith.constant 0.000000e+00 : f32
    %357 = vector.broadcast %cst_337 : f32 to vector<64x32xf32>
    %358 = arith.maximumf %356, %357 : vector<64x32xf32>
    %c0_338 = arith.constant 0 : index
    %c0_339 = arith.constant 0 : index
    %c0_340 = arith.constant 0 : index
    %359 = vector.load %arg12[%c0_338, %c0_339, %c0_340] : memref<1x64x32xf32, #tpu.memory_space<vmem>>, vector<1x64x32xf32>
    %360 = vector.shape_cast %359 : vector<1x64x32xf32> to vector<64x32xf32>
    %361 = vector.shape_cast %358 : vector<64x32xf32> to vector<1x64x32xf32>
    tpu.vector_store %arg12[%c0_338, %c0_339, %c0_340], %361 {strides = array<i32>} : memref<1x64x32xf32, #tpu.memory_space<vmem>>, vector<1x64x32xf32>,
    return
  }
  func.func @transform_0(%arg0: i32) -> (i32, i32, i32, i32) {
    %c0_i32 = arith.constant 0 : i32
    %c0_i32_0 = arith.constant 0 : i32
    %c0_i32_1 = arith.constant 0 : i32
    %c0_i32_2 = arith.constant 0 : i32
    return %arg0, %c0_i32, %c0_i32_0, %c0_i32_1 : i32, i32, i32, i32
  }
  func.func @transform_1(%arg0: i32) -> (i32, i32) {
    %c0_i32 = arith.constant 0 : i32
    %c0_i32_0 = arith.constant 0 : i32
    %c0_i32_1 = arith.constant 0 : i32
    return %c0_i32, %c0_i32_0 : i32, i32
  }
  func.func @transform_2(%arg0: i32) -> (i32, i32) {
    %c0_i32 = arith.constant 0 : i32
    %c0_i32_0 = arith.constant 0 : i32
    %c0_i32_1 = arith.constant 0 : i32
    return %c0_i32, %c0_i32_0 : i32, i32
  }
  func.func @transform_3(%arg0: i32) -> (i32, i32) {
    %c0_i32 = arith.constant 0 : i32
    %c0_i32_0 = arith.constant 0 : i32
    %c0_i32_1 = arith.constant 0 : i32
    return %c0_i32, %c0_i32_0 : i32, i32
  }
  func.func @transform_4(%arg0: i32) -> (i32, i32) {
    %c0_i32 = arith.constant 0 : i32
    %c0_i32_0 = arith.constant 0 : i32
    %c0_i32_1 = arith.constant 0 : i32
    return %c0_i32, %c0_i32_0 : i32, i32
  }
  func.func @transform_5(%arg0: i32) -> (i32, i32) {
    %c0_i32 = arith.constant 0 : i32
    %c0_i32_0 = arith.constant 0 : i32
    %c0_i32_1 = arith.constant 0 : i32
    return %c0_i32, %c0_i32_0 : i32, i32
  }
  func.func @transform_6(%arg0: i32) -> (i32, i32) {
    %c0_i32 = arith.constant 0 : i32
    %c0_i32_0 = arith.constant 0 : i32
    %c0_i32_1 = arith.constant 0 : i32
    return %c0_i32, %c0_i32_0 : i32, i32
  }
  func.func @transform_7(%arg0: i32) -> (i32, i32) {
    %c0_i32 = arith.constant 0 : i32
    %c0_i32_0 = arith.constant 0 : i32
    %c0_i32_1 = arith.constant 0 : i32
    return %c0_i32, %c0_i32_0 : i32, i32
  }
  func.func @transform_8(%arg0: i32) -> (i32, i32) {
    %c0_i32 = arith.constant 0 : i32
    %c0_i32_0 = arith.constant 0 : i32
    %c0_i32_1 = arith.constant 0 : i32
    return %c0_i32, %c0_i32_0 : i32, i32
  }
  func.func @transform_9(%arg0: i32) -> (i32, i32) {
    %c0_i32 = arith.constant 0 : i32
    %c0_i32_0 = arith.constant 0 : i32
    %c0_i32_1 = arith.constant 0 : i32
    return %c0_i32, %c0_i32_0 : i32, i32
  }
  func.func @transform_10(%arg0: i32) -> (i32, i32) {
    %c0_i32 = arith.constant 0 : i32
    %c0_i32_0 = arith.constant 0 : i32
    %c0_i32_1 = arith.constant 0 : i32
    return %c0_i32, %c0_i32_0 : i32, i32
  }
  func.func @transform_11(%arg0: i32) -> (i32, i32, i32) {
    %c0_i32 = arith.constant 0 : i32
    %c0_i32_0 = arith.constant 0 : i32
    %c0_i32_1 = arith.constant 0 : i32
    return %arg0, %c0_i32, %c0_i32_0 : i32, i32, i32
  }
}

</mosaic_0001>

<llo_original>
// kernel: hgstem_forward.1
$region0: #{hgstem_forward.1}
  #allocation0 [shape = 'u32[]', space=smem, size = 0x4, offset = 0x4, fixed_abs, tag = 'smem constant byte address 0x4 - core index']
  #allocation1 [shape = 'u32[72,128]{1,0:T(1,128)}', space=vmem, size = 0x9000, scoped, tag = 'internal scratch']
  #allocation2 [shape = 'f32[2,17,9,16]{3,2,1,0:T(8,128)}', space=vmem, size = 0x44000, scoped, tag = 'scratch operand']
  #allocation3 [shape = 'f32[2,17,9,8]{3,2,1,0:T(8,128)}', space=vmem, size = 0x44000, scoped, tag = 'scratch operand']
  #allocation4 [shape = 'f32[4,9,9,32]{3,2,1,0:T(8,128)}', space=vmem, size = 0x48000, scoped, tag = 'scratch operand']
  %s0 = inlined_call_operand.vmem [shape: f32[2,34,9,16], index: 0, kind: input, shape index: {}]
  %s1 = inlined_call_operand.vmem [shape: bf16[64,16], index: 1, kind: input, shape index: {}]
  %s2 = inlined_call_operand.vmem [shape: f32[1,16], index: 2, kind: input, shape index: {}]
  %s3 = inlined_call_operand.vmem [shape: bf16[64,8], index: 3, kind: input, shape index: {}]
  %s4 = inlined_call_operand.vmem [shape: f32[1,8], index: 4, kind: input, shape index: {}]
  %s5 = inlined_call_operand.vmem [shape: bf16[32,16], index: 5, kind: input, shape index: {}]
  %s6 = inlined_call_operand.vmem [shape: f32[1,16], index: 6, kind: input, shape index: {}]
  %s7 = inlined_call_operand.vmem [shape: bf16[288,16], index: 7, kind: input, shape index: {}]
  %s8 = inlined_call_operand.vmem [shape: f32[1,16], index: 8, kind: input, shape index: {}]
  %s9 = inlined_call_operand.vmem [shape: bf16[16,32], index: 9, kind: input, shape index: {}]
  %s10 = inlined_call_operand.vmem [shape: f32[1,32], index: 10, kind: input, shape index: {}]
  %s11 = inlined_call_operand.hbm [shape: f32[2,64,32], index: 11, kind: output, shape index: {}]
  %s12 = sld [smem:[#allocation0]]
  $region77: #{hgstem_forward.1} parent=0
    _
  %s14 = ssub.s32 1, %s12
  %s15 = scalar_select 0, %s14, %s12
  $region1: #{hgstem_forward.1} parent=0
    #allocation5 [shape = 'u8[65536]{0}', space=vmem, size = 0x10000, scoped, tag = 'output window, operand 0']
    #allocation6 [shape = 's32[2]{0}', space=sflag, size = 0x8, scoped, tag = 'scoped memory for hgstem_forward.1']
    %16 = vsyncpa [#allocation6], 0
    %s17 = scalar_lea.sflag [#allocation6], 1
    %18 = vsyncpa %s17, 0
    loop: start=0, step=1, limit=4
    $region2: #{hgstem_forward.1} parent=1 // loop_pre_header
      _
    $region3: #{hgstem_forward.1} parent=1 // loop_header
      %s20 = sphi 0, %s24
      %p21 = scmp.ge.s32.totalorder %s20, 4
      %s30 = sphi 0, %s32
      %s33 = sphi 0, %s30
      %s34 = sphi 0, %s33
      %s50 = sphi 0, %s34
      %s54 = sphi 0, %s54
      %s56 = sphi 0, %s54
      %s57 = sphi 0, %s56
      %s71 = sphi 0, %s57
      %s75 = sphi 0, %s75
      %s77 = sphi 0, %s75
      %s78 = sphi 0, %s77
      %s92 = sphi 0, %s78
      %s96 = sphi 0, %s96
      %s98 = sphi 0, %s96
      %s99 = sphi 0, %s98
      %s113 = sphi 0, %s99
      %s117 = sphi 0, %s117
      %s119 = sphi 0, %s117
      %s120 = sphi 0, %s119
      %s134 = sphi 0, %s120
      %s138 = sphi 0, %s138
      %s140 = sphi 0, %s138
      %s141 = sphi 0, %s140
      %s155 = sphi 0, %s141
      %s159 = sphi 0, %s159
      %s161 = sphi 0, %s159
      %s162 = sphi 0, %s161
      %s176 = sphi 0, %s162
      %s180 = sphi 0, %s180
      %s182 = sphi 0, %s180
      %s183 = sphi 0, %s182
      %s197 = sphi 0, %s183
      %s201 = sphi 0, %s201
      %s203 = sphi 0, %s201
      %s204 = sphi 0, %s203
      %s218 = sphi 0, %s204
      %s222 = sphi 0, %s222
      %s224 = sphi 0, %s222
      %s225 = sphi 0, %s224
      %s239 = sphi 0, %s225
      %s243 = sphi 0, %s243
      %s245 = sphi 0, %s243
      %s246 = sphi 0, %s245
      %s260 = sphi 0, %s246
      %s266 = sphi 0, %s268
      %s269 = sphi 0, %s266
      %s270 = sphi 0, %s269
      %s286 = sphi 0, %s270
    $region4: #{hgstem_forward.1} parent=1 // loop_header_branch
      %23 = sbr.rel (%p21) target = $region8
    $region5: #{hgstem_forward.1} parent=1 // loop_body
      %s25 = ssub.s32 %s20, 1
      %s26 = ssub.s32 %s20, 2
      %s27 = sadd.s32 %s20, 1
      %s28 = ssub.s32 %s20, %s27
      %p29 = scmp.eq.s32.totalorder %s28, 0
      %s31 = sadd.s32 %s30, 1
      %s32 = scalar_select %p29, %s30, %s31
      %p35 = pneg %p29
      %p36 = scmp.eq.s32.totalorder %s20, 1
      %p37 = por %p35, %p36
      %p38 = scmp.ne.s32.totalorder %s30, %s33
      %p39 = scmp.eq.s32.totalorder %s20, 0
      %p40 = por %p38, %p39
      %p41 = scmp.ne.s32.totalorder %s30, %s33
      %p42 = scmp.eq.s32.totalorder %s25, 1
      %p43 = por %p41, %p42
      %p44 = scmp.ne.s32.totalorder %s33, %s34
      %p45 = scmp.eq.s32.totalorder %s25, 0
      %p46 = por %p44, %p45
      %p47 = scmp.ne.s32.totalorder %s33, %s34
      %p48 = scmp.eq.s32.totalorder %s26, 1
      %p49 = por %p47, %p48
      %p51 = scmp.ne.s32.totalorder %s34, %s50
      %p52 = scmp.eq.s32.totalorder %s26, 0
      %p53 = por %p51, %p52
      %s55 = sadd.s32 %s54, 1
      %p58 = scmp.eq.s32.totalorder %s20, 1
      %p59 = scmp.ne.s32.totalorder %s54, %s56
      %p60 = scmp.eq.s32.totalorder %s20, 0
      %p61 = por %p59, %p60
      %p62 = scmp.ne.s32.totalorder %s54, %s56
      %p63 = scmp.eq.s32.totalorder %s25, 1
      %p64 = por %p62, %p63
      %p65 = scmp.ne.s32.totalorder %s56, %s57
      %p66 = scmp.eq.s32.totalorder %s25, 0
      %p67 = por %p65, %p66
      %p68 = scmp.ne.s32.totalorder %s56, %s57
      %p69 = scmp.eq.s32.totalorder %s26, 1
      %p70 = por %p68, %p69
      %p72 = scmp.ne.s32.totalorder %s57, %s71
      %p73 = scmp.eq.s32.totalorder %s26, 0
      %p74 = por %p72, %p73
      %s76 = sadd.s32 %s75, 1
      %p79 = scmp.eq.s32.totalorder %s20, 1
      %p80 = scmp.ne.s32.totalorder %s75, %s77
      %p81 = scmp.eq.s32.totalorder %s20, 0
      %p82 = por %p80, %p81
      %p83 = scmp.ne.s32.totalorder %s75, %s77
      %p84 = scmp.eq.s32.totalorder %s25, 1
      %p85 = por %p83, %p84
      %p86 = scmp.ne.s32.totalorder %s77, %s78
      %p87 = scmp.eq.s32.totalorder %s25, 0
      %p88 = por %p86, %p87
      %p89 = scmp.ne.s32.totalorder %s77, %s78
      %p90 = scmp.eq.s32.totalorder %s26, 1
      %p91 = por %p89, %p90
      %p93 = scmp.ne.s32.totalorder %s78, %s92
      %p94 = scmp.eq.s32.totalorder %s26, 0
      %p95 = por %p93, %p94
      %s97 = sadd.s32 %s96, 1
      %p100 = scmp.eq.s32.totalorder %s20, 1
      %p101 = scmp.ne.s32.totalorder %s96, %s98
      %p102 = scmp.eq.s32.totalorder %s20, 0
      %p103 = por %p101, %p102
      %p104 = scmp.ne.s32.totalorder %s96, %s98
      %p105 = scmp.eq.s32.totalorder %s25, 1
      %p106 = por %p104, %p105
      %p107 = scmp.ne.s32.totalorder %s98, %s99
      %p108 = scmp.eq.s32.totalorder %s25, 0
      %p109 = por %p107, %p108
      %p110 = scmp.ne.s32.totalorder %s98, %s99
      %p111 = scmp.eq.s32.totalorder %s26, 1
      %p112 = por %p110, %p111
      %p114 = scmp.ne.s32.totalorder %s99, %s113
      %p115 = scmp.eq.s32.totalorder %s26, 0
      %p116 = por %p114, %p115
      %s118 = sadd.s32 %s117, 1
      %p121 = scmp.eq.s32.totalorder %s20, 1
      %p122 = scmp.ne.s32.totalorder %s117, %s119
      %p123 = scmp.eq.s32.totalorder %s20, 0
      %p124 = por %p122, %p123
      %p125 = scmp.ne.s32.totalorder %s117, %s119
      %p126 = scmp.eq.s32.totalorder %s25, 1
      %p127 = por %p125, %p126
      %p128 = scmp.ne.s32.totalorder %s119, %s120
      %p129 = scmp.eq.s32.totalorder %s25, 0
      %p130 = por %p128, %p129
      %p131 = scmp.ne.s32.totalorder %s119, %s120
      %p132 = scmp.eq.s32.totalorder %s26, 1
      %p133 = por %p131, %p132
      %p135 = scmp.ne.s32.totalorder %s120, %s134
      %p136 = scmp.eq.s32.totalorder %s26, 0
      %p137 = por %p135, %p136
      %s139 = sadd.s32 %s138, 1
      %p142 = scmp.eq.s32.totalorder %s20, 1
      %p143 = scmp.ne.s32.totalorder %s138, %s140
      %p144 = scmp.eq.s32.totalorder %s20, 0
      %p145 = por %p143, %p144
      %p146 = scmp.ne.s32.totalorder %s138, %s140
      %p147 = scmp.eq.s32.totalorder %s25, 1
      %p148 = por %p146, %p147
      %p149 = scmp.ne.s32.totalorder %s140, %s141
      %p150 = scmp.eq.s32.totalorder %s25, 0
      %p151 = por %p149, %p150
      %p152 = scmp.ne.s32.totalorder %s140, %s141
      %p153 = scmp.eq.s32.totalorder %s26, 1
      %p154 = por %p152, %p153
      %p156 = scmp.ne.s32.totalorder %s141, %s155
      %p157 = scmp.eq.s32.totalorder %s26, 0
      %p158 = por %p156, %p157
      %s160 = sadd.s32 %s159, 1
      %p163 = scmp.eq.s32.totalorder %s20, 1
      %p164 = scmp.ne.s32.totalorder %s159, %s161
      %p165 = scmp.eq.s32.totalorder %s20, 0
      %p166 = por %p164, %p165
      %p167 = scmp.ne.s32.totalorder %s159, %s161
      %p168 = scmp.eq.s32.totalorder %s25, 1
      %p169 = por %p167, %p168
      %p170 = scmp.ne.s32.totalorder %s161, %s162
      %p171 = scmp.eq.s32.totalorder %s25, 0
      %p172 = por %p170, %p171
      %p173 = scmp.ne.s32.totalorder %s161, %s162
      %p174 = scmp.eq.s32.totalorder %s26, 1
      %p175 = por %p173, %p174
      %p177 = scmp.ne.s32.totalorder %s162, %s176
      %p178 = scmp.eq.s32.totalorder %s26, 0
      %p179 = por %p177, %p178
      %s181 = sadd.s32 %s180, 1
      %p184 = scmp.eq.s32.totalorder %s20, 1
      %p185 = scmp.ne.s32.totalorder %s180, %s182
      %p186 = scmp.eq.s32.totalorder %s20, 0
      %p187 = por %p185, %p186
      %p188 = scmp.ne.s32.totalorder %s180, %s182
      %p189 = scmp.eq.s32.totalorder %s25, 1
      %p190 = por %p188, %p189
      %p191 = scmp.ne.s32.totalorder %s182, %s183
      %p192 = scmp.eq.s32.totalorder %s25, 0
      %p193 = por %p191, %p192
      %p194 = scmp.ne.s32.totalorder %s182, %s183
      %p195 = scmp.eq.s32.totalorder %s26, 1
      %p196 = por %p194, %p195
      %p198 = scmp.ne.s32.totalorder %s183, %s197
      %p199 = scmp.eq.s32.totalorder %s26, 0
      %p200 = por %p198, %p199
      %s202 = sadd.s32 %s201, 1
      %p205 = scmp.eq.s32.totalorder %s20, 1
      %p206 = scmp.ne.s32.totalorder %s201, %s203
      %p207 = scmp.eq.s32.totalorder %s20, 0
      %p208 = por %p206, %p207
      %p209 = scmp.ne.s32.totalorder %s201, %s203
      %p210 = scmp.eq.s32.totalorder %s25, 1
      %p211 = por %p209, %p210
      %p212 = scmp.ne.s32.totalorder %s203, %s204
      %p213 = scmp.eq.s32.totalorder %s25, 0
      %p214 = por %p212, %p213
      %p215 = scmp.ne.s32.totalorder %s203, %s204
      %p216 = scmp.eq.s32.totalorder %s26, 1
      %p217 = por %p215, %p216
      %p219 = scmp.ne.s32.totalorder %s204, %s218
      %p220 = scmp.eq.s32.totalorder %s26, 0
      %p221 = por %p219, %p220
      %s223 = sadd.s32 %s222, 1
      %p226 = scmp.eq.s32.totalorder %s20, 1
      %p227 = scmp.ne.s32.totalorder %s222, %s224
      %p228 = scmp.eq.s32.totalorder %s20, 0
      %p229 = por %p227, %p228
      %p230 = scmp.ne.s32.totalorder %s222, %s224
      %p231 = scmp.eq.s32.totalorder %s25, 1
      %p232 = por %p230, %p231
      %p233 = scmp.ne.s32.totalorder %s224, %s225
      %p234 = scmp.eq.s32.totalorder %s25, 0
      %p235 = por %p233, %p234
      %p236 = scmp.ne.s32.totalorder %s224, %s225
      %p237 = scmp.eq.s32.totalorder %s26, 1
      %p238 = por %p236, %p237
      %p240 = scmp.ne.s32.totalorder %s225, %s239
      %p241 = scmp.eq.s32.totalorder %s26, 0
      %p242 = por %p240, %p241
      %s244 = sadd.s32 %s243, 1
      %p247 = scmp.eq.s32.totalorder %s20, 1
      %p248 = scmp.ne.s32.totalorder %s243, %s245
      %p249 = scmp.eq.s32.totalorder %s20, 0
      %p250 = por %p248, %p249
      %p251 = scmp.ne.s32.totalorder %s243, %s245
      %p252 = scmp.eq.s32.totalorder %s25, 1
      %p253 = por %p251, %p252
      %p254 = scmp.ne.s32.totalorder %s245, %s246
      %p255 = scmp.eq.s32.totalorder %s25, 0
      %p256 = por %p254, %p255
      %p257 = scmp.ne.s32.totalorder %s245, %s246
      %p258 = scmp.eq.s32.totalorder %s26, 1
      %p259 = por %p257, %p258
      %p261 = scmp.ne.s32.totalorder %s246, %s260
      %p262 = scmp.eq.s32.totalorder %s26, 0
      %p263 = por %p261, %p262
      %s264 = ssub.s32 %s20, %s27
      %p265 = scmp.eq.s32.totalorder %s264, 0
      %s267 = sadd.s32 %s266, 1
      %s268 = scalar_select %p265, %s266, %s267
      %p271 = pneg %p265
      %p272 = scmp.eq.s32.totalorder %s20, 1
      %p273 = por %p271, %p272
      %p274 = scmp.ne.s32.totalorder %s266, %s269
      %p275 = scmp.eq.s32.totalorder %s20, 0
      %p276 = por %p274, %p275
      %p277 = scmp.ne.s32.totalorder %s266, %s269
      %p278 = scmp.eq.s32.totalorder %s25, 1
      %p279 = por %p277, %p278
      %p280 = scmp.ne.s32.totalorder %s269, %s270
      %p281 = scmp.eq.s32.totalorder %s25, 0
      %p282 = por %p280, %p281
      %p283 = scmp.ne.s32.totalorder %s269, %s270
      %p284 = scmp.eq.s32.totalorder %s26, 1
      %p285 = por %p283, %p284
      %p287 = scmp.ne.s32.totalorder %s270, %s286
      %p288 = scmp.eq.s32.totalorder %s26, 0
      %p289 = por %p287, %p288
      %p290 = scmp.le.s32.totalorder 1, %s20
      %p291 = scmp.lt.s32.totalorder %s20, 3
      %p292 = pnand %p290, %p291
      %p293 = pneg %p292
      // Predicated region
      $region9: #{hgstem_forward.1} parent=5 // pred_check
        _
      $region10: #{hgstem_forward.1} parent=5 // pred_check_branch
        %295 = sbr.rel (%p292) target = $region12
      $region11: #{hgstem_forward.1} parent=5 // pred_region
        %s296 = ssub.s32 %s20, 1
        // Predicated region
        $region13: #{hgstem_forward.1} parent=11 // pred_check
          %p297 = pneg %p67
        $region14: #{hgstem_forward.1} parent=11 // pred_check_branch
          %299 = sbr.rel (%p297) target = $region16
        $region15: #{hgstem_forward.1} parent=11 // pred_region
          _
        $region16: #{hgstem_forward.1} parent=11 // pred_fallthru
          _
        // Predicated region
        $region17: #{hgstem_forward.1} parent=11 // pred_check
          %p300 = pneg %p88
        $region18: #{hgstem_forward.1} parent=11 // pred_check_branch
          %302 = sbr.rel (%p300) target = $region20
        $region19: #{hgstem_forward.1} parent=11 // pred_region
          _
        $region20: #{hgstem_forward.1} parent=11 // pred_fallthru
          _
        // Predicated region
        $region21: #{hgstem_forward.1} parent=11 // pred_check
          %p303 = pneg %p109
        $region22: #{hgstem_forward.1} parent=11 // pred_check_branch
          %305 = sbr.rel (%p303) target = $region24
        $region23: #{hgstem_forward.1} parent=11 // pred_region
          _
        $region24: #{hgstem_forward.1} parent=11 // pred_fallthru
          _
        // Predicated region
        $region25: #{hgstem_forward.1} parent=11 // pred_check
          %p306 = pneg %p130
        $region26: #{hgstem_forward.1} parent=11 // pred_check_branch
          %308 = sbr.rel (%p306) target = $region28
        $region27: #{hgstem_forward.1} parent=11 // pred_region
          _
        $region28: #{hgstem_forward.1} parent=11 // pred_fallthru
          _
        // Predicated region
        $region29: #{hgstem_forward.1} parent=11 // pred_check
          %p309 = pneg %p151
        $region30: #{hgstem_forward.1} parent=11 // pred_check_branch
          %311 = sbr.rel (%p309) target = $region32
        $region31: #{hgstem_forward.1} parent=11 // pred_region
          _
        $region32: #{hgstem_forward.1} parent=11 // pred_fallthru
          _
        // Predicated region
        $region33: #{hgstem_forward.1} parent=11 // pred_check
          %p312 = pneg %p172
        $region34: #{hgstem_forward.1} parent=11 // pred_check_branch
          %314 = sbr.rel (%p312) target = $region36
        $region35: #{hgstem_forward.1} parent=11 // pred_region
          _
        $region36: #{hgstem_forward.1} parent=11 // pred_fallthru
          _
        // Predicated region
        $region37: #{hgstem_forward.1} parent=11 // pred_check
          %p315 = pneg %p193
        $region38: #{hgstem_forward.1} parent=11 // pred_check_branch
          %317 = sbr.rel (%p315) target = $region40
        $region39: #{hgstem_forward.1} parent=11 // pred_region
          _
        $region40: #{hgstem_forward.1} parent=11 // pred_fallthru
          _
        // Predicated region
        $region41: #{hgstem_forward.1} parent=11 // pred_check
          %p318 = pneg %p214
        $region42: #{hgstem_forward.1} parent=11 // pred_check_branch
          %320 = sbr.rel (%p318) target = $region44
        $region43: #{hgstem_forward.1} parent=11 // pred_region
          _
        $region44: #{hgstem_forward.1} parent=11 // pred_fallthru
          _
        // Predicated region
        $region45: #{hgstem_forward.1} parent=11 // pred_check
          %p321 = pneg %p235
        $region46: #{hgstem_forward.1} parent=11 // pred_check_branch
          %323 = sbr.rel (%p321) target = $region48
        $region47: #{hgstem_forward.1} parent=11 // pred_region
          _
        $region48: #{hgstem_forward.1} parent=11 // pred_fallthru
          _
        // Predicated region
        $region49: #{hgstem_forward.1} parent=11 // pred_check
          %p324 = pneg %p256
        $region50: #{hgstem_forward.1} parent=11 // pred_check_branch
          %326 = sbr.rel (%p324) target = $region52
        $region51: #{hgstem_forward.1} parent=11 // pred_region
          _
        $region52: #{hgstem_forward.1} parent=11 // pred_fallthru
          _
      $region12: #{hgstem_forward.1} parent=5 // pred_fallthru
        _
      %p327 = scmp.lt.s32.totalorder %s20, 2
      // Predicated region
      $region53: #{hgstem_forward.1} parent=5 // pred_check
        %p328 = pneg %p327
      $region54: #{hgstem_forward.1} parent=5 // pred_check_branch
        %330 = sbr.rel (%p328) target = $region56
      $region55: #{hgstem_forward.1} parent=5 // pred_region
        // Predicated region
        $region57: #{hgstem_forward.1} parent=55 // pred_check
          %p331 = pneg %p40
        $region58: #{hgstem_forward.1} parent=55 // pred_check_branch
          %333 = sbr.rel (%p331) target = $region60
        $region59: #{hgstem_forward.1} parent=55 // pred_region
          %p334 = scmp.lt.s32.totalorder %s20, 1
          %s335 = scalar_select %p334, %s20, 1
          %s336 = smul.addr %s335, 68
          %s337 = smul.addr %s336, 8
          %s338 = scalar_lea.vmem %s0, %s337
        $region60: #{hgstem_forward.1} parent=55 // pred_fallthru
          _
      $region56: #{hgstem_forward.1} parent=5 // pred_fallthru
        _
      %p339 = scmp.le.s32.totalorder 1, %s20
      %p340 = scmp.lt.s32.totalorder %s20, 3
      %p341 = pnand %p339, %p340
      %p342 = pneg %p341
      // Predicated region
      $region61: #{hgstem_forward.1} parent=5 // pred_check
        _
      $region62: #{hgstem_forward.1} parent=5 // pred_check_branch
        %344 = sbr.rel (%p341) target = $region64
      $region63: #{hgstem_forward.1} parent=5 // pred_region
        %s345 = ssub.s32 %s20, 1
        %p346 = scmp.lt.s32.totalorder %s25, 1
        %s347 = scalar_select %p346, %s25, 1
        %s348 = smul.addr %s347, 68
        %s349 = smul.addr %s348, 8
        %s350 = scalar_lea.vmem %s0, %s349
        %p351 = pneg %p46
        %p352 = pneg %p43
        %p353 = pneg %p67
        %p354 = pneg %p64
        %p355 = pneg %p88
        %p356 = pneg %p85
        %p357 = pneg %p109
        %p358 = pneg %p106
        %p359 = pneg %p130
        %p360 = pneg %p127
        %p361 = pneg %p151
        %p362 = pneg %p148
        %p363 = pneg %p172
        %p364 = pneg %p169
        %p365 = pneg %p193
        %p366 = pneg %p190
        %p367 = pneg %p214
        %p368 = pneg %p211
        %p369 = pneg %p235
        %p370 = pneg %p232
        %p371 = pneg %p256
        %p372 = pneg %p253
        %p373 = pneg %p282
        %p374 = pneg %p279
        %s375 = sand.u32 %s269, 1
        %s376 = scalar_lea.sflag [#allocation6], %s375
        %s377 = sand.u32 %s269, 1
        %s378 = smul.addr %s377, 64
        %s379 = scalar_lea.vmem [#allocation5], %s378
        %p380 = scmp.lt.s32.totalorder %s25, 1
        %s381 = scalar_select %p380, %s25, 1
        %s382 = smul.addr %s381, 68
        %s383 = smul.addr %s382, 8
        %s384 = scalar_lea.vmem %s0, %s383
        %v386 = vld [vmem:[%s384] sm:$0xff]
        %v387 = vld [vmem:[%s384 + $0x10] sm:$0xff]
        %v388 = vld [vmem:[%s384 + $0x20] sm:$0xff]
        %v389 = vld [vmem:[%s384 + $0x30] sm:$0xff]
        %v390 = vld [vmem:[%s384 + $0x40] sm:$0xff]
        %v391 = vld [vmem:[%s384 + $0x50] sm:$0xff]
        %v392 = vld [vmem:[%s384 + $0x60] sm:$0xff]
        %v393 = vld [vmem:[%s384 + $0x70] sm:$0xff]
        %v394 = vld [vmem:[%s384 + $0x80] sm:$0xff]
        %v395 = vld [vmem:[%s384 + $0x90] sm:$0xff]
        %v396 = vld [vmem:[%s384 + $0xa0] sm:$0xff]
        %v397 = vld [vmem:[%s384 + $0xb0] sm:$0xff]
        %v398 = vld [vmem:[%s384 + $0xc0] sm:$0xff]
        %v399 = vld [vmem:[%s384 + $0xd0] sm:$0xff]
        %v400 = vld [vmem:[%s384 + $0xe0] sm:$0xff]
        %v401 = vld [vmem:[%s384 + $0xf0] sm:$0xff]
        %v402 = vpack.c.bf16 %v387, %v386
        %v403 = vpack.c.bf16 %v389, %v388
        %v404 = vpack.c.bf16 %v391, %v390
        %v405 = vpack.c.bf16 %v393, %v392
        %v406 = vpack.c.bf16 %v395, %v394
        %v407 = vpack.c.bf16 %v397, %v396
        %v408 = vpack.c.bf16 %v399, %v398
        %v409 = vpack.c.bf16 %v401, %v400
        %v410 = vld [vmem:[%s1] sm:$0xf]
        %v411 = vld [vmem:[%s1 + $0x4] sm:$0xf]
        %s412 = scalar_lea.vmem %s384, 272
        %v413 = vld [vmem:[%s412] sm:$0xff]
        %v414 = vld [vmem:[%s412 + $0x10] sm:$0xff]
        %v415 = vld [vmem:[%s412 + $0x20] sm:$0xff]
        %v416 = vld [vmem:[%s412 + $0x30] sm:$0xff]
        %v417 = vld [vmem:[%s412 + $0x40] sm:$0xff]
        %v418 = vld [vmem:[%s412 + $0x50] sm:$0xff]
        %v419 = vld [vmem:[%s412 + $0x60] sm:$0xff]
        %v420 = vld [vmem:[%s412 + $0x70] sm:$0xff]
        %v421 = vld [vmem:[%s412 + $0x80] sm:$0xff]
        %v422 = vld [vmem:[%s412 + $0x90] sm:$0xff]
        %v423 = vld [vmem:[%s412 + $0xa0] sm:$0xff]
        %v424 = vld [vmem:[%s412 + $0xb0] sm:$0xff]
        %v425 = vld [vmem:[%s412 + $0xc0] sm:$0xff]
        %v426 = vld [vmem:[%s412 + $0xd0] sm:$0xff]
        %v427 = vld [vmem:[%s412 + $0xe0] sm:$0xff]
        %v428 = vld [vmem:[%s412 + $0xf0] sm:$0xff]
        %v429 = vpack.c.bf16 %v414, %v413
        %v430 = vpack.c.bf16 %v416, %v415
        %v431 = vpack.c.bf16 %v418, %v417
        %v432 = vpack.c.bf16 %v420, %v419
        %v433 = vpack.c.bf16 %v422, %v421
        %v434 = vpack.c.bf16 %v424, %v423
        %v435 = vpack.c.bf16 %v426, %v425
        %v436 = vpack.c.bf16 %v428, %v427
        %v437 = vld [vmem:[%s1 + $0x8] sm:$0xf]
        %v438 = vld [vmem:[%s1 + $0xc] sm:$0xf]
        %v441 = vunpack.c.l.b16 %v437
        %v442 = vunpack.c.l.b16 %v438
        %v443 = vpack.c.b16 %v442, %v441
        %vm445 = vcmask 130048
        %v447 = vsel %vm445, %v429, 0
        %v450 = vsel %vm445, %v430, 0
        %v453 = vsel %vm445, %v431, 0
        %v456 = vsel %vm445, %v432, 0
        %v459 = vsel %vm445, %v433, 0
        %v462 = vsel %vm445, %v434, 0
        %v465 = vsel %vm445, %v435, 0
        %v468 = vsel %vm445, %v436, 0
        %470 = vmatpush.bf16.msra.mxu0 0
        %471 = vmatpush.bf16.msra.mxu0 0
        %472 = vmatpush.bf16.msra.mxu0 0
        %473 = vmatpush.bf16.msra.mxu0 0
        %474 = vmatpush.bf16.msra.mxu0 0
        %475 = vmatpush.bf16.msra.mxu0 0
        %476 = vmatpush.bf16.msra.mxu0 0
        %477 = vmatpush.bf16.msra.mxu0 %v443
        %478 = vmatmul.bf16.gmra.mxu0 %v447
        %v479 = vpop.f32.mrf.mxu0
        %v480 = vadd.f32 0.0, %v479
        %v481 = vpop.f32.mrf.mxu0
        %v482 = vadd.f32 0.0, %v481
        %483 = vmatmul.bf16.gmra.mxu0 %v450
        %v484 = vpop.f32.mrf.mxu0
        %v485 = vadd.f32 0.0, %v484
        %v486 = vpop.f32.mrf.mxu0
        %v487 = vadd.f32 0.0, %v486
        %488 = vmatmul.bf16.gmra.mxu0 %v453
        %v489 = vpop.f32.mrf.mxu0
        %v490 = vadd.f32 0.0, %v489
        %v491 = vpop.f32.mrf.mxu0
        %v492 = vadd.f32 0.0, %v491
        %493 = vmatmul.bf16.gmra.mxu0 %v456
        %v494 = vpop.f32.mrf.mxu0
        %v495 = vadd.f32 0.0, %v494
        %v496 = vpop.f32.mrf.mxu0
        %v497 = vadd.f32 0.0, %v496
        %498 = vmatmul.bf16.gmra.mxu0 %v459
        %v499 = vpop.f32.mrf.mxu0
        %v500 = vadd.f32 0.0, %v499
        %v501 = vpop.f32.mrf.mxu0
        %v502 = vadd.f32 0.0, %v501
        %503 = vmatmul.bf16.gmra.mxu0 %v462
        %v504 = vpop.f32.mrf.mxu0
        %v505 = vadd.f32 0.0, %v504
        %v506 = vpop.f32.mrf.mxu0
        %v507 = vadd.f32 0.0, %v506
        %508 = vmatmul.bf16.gmra.mxu0 %v465
        %v509 = vpop.f32.mrf.mxu0
        %v510 = vadd.f32 0.0, %v509
        %v511 = vpop.f32.mrf.mxu0
        %v512 = vadd.f32 0.0, %v511
        %513 = vmatmul.bf16.gmra.mxu0 %v468
        %v514 = vpop.f32.mrf.mxu0
        %v515 = vadd.f32 0.0, %v514
        %v516 = vpop.f32.mrf.mxu0
        %v517 = vadd.f32 0.0, %v516
        %518 = vdwg.mxu0
        %v521 = vunpack.c.l.b16 %v410
        %v522 = vunpack.c.l.b16 %v411
        %v523 = vpack.c.b16 %v522, %v521
        %v526 = vsel %vm445, %v402, 0
        %v529 = vsel %vm445, %v403, 0
        %v532 = vsel %vm445, %v404, 0
        %v535 = vsel %vm445, %v405, 0
        %v538 = vsel %vm445, %v406, 0
        %v541 = vsel %vm445, %v407, 0
        %v544 = vsel %vm445, %v408, 0
        %v547 = vsel %vm445, %v409, 0
        %549 = vmatpush.bf16.msra.mxu0 0
        %550 = vmatpush.bf16.msra.mxu0 0
        %551 = vmatpush.bf16.msra.mxu0 0
        %552 = vmatpush.bf16.msra.mxu0 0
        %553 = vmatpush.bf16.msra.mxu0 0
        %554 = vmatpush.bf16.msra.mxu0 0
        %555 = vmatpush.bf16.msra.mxu0 0
        %556 = vmatpush.bf16.msra.mxu0 %v523
        %557 = vmatmul.bf16.gmra.mxu0 %v526
        %v558 = vpop.f32.mrf.mxu0
        %v559 = vadd.f32 %v480, %v558
        %v560 = vpop.f32.mrf.mxu0
        %v561 = vadd.f32 %v482, %v560
        %562 = vmatmul.bf16.gmra.mxu0 %v529
        %v563 = vpop.f32.mrf.mxu0
        %v564 = vadd.f32 %v485, %v563
        %v565 = vpop.f32.mrf.mxu0
        %v566 = vadd.f32 %v487, %v565
        %567 = vmatmul.bf16.gmra.mxu0 %v532
        %v568 = vpop.f32.mrf.mxu0
        %v569 = vadd.f32 %v490, %v568
        %v570 = vpop.f32.mrf.mxu0
        %v571 = vadd.f32 %v492, %v570
        %572 = vmatmul.bf16.gmra.mxu0 %v535
        %v573 = vpop.f32.mrf.mxu0
        %v574 = vadd.f32 %v495, %v573
        %v575 = vpop.f32.mrf.mxu0
        %v576 = vadd.f32 %v497, %v575
        %577 = vmatmul.bf16.gmra.mxu0 %v538
        %v578 = vpop.f32.mrf.mxu0
        %v579 = vadd.f32 %v500, %v578
        %v580 = vpop.f32.mrf.mxu0
        %v581 = vadd.f32 %v502, %v580
        %582 = vmatmul.bf16.gmra.mxu0 %v541
        %v583 = vpop.f32.mrf.mxu0
        %v584 = vadd.f32 %v505, %v583
        %v585 = vpop.f32.mrf.mxu0
        %v586 = vadd.f32 %v507, %v585
        %587 = vmatmul.bf16.gmra.mxu0 %v544
        %v588 = vpop.f32.mrf.mxu0
        %v589 = vadd.f32 %v510, %v588
        %v590 = vpop.f32.mrf.mxu0
        %v591 = vadd.f32 %v512, %v590
        %592 = vmatmul.bf16.gmra.mxu0 %v547
        %v593 = vpop.f32.mrf.mxu0
        %v594 = vadd.f32 %v515, %v593
        %v595 = vpop.f32.mrf.mxu0
        %v596 = vadd.f32 %v517, %v595
        %597 = vdwg.mxu0
        %s598 = scalar_lea.vmem %s384, 16
        %v599 = vld [vmem:[%s598] sm:$0xff]
        %v600 = vld [vmem:[%s598 + $0x10] sm:$0xff]
        %v601 = vld [vmem:[%s598 + $0x20] sm:$0xff]
        %v602 = vld [vmem:[%s598 + $0x30] sm:$0xff]
        %v603 = vld [vmem:[%s598 + $0x40] sm:$0xff]
        %v604 = vld [vmem:[%s598 + $0x50] sm:$0xff]
        %v605 = vld [vmem:[%s598 + $0x60] sm:$0xff]
        %v606 = vld [vmem:[%s598 + $0x70] sm:$0xff]
        %v607 = vld [vmem:[%s598 + $0x80] sm:$0xff]
        %v608 = vld [vmem:[%s598 + $0x90] sm:$0xff]
        %v609 = vld [vmem:[%s598 + $0xa0] sm:$0xff]
        %v610 = vld [vmem:[%s598 + $0xb0] sm:$0xff]
        %v611 = vld [vmem:[%s598 + $0xc0] sm:$0xff]
        %v612 = vld [vmem:[%s598 + $0xd0] sm:$0xff]
        %v613 = vld [vmem:[%s598 + $0xe0] sm:$0xff]
        %v614 = vld [vmem:[%s598 + $0xf0] sm:$0xff]
        %v615 = vpack.c.bf16 %v600, %v599
        %v616 = vpack.c.bf16 %v602, %v601
        %v617 = vpack.c.bf16 %v604, %v603
        %v618 = vpack.c.bf16 %v606, %v605
        %v619 = vpack.c.bf16 %v608, %v607
        %v620 = vpack.c.bf16 %v610, %v609
        %v621 = vpack.c.bf16 %v612, %v611
        %v622 = vpack.c.bf16 %v614, %v613
        %v623 = vld [vmem:[%s1 + $0x10] sm:$0xf]
        %v624 = vld [vmem:[%s1 + $0x14] sm:$0xf]
        %v627 = vunpack.c.l.b16 %v623
        %v628 = vunpack.c.l.b16 %v624
        %v629 = vpack.c.b16 %v628, %v627
        %v632 = vsel %vm445, %v615, 0
        %v635 = vsel %vm445, %v616, 0
        %v638 = vsel %vm445, %v617, 0
        %v641 = vsel %vm445, %v618, 0
        %v644 = vsel %vm445, %v619, 0
        %v647 = vsel %vm445, %v620, 0
        %v650 = vsel %vm445, %v621, 0
        %v653 = vsel %vm445, %v622, 0
        %655 = vmatpush.bf16.msra.mxu0 0
        %656 = vmatpush.bf16.msra.mxu0 0
        %657 = vmatpush.bf16.msra.mxu0 0
        %658 = vmatpush.bf16.msra.mxu0 0
        %659 = vmatpush.bf16.msra.mxu0 0
        %660 = vmatpush.bf16.msra.mxu0 0
        %661 = vmatpush.bf16.msra.mxu0 0
        %662 = vmatpush.bf16.msra.mxu0 %v629
        %663 = vmatmul.bf16.gmra.mxu0 %v632
        %v664 = vpop.f32.mrf.mxu0
        %v665 = vadd.f32 0.0, %v664
        %v666 = vpop.f32.mrf.mxu0
        %v667 = vadd.f32 0.0, %v666
        %668 = vmatmul.bf16.gmra.mxu0 %v635
        %v669 = vpop.f32.mrf.mxu0
        %v670 = vadd.f32 0.0, %v669
        %v671 = vpop.f32.mrf.mxu0
        %v672 = vadd.f32 0.0, %v671
        %673 = vmatmul.bf16.gmra.mxu0 %v638
        %v674 = vpop.f32.mrf.mxu0
        %v675 = vadd.f32 0.0, %v674
        %v676 = vpop.f32.mrf.mxu0
        %v677 = vadd.f32 0.0, %v676
        %678 = vmatmul.bf16.gmra.mxu0 %v641
        %v679 = vpop.f32.mrf.mxu0
        %v680 = vadd.f32 0.0, %v679
        %v681 = vpop.f32.mrf.mxu0
        %v682 = vadd.f32 0.0, %v681
        %683 = vmatmul.bf16.gmra.mxu0 %v644
        %v684 = vpop.f32.mrf.mxu0
        %v685 = vadd.f32 0.0, %v684
        %v686 = vpop.f32.mrf.mxu0
        %v687 = vadd.f32 0.0, %v686
        %688 = vmatmul.bf16.gmra.mxu0 %v647
        %v689 = vpop.f32.mrf.mxu0
        %v690 = vadd.f32 0.0, %v689
        %v691 = vpop.f32.mrf.mxu0
        %v692 = vadd.f32 0.0, %v691
        %693 = vmatmul.bf16.gmra.mxu0 %v650
        %v694 = vpop.f32.mrf.mxu0
        %v695 = vadd.f32 0.0, %v694
        %v696 = vpop.f32.mrf.mxu0
        %v697 = vadd.f32 0.0, %v696
        %698 = vmatmul.bf16.gmra.mxu0 %v653
        %v699 = vpop.f32.mrf.mxu0
        %v700 = vadd.f32 0.0, %v699
        %v701 = vpop.f32.mrf.mxu0
        %v702 = vadd.f32 0.0, %v701
        %703 = vdwg.mxu0
        %v704 = vadd.f32 %v559, %v665
        %v705 = vadd.f32 %v561, %v667
        %v706 = vadd.f32 %v564, %v670
        %v707 = vadd.f32 %v566, %v672
        %v708 = vadd.f32 %v569, %v675
        %v709 = vadd.f32 %v571, %v677
        %v710 = vadd.f32 %v574, %v680
        %v711 = vadd.f32 %v576, %v682
        %v712 = vadd.f32 %v579, %v685
        %v713 = vadd.f32 %v581, %v687
        %v714 = vadd.f32 %v584, %v690
        %v715 = vadd.f32 %v586, %v692
        %v716 = vadd.f32 %v589, %v695
        %v717 = vadd.f32 %v591, %v697
        %v718 = vadd.f32 %v594, %v700
        %v719 = vadd.f32 %v596, %v702
        %s720 = scalar_lea.vmem %s384, 288
        %v721 = vld [vmem:[%s720] sm:$0xff]
        %v722 = vld [vmem:[%s720 + $0x10] sm:$0xff]
        %v723 = vld [vmem:[%s720 + $0x20] sm:$0xff]
        %v724 = vld [vmem:[%s720 + $0x30] sm:$0xff]
        %v725 = vld [vmem:[%s720 + $0x40] sm:$0xff]
        %v726 = vld [vmem:[%s720 + $0x50] sm:$0xff]
        %v727 = vld [vmem:[%s720 + $0x60] sm:$0xff]
        %v728 = vld [vmem:[%s720 + $0x70] sm:$0xff]
        %v729 = vld [vmem:[%s720 + $0x80] sm:$0xff]
        %v730 = vld [vmem:[%s720 + $0x90] sm:$0xff]
        %v731 = vld [vmem:[%s720 + $0xa0] sm:$0xff]
        %v732 = vld [vmem:[%s720 + $0xb0] sm:$0xff]
        %v733 = vld [vmem:[%s720 + $0xc0] sm:$0xff]
        %v734 = vld [vmem:[%s720 + $0xd0] sm:$0xff]
        %v735 = vld [vmem:[%s720 + $0xe0] sm:$0xff]
        %v736 = vld [vmem:[%s720 + $0xf0] sm:$0xff]
        %v737 = vpack.c.bf16 %v722, %v721
        %v738 = vpack.c.bf16 %v724, %v723
        %v739 = vpack.c.bf16 %v726, %v725
        %v740 = vpack.c.bf16 %v728, %v727
        %v741 = vpack.c.bf16 %v730, %v729
        %v742 = vpack.c.bf16 %v732, %v731
        %v743 = vpack.c.bf16 %v734, %v733
        %v744 = vpack.c.bf16 %v736, %v735
        %v745 = vld [vmem:[%s1 + $0x18] sm:$0xf]
        %v746 = vld [vmem:[%s1 + $0x1c] sm:$0xf]
        %v749 = vunpack.c.l.b16 %v745
        %v750 = vunpack.c.l.b16 %v746
        %v751 = vpack.c.b16 %v750, %v749
        %v754 = vsel %vm445, %v737, 0
        %v757 = vsel %vm445, %v738, 0
        %v760 = vsel %vm445, %v739, 0
        %v763 = vsel %vm445, %v740, 0
        %v766 = vsel %vm445, %v741, 0
        %v769 = vsel %vm445, %v742, 0
        %v772 = vsel %vm445, %v743, 0
        %v775 = vsel %vm445, %v744, 0
        %777 = vmatpush.bf16.msra.mxu0 0
        %778 = vmatpush.bf16.msra.mxu0 0
        %779 = vmatpush.bf16.msra.mxu0 0
        %780 = vmatpush.bf16.msra.mxu0 0
        %781 = vmatpush.bf16.msra.mxu0 0
        %782 = vmatpush.bf16.msra.mxu0 0
        %783 = vmatpush.bf16.msra.mxu0 0
        %784 = vmatpush.bf16.msra.mxu0 %v751
        %785 = vmatmul.bf16.gmra.mxu0 %v754
        %v786 = vpop.f32.mrf.mxu0
        %v787 = vadd.f32 0.0, %v786
        %v788 = vpop.f32.mrf.mxu0
        %v789 = vadd.f32 0.0, %v788
        %790 = vmatmul.bf16.gmra.mxu0 %v757
        %v791 = vpop.f32.mrf.mxu0
        %v792 = vadd.f32 0.0, %v791
        %v793 = vpop.f32.mrf.mxu0
        %v794 = vadd.f32 0.0, %v793
        %795 = vmatmul.bf16.gmra.mxu0 %v760
        %v796 = vpop.f32.mrf.mxu0
        %v797 = vadd.f32 0.0, %v796
        %v798 = vpop.f32.mrf.mxu0
        %v799 = vadd.f32 0.0, %v798
        %800 = vmatmul.bf16.gmra.mxu0 %v763
        %v801 = vpop.f32.mrf.mxu0
        %v802 = vadd.f32 0.0, %v801
        %v803 = vpop.f32.mrf.mxu0
        %v804 = vadd.f32 0.0, %v803
        %805 = vmatmul.bf16.gmra.mxu0 %v766
        %v806 = vpop.f32.mrf.mxu0
        %v807 = vadd.f32 0.0, %v806
        %v808 = vpop.f32.mrf.mxu0
        %v809 = vadd.f32 0.0, %v808
        %810 = vmatmul.bf16.gmra.mxu0 %v769
        %v811 = vpop.f32.mrf.mxu0
        %v812 = vadd.f32 0.0, %v811
        %v813 = vpop.f32.mrf.mxu0
        %v814 = vadd.f32 0.0, %v813
        %815 = vmatmul.bf16.gmra.mxu0 %v772
        %v816 = vpop.f32.mrf.mxu0
        %v817 = vadd.f32 0.0, %v816
        %v818 = vpop.f32.mrf.mxu0
        %v819 = vadd.f32 0.0, %v818
        %820 = vmatmul.bf16.gmra.mxu0 %v775
        %v821 = vpop.f32.mrf.mxu0
        %v822 = vadd.f32 0.0, %v821
        %v823 = vpop.f32.mrf.mxu0
        %v824 = vadd.f32 0.0, %v823
        %825 = vdwg.mxu0
        %v826 = vadd.f32 %v704, %v787
        %v827 = vadd.f32 %v705, %v789
        %v828 = vadd.f32 %v706, %v792
        %v829 = vadd.f32 %v707, %v794
        %v830 = vadd.f32 %v708, %v797
        %v831 = vadd.f32 %v709, %v799
        %v832 = vadd.f32 %v710, %v802
        %v833 = vadd.f32 %v711, %v804
        %v834 = vadd.f32 %v712, %v807
        %v835 = vadd.f32 %v713, %v809
        %v836 = vadd.f32 %v714, %v812
        %v837 = vadd.f32 %v715, %v814
        %v838 = vadd.f32 %v716, %v817
        %v839 = vadd.f32 %v717, %v819
        %v840 = vadd.f32 %v718, %v822
        %v841 = vadd.f32 %v719, %v824
        %v842 = vld [vmem:[%s2] sm:$0x1]
        %v844 = vperm.slane %v842, 0
        %v846 = vadd.f32 %v826, %v844
        %v847 = vadd.f32 %v827, %v844
        %v848 = vadd.f32 %v828, %v844
        %v849 = vadd.f32 %v829, %v844
        %v850 = vadd.f32 %v830, %v844
        %v851 = vadd.f32 %v831, %v844
        %v852 = vadd.f32 %v832, %v844
        %v853 = vadd.f32 %v833, %v844
        %v854 = vadd.f32 %v834, %v844
        %v855 = vadd.f32 %v835, %v844
        %v856 = vadd.f32 %v836, %v844
        %v857 = vadd.f32 %v837, %v844
        %v858 = vadd.f32 %v838, %v844
        %v859 = vadd.f32 %v839, %v844
        %v860 = vadd.f32 %v840, %v844
        %v861 = vadd.f32 %v841, %v844
        %v862 = vmax.f32 %v846, 0.0
        %v863 = vmax.f32 %v847, 0.0
        %v864 = vmax.f32 %v848, 0.0
        %v865 = vmax.f32 %v849, 0.0
        %v866 = vmax.f32 %v850, 0.0
        %v867 = vmax.f32 %v851, 0.0
        %v868 = vmax.f32 %v852, 0.0
        %v869 = vmax.f32 %v853, 0.0
        %v870 = vmax.f32 %v854, 0.0
        %v871 = vmax.f32 %v855, 0.0
        %v872 = vmax.f32 %v856, 0.0
        %v873 = vmax.f32 %v857, 0.0
        %v874 = vmax.f32 %v858, 0.0
        %v875 = vmax.f32 %v859, 0.0
        %v876 = vmax.f32 %v860, 0.0
        %v877 = vmax.f32 %v861, 0.0
        %878 = vst.msk [vmem:[#allocation2] sm:$0xff] %vm445, %v862
        %879 = vst.msk [vmem:[#allocation2 + $0x10] sm:$0xff] %vm445, %v863
        %880 = vst.msk [vmem:[#allocation2 + $0x20] sm:$0xff] %vm445, %v864
        %881 = vst.msk [vmem:[#allocation2 + $0x30] sm:$0xff] %vm445, %v865
        %882 = vst.msk [vmem:[#allocation2 + $0x40] sm:$0xff] %vm445, %v866
        %883 = vst.msk [vmem:[#allocation2 + $0x50] sm:$0xff] %vm445, %v867
        %884 = vst.msk [vmem:[#allocation2 + $0x60] sm:$0xff] %vm445, %v868
        %885 = vst.msk [vmem:[#allocation2 + $0x70] sm:$0xff] %vm445, %v869
        %886 = vst.msk [vmem:[#allocation2 + $0x80] sm:$0xff] %vm445, %v870
        %887 = vst.msk [vmem:[#allocation2 + $0x90] sm:$0xff] %vm445, %v871
        %888 = vst.msk [vmem:[#allocation2 + $0xa0] sm:$0xff] %vm445, %v872
        %889 = vst.msk [vmem:[#allocation2 + $0xb0] sm:$0xff] %vm445, %v873
        %890 = vst.msk [vmem:[#allocation2 + $0xc0] sm:$0xff] %vm445, %v874
        %891 = vst.msk [vmem:[#allocation2 + $0xd0] sm:$0xff] %vm445, %v875
        %892 = vst.msk [vmem:[#allocation2 + $0xe0] sm:$0xff] %vm445, %v876
        %893 = vst.msk [vmem:[#allocation2 + $0xf0] sm:$0xff] %vm445, %v877
        %v894 = vld [vmem:[%s412] sm:$0xff]
        %v895 = vld [vmem:[%s412 + $0x10] sm:$0xff]
        %v896 = vld [vmem:[%s412 + $0x20] sm:$0xff]
        %v897 = vld [vmem:[%s412 + $0x30] sm:$0xff]
        %v898 = vld [vmem:[%s412 + $0x40] sm:$0xff]
        %v899 = vld [vmem:[%s412 + $0x50] sm:$0xff]
        %v900 = vld [vmem:[%s412 + $0x60] sm:$0xff]
        %v901 = vld [vmem:[%s412 + $0x70] sm:$0xff]
        %v902 = vld [vmem:[%s412 + $0x80] sm:$0xff]
        %v903 = vld [vmem:[%s412 + $0x90] sm:$0xff]
        %v904 = vld [vmem:[%s412 + $0xa0] sm:$0xff]
        %v905 = vld [vmem:[%s412 + $0xb0] sm:$0xff]
        %v906 = vld [vmem:[%s412 + $0xc0] sm:$0xff]
        %v907 = vld [vmem:[%s412 + $0xd0] sm:$0xff]
        %v908 = vld [vmem:[%s412 + $0xe0] sm:$0xff]
        %v909 = vld [vmem:[%s412 + $0xf0] sm:$0xff]
        %v910 = vpack.c.bf16 %v895, %v894
        %v911 = vpack.c.bf16 %v897, %v896
        %v912 = vpack.c.bf16 %v899, %v898
        %v913 = vpack.c.bf16 %v901, %v900
        %v914 = vpack.c.bf16 %v903, %v902
        %v915 = vpack.c.bf16 %v905, %v904
        %v916 = vpack.c.bf16 %v907, %v906
        %v917 = vpack.c.bf16 %v909, %v908
        %v918 = vld [vmem:[%s1] sm:$0xf]
        %v919 = vld [vmem:[%s1 + $0x4] sm:$0xf]
        %v920 = vld [vmem:[%s384 + $0x1] sm:$0xff]
        %v921 = vld [vmem:[%s384 + $0x11] sm:$0xff]
        %v922 = vld [vmem:[%s384 + $0x21] sm:$0xff]
        %v923 = vld [vmem:[%s384 + $0x31] sm:$0xff]
        %v924 = vld [vmem:[%s384 + $0x41] sm:$0xff]
        %v925 = vld [vmem:[%s384 + $0x51] sm:$0xff]
        %v926 = vld [vmem:[%s384 + $0x61] sm:$0xff]
        %v927 = vld [vmem:[%s384 + $0x71] sm:$0xff]
        %v928 = vld [vmem:[%s384 + $0x81] sm:$0xff]
        %v929 = vld [vmem:[%s384 + $0x91] sm:$0xff]
        %v930 = vld [vmem:[%s384 + $0xa1] sm:$0xff]
        %v931 = vld [vmem:[%s384 + $0xb1] sm:$0xff]
        %v932 = vld [vmem:[%s384 + $0xc1] sm:$0xff]
        %v933 = vld [vmem:[%s384 + $0xd1] sm:$0xff]
        %v934 = vld [vmem:[%s384 + $0xe1] sm:$0xff]
        %v935 = vld [vmem:[%s384 + $0xf1] sm:$0xff]
        %v936 = vpack.c.bf16 %v921, %v920
        %v937 = vpack.c.bf16 %v923, %v922
        %v938 = vpack.c.bf16 %v925, %v924
        %v939 = vpack.c.bf16 %v927, %v926
        %v940 = vpack.c.bf16 %v929, %v928
        %v941 = vpack.c.bf16 %v931, %v930
        %v942 = vpack.c.bf16 %v933, %v932
        %v943 = vpack.c.bf16 %v935, %v934
        %v944 = vld [vmem:[%s1 + $0x8] sm:$0xf]
        %v945 = vld [vmem:[%s1 + $0xc] sm:$0xf]
        %v948 = vunpack.c.l.b16 %v944
        %v949 = vunpack.c.l.b16 %v945
        %v950 = vpack.c.b16 %v949, %v948
        %v953 = vsel %vm445, %v936, 0
        %v956 = vsel %vm445, %v937, 0
        %v959 = vsel %vm445, %v938, 0
        %v962 = vsel %vm445, %v939, 0
        %v965 = vsel %vm445, %v940, 0
        %v968 = vsel %vm445, %v941, 0
        %v971 = vsel %vm445, %v942, 0
        %v974 = vsel %vm445, %v943, 0
        %976 = vmatpush.bf16.msra.mxu0 0
        %977 = vmatpush.bf16.msra.mxu0 0
        %978 = vmatpush.bf16.msra.mxu0 0
        %979 = vmatpush.bf16.msra.mxu0 0
        %980 = vmatpush.bf16.msra.mxu0 0
        %981 = vmatpush.bf16.msra.mxu0 0
        %982 = vmatpush.bf16.msra.mxu0 0
        %983 = vmatpush.bf16.msra.mxu0 %v950
        %984 = vmatmul.bf16.gmra.mxu0 %v953
        %v985 = vpop.f32.mrf.mxu0
        %v986 = vadd.f32 0.0, %v985
        %v987 = vpop.f32.mrf.mxu0
        %v988 = vadd.f32 0.0, %v987
        %989 = vmatmul.bf16.gmra.mxu0 %v956
        %v990 = vpop.f32.mrf.mxu0
        %v991 = vadd.f32 0.0, %v990
        %v992 = vpop.f32.mrf.mxu0
        %v993 = vadd.f32 0.0, %v992
        %994 = vmatmul.bf16.gmra.mxu0 %v959
        %v995 = vpop.f32.mrf.mxu0
        %v996 = vadd.f32 0.0, %v995
        %v997 = vpop.f32.mrf.mxu0
        %v998 = vadd.f32 0.0, %v997
        %999 = vmatmul.bf16.gmra.mxu0 %v962
        %v1000 = vpop.f32.mrf.mxu0
        %v1001 = vadd.f32 0.0, %v1000
        %v1002 = vpop.f32.mrf.mxu0
        %v1003 = vadd.f32 0.0, %v1002
        %1004 = vmatmul.bf16.gmra.mxu0 %v965
        %v1005 = vpop.f32.mrf.mxu0
        %v1006 = vadd.f32 0.0, %v1005
        %v1007 = vpop.f32.mrf.mxu0
        %v1008 = vadd.f32 0.0, %v1007
        %1009 = vmatmul.bf16.gmra.mxu0 %v968
        %v1010 = vpop.f32.mrf.mxu0
        %v1011 = vadd.f32 0.0, %v1010
        %v1012 = vpop.f32.mrf.mxu0
        %v1013 = vadd.f32 0.0, %v1012
        %1014 = vmatmul.bf16.gmra.mxu0 %v971
        %v1015 = vpop.f32.mrf.mxu0
        %v1016 = vadd.f32 0.0, %v1015
        %v1017 = vpop.f32.mrf.mxu0
        %v1018 = vadd.f32 0.0, %v1017
        %1019 = vmatmul.bf16.gmra.mxu0 %v974
        %v1020 = vpop.f32.mrf.mxu0
        %v1021 = vadd.f32 0.0, %v1020
        %v1022 = vpop.f32.mrf.mxu0
        %v1023 = vadd.f32 0.0, %v1022
        %1024 = vdwg.mxu0
        %v1027 = vunpack.c.l.b16 %v918
        %v1028 = vunpack.c.l.b16 %v919
        %v1029 = vpack.c.b16 %v1028, %v1027
        %v1032 = vsel %vm445, %v910, 0
        %v1035 = vsel %vm445, %v911, 0
        %v1038 = vsel %vm445, %v912, 0
        %v1041 = vsel %vm445, %v913, 0
        %v1044 = vsel %vm445, %v914, 0
        %v1047 = vsel %vm445, %v915, 0
        %v1050 = vsel %vm445, %v916, 0
        %v1053 = vsel %vm445, %v917, 0
        %1055 = vmatpush.bf16.msra.mxu0 0
        %1056 = vmatpush.bf16.msra.mxu0 0
        %1057 = vmatpush.bf16.msra.mxu0 0
        %1058 = vmatpush.bf16.msra.mxu0 0
        %1059 = vmatpush.bf16.msra.mxu0 0
        %1060 = vmatpush.bf16.msra.mxu0 0
        %1061 = vmatpush.bf16.msra.mxu0 0
        %1062 = vmatpush.bf16.msra.mxu0 %v1029
        %1063 = vmatmul.bf16.gmra.mxu0 %v1032
        %v1064 = vpop.f32.mrf.mxu0
        %v1065 = vadd.f32 %v986, %v1064
        %v1066 = vpop.f32.mrf.mxu0
        %v1067 = vadd.f32 %v988, %v1066
        %1068 = vmatmul.bf16.gmra.mxu0 %v1035
        %v1069 = vpop.f32.mrf.mxu0
        %v1070 = vadd.f32 %v991, %v1069
        %v1071 = vpop.f32.mrf.mxu0
        %v1072 = vadd.f32 %v993, %v1071
        %1073 = vmatmul.bf16.gmra.mxu0 %v1038
        %v1074 = vpop.f32.mrf.mxu0
        %v1075 = vadd.f32 %v996, %v1074
        %v1076 = vpop.f32.mrf.mxu0
        %v1077 = vadd.f32 %v998, %v1076
        %1078 = vmatmul.bf16.gmra.mxu0 %v1041
        %v1079 = vpop.f32.mrf.mxu0
        %v1080 = vadd.f32 %v1001, %v1079
        %v1081 = vpop.f32.mrf.mxu0
        %v1082 = vadd.f32 %v1003, %v1081
        %1083 = vmatmul.bf16.gmra.mxu0 %v1044
        %v1084 = vpop.f32.mrf.mxu0
        %v1085 = vadd.f32 %v1006, %v1084
        %v1086 = vpop.f32.mrf.mxu0
        %v1087 = vadd.f32 %v1008, %v1086
        %1088 = vmatmul.bf16.gmra.mxu0 %v1047
        %v1089 = vpop.f32.mrf.mxu0
        %v1090 = vadd.f32 %v1011, %v1089
        %v1091 = vpop.f32.mrf.mxu0
        %v1092 = vadd.f32 %v1013, %v1091
        %1093 = vmatmul.bf16.gmra.mxu0 %v1050
        %v1094 = vpop.f32.mrf.mxu0
        %v1095 = vadd.f32 %v1016, %v1094
        %v1096 = vpop.f32.mrf.mxu0
        %v1097 = vadd.f32 %v1018, %v1096
        %1098 = vmatmul.bf16.gmra.mxu0 %v1053
        %v1099 = vpop.f32.mrf.mxu0
        %v1100 = vadd.f32 %v1021, %v1099
        %v1101 = vpop.f32.mrf.mxu0
        %v1102 = vadd.f32 %v1023, %v1101
        %1103 = vdwg.mxu0
        %v1104 = vld [vmem:[%s720] sm:$0xff]
        %v1105 = vld [vmem:[%s720 + $0x10] sm:$0xff]
        %v1106 = vld [vmem:[%s720 + $0x20] sm:$0xff]
        %v1107 = vld [vmem:[%s720 + $0x30] sm:$0xff]
        %v1108 = vld [vmem:[%s720 + $0x40] sm:$0xff]
        %v1109 = vld [vmem:[%s720 + $0x50] sm:$0xff]
        %v1110 = vld [vmem:[%s720 + $0x60] sm:$0xff]
        %v1111 = vld [vmem:[%s720 + $0x70] sm:$0xff]
        %v1112 = vld [vmem:[%s720 + $0x80] sm:$0xff]
        %v1113 = vld [vmem:[%s720 + $0x90] sm:$0xff]
        %v1114 = vld [vmem:[%s720 + $0xa0] sm:$0xff]
        %v1115 = vld [vmem:[%s720 + $0xb0] sm:$0xff]
        %v1116 = vld [vmem:[%s720 + $0xc0] sm:$0xff]
        %v1117 = vld [vmem:[%s720 + $0xd0] sm:$0xff]
        %v1118 = vld [vmem:[%s720 + $0xe0] sm:$0xff]
        %v1119 = vld [vmem:[%s720 + $0xf0] sm:$0xff]
        %v1120 = vpack.c.bf16 %v1105, %v1104
        %v1121 = vpack.c.bf16 %v1107, %v1106
        %v1122 = vpack.c.bf16 %v1109, %v1108
        %v1123 = vpack.c.bf16 %v1111, %v1110
        %v1124 = vpack.c.bf16 %v1113, %v1112
        %v1125 = vpack.c.bf16 %v1115, %v1114
        %v1126 = vpack.c.bf16 %v1117, %v1116
        %v1127 = vpack.c.bf16 %v1119, %v1118
        %v1128 = vld [vmem:[%s1 + $0x10] sm:$0xf]
        %v1129 = vld [vmem:[%s1 + $0x14] sm:$0xf]
        %v1132 = vunpack.c.l.b16 %v1128
        %v1133 = vunpack.c.l.b16 %v1129
        %v1134 = vpack.c.b16 %v1133, %v1132
        %v1137 = vsel %vm445, %v1120, 0
        %v1140 = vsel %vm445, %v1121, 0
        %v1143 = vsel %vm445, %v1122, 0
        %v1146 = vsel %vm445, %v1123, 0
        %v1149 = vsel %vm445, %v1124, 0
        %v1152 = vsel %vm445, %v1125, 0
        %v1155 = vsel %vm445, %v1126, 0
        %v1158 = vsel %vm445, %v1127, 0
        %1160 = vmatpush.bf16.msra.mxu0 0
        %1161 = vmatpush.bf16.msra.mxu0 0
        %1162 = vmatpush.bf16.msra.mxu0 0
        %1163 = vmatpush.bf16.msra.mxu0 0
        %1164 = vmatpush.bf16.msra.mxu0 0
        %1165 = vmatpush.bf16.msra.mxu0 0
        %1166 = vmatpush.bf16.msra.mxu0 0
        %1167 = vmatpush.bf16.msra.mxu0 %v1134
        %1168 = vmatmul.bf16.gmra.mxu0 %v1137
        %v1169 = vpop.f32.mrf.mxu0
        %v1170 = vadd.f32 0.0, %v1169
        %v1171 = vpop.f32.mrf.mxu0
        %v1172 = vadd.f32 0.0, %v1171
        %1173 = vmatmul.bf16.gmra.mxu0 %v1140
        %v1174 = vpop.f32.mrf.mxu0
        %v1175 = vadd.f32 0.0, %v1174
        %v1176 = vpop.f32.mrf.mxu0
        %v1177 = vadd.f32 0.0, %v1176
        %1178 = vmatmul.bf16.gmra.mxu0 %v1143
        %v1179 = vpop.f32.mrf.mxu0
        %v1180 = vadd.f32 0.0, %v1179
        %v1181 = vpop.f32.mrf.mxu0
        %v1182 = vadd.f32 0.0, %v1181
        %1183 = vmatmul.bf16.gmra.mxu0 %v1146
        %v1184 = vpop.f32.mrf.mxu0
        %v1185 = vadd.f32 0.0, %v1184
        %v1186 = vpop.f32.mrf.mxu0
        %v1187 = vadd.f32 0.0, %v1186
        %1188 = vmatmul.bf16.gmra.mxu0 %v1149
        %v1189 = vpop.f32.mrf.mxu0
        %v1190 = vadd.f32 0.0, %v1189
        %v1191 = vpop.f32.mrf.mxu0
        %v1192 = vadd.f32 0.0, %v1191
        %1193 = vmatmul.bf16.gmra.mxu0 %v1152
        %v1194 = vpop.f32.mrf.mxu0
        %v1195 = vadd.f32 0.0, %v1194
        %v1196 = vpop.f32.mrf.mxu0
        %v1197 = vadd.f32 0.0, %v1196
        %1198 = vmatmul.bf16.gmra.mxu0 %v1155
        %v1199 = vpop.f32.mrf.mxu0
        %v1200 = vadd.f32 0.0, %v1199
        %v1201 = vpop.f32.mrf.mxu0
        %v1202 = vadd.f32 0.0, %v1201
        %1203 = vmatmul.bf16.gmra.mxu0 %v1158
        %v1204 = vpop.f32.mrf.mxu0
        %v1205 = vadd.f32 0.0, %v1204
        %v1206 = vpop.f32.mrf.mxu0
        %v1207 = vadd.f32 0.0, %v1206
        %1208 = vdwg.mxu0
        %v1209 = vadd.f32 %v1065, %v1170
        %v1210 = vadd.f32 %v1067, %v1172
        %v1211 = vadd.f32 %v1070, %v1175
        %v1212 = vadd.f32 %v1072, %v1177
        %v1213 = vadd.f32 %v1075, %v1180
        %v1214 = vadd.f32 %v1077, %v1182
        %v1215 = vadd.f32 %v1080, %v1185
        %v1216 = vadd.f32 %v1082, %v1187
        %v1217 = vadd.f32 %v1085, %v1190
        %v1218 = vadd.f32 %v1087, %v1192
        %v1219 = vadd.f32 %v1090, %v1195
        %v1220 = vadd.f32 %v1092, %v1197
        %v1221 = vadd.f32 %v1095, %v1200
        %v1222 = vadd.f32 %v1097, %v1202
        %v1223 = vadd.f32 %v1100, %v1205
        %v1224 = vadd.f32 %v1102, %v1207
        %v1225 = vld [vmem:[%s598 + $0x1] sm:$0xff]
        %v1226 = vld [vmem:[%s598 + $0x11] sm:$0xff]
        %v1227 = vld [vmem:[%s598 + $0x21] sm:$0xff]
        %v1228 = vld [vmem:[%s598 + $0x31] sm:$0xff]
        %v1229 = vld [vmem:[%s598 + $0x41] sm:$0xff]
        %v1230 = vld [vmem:[%s598 + $0x51] sm:$0xff]
        %v1231 = vld [vmem:[%s598 + $0x61] sm:$0xff]
        %v1232 = vld [vmem:[%s598 + $0x71] sm:$0xff]
        %v1233 = vld [vmem:[%s598 + $0x81] sm:$0xff]
        %v1234 = vld [vmem:[%s598 + $0x91] sm:$0xff]
        %v1235 = vld [vmem:[%s598 + $0xa1] sm:$0xff]
        %v1236 = vld [vmem:[%s598 + $0xb1] sm:$0xff]
        %v1237 = vld [vmem:[%s598 + $0xc1] sm:$0xff]
        %v1238 = vld [vmem:[%s598 + $0xd1] sm:$0xff]
        %v1239 = vld [vmem:[%s598 + $0xe1] sm:$0xff]
        %v1240 = vld [vmem:[%s598 + $0xf1] sm:$0xff]
        %v1241 = vpack.c.bf16 %v1226, %v1225
        %v1242 = vpack.c.bf16 %v1228, %v1227
        %v1243 = vpack.c.bf16 %v1230, %v1229
        %v1244 = vpack.c.bf16 %v1232, %v1231
        %v1245 = vpack.c.bf16 %v1234, %v1233
        %v1246 = vpack.c.bf16 %v1236, %v1235
        %v1247 = vpack.c.bf16 %v1238, %v1237
        %v1248 = vpack.c.bf16 %v1240, %v1239
        %v1249 = vld [vmem:[%s1 + $0x18] sm:$0xf]
        %v1250 = vld [vmem:[%s1 + $0x1c] sm:$0xf]
        %v1253 = vunpack.c.l.b16 %v1249
        %v1254 = vunpack.c.l.b16 %v1250
        %v1255 = vpack.c.b16 %v1254, %v1253
        %v1258 = vsel %vm445, %v1241, 0
        %v1261 = vsel %vm445, %v1242, 0
        %v1264 = vsel %vm445, %v1243, 0
        %v1267 = vsel %vm445, %v1244, 0
        %v1270 = vsel %vm445, %v1245, 0
        %v1273 = vsel %vm445, %v1246, 0
        %v1276 = vsel %vm445, %v1247, 0
        %v1279 = vsel %vm445, %v1248, 0
        %1281 = vmatpush.bf16.msra.mxu0 0
        %1282 = vmatpush.bf16.msra.mxu0 0
        %1283 = vmatpush.bf16.msra.mxu0 0
        %1284 = vmatpush.bf16.msra.mxu0 0
        %1285 = vmatpush.bf16.msra.mxu0 0
        %1286 = vmatpush.bf16.msra.mxu0 0
        %1287 = vmatpush.bf16.msra.mxu0 0
        %1288 = vmatpush.bf16.msra.mxu0 %v1255
        %1289 = vmatmul.bf16.gmra.mxu0 %v1258
        %v1290 = vpop.f32.mrf.mxu0
        %v1291 = vadd.f32 0.0, %v1290
        %v1292 = vpop.f32.mrf.mxu0
        %v1293 = vadd.f32 0.0, %v1292
        %1294 = vmatmul.bf16.gmra.mxu0 %v1261
        %v1295 = vpop.f32.mrf.mxu0
        %v1296 = vadd.f32 0.0, %v1295
        %v1297 = vpop.f32.mrf.mxu0
        %v1298 = vadd.f32 0.0, %v1297
        %1299 = vmatmul.bf16.gmra.mxu0 %v1264
        %v1300 = vpop.f32.mrf.mxu0
        %v1301 = vadd.f32 0.0, %v1300
        %v1302 = vpop.f32.mrf.mxu0
        %v1303 = vadd.f32 0.0, %v1302
        %1304 = vmatmul.bf16.gmra.mxu0 %v1267
        %v1305 = vpop.f32.mrf.mxu0
        %v1306 = vadd.f32 0.0, %v1305
        %v1307 = vpop.f32.mrf.mxu0
        %v1308 = vadd.f32 0.0, %v1307
        %1309 = vmatmul.bf16.gmra.mxu0 %v1270
        %v1310 = vpop.f32.mrf.mxu0
        %v1311 = vadd.f32 0.0, %v1310
        %v1312 = vpop.f32.mrf.mxu0
        %v1313 = vadd.f32 0.0, %v1312
        %1314 = vmatmul.bf16.gmra.mxu0 %v1273
        %v1315 = vpop.f32.mrf.mxu0
        %v1316 = vadd.f32 0.0, %v1315
        %v1317 = vpop.f32.mrf.mxu0
        %v1318 = vadd.f32 0.0, %v1317
        %1319 = vmatmul.bf16.gmra.mxu0 %v1276
        %v1320 = vpop.f32.mrf.mxu0
        %v1321 = vadd.f32 0.0, %v1320
        %v1322 = vpop.f32.mrf.mxu0
        %v1323 = vadd.f32 0.0, %v1322
        %1324 = vmatmul.bf16.gmra.mxu0 %v1279
        %v1325 = vpop.f32.mrf.mxu0
        %v1326 = vadd.f32 0.0, %v1325
        %v1327 = vpop.f32.mrf.mxu0
        %v1328 = vadd.f32 0.0, %v1327
        %1329 = vdwg.mxu0
        %v1330 = vadd.f32 %v1209, %v1291
        %v1331 = vadd.f32 %v1210, %v1293
        %v1332 = vadd.f32 %v1211, %v1296
        %v1333 = vadd.f32 %v1212, %v1298
        %v1334 = vadd.f32 %v1213, %v1301
        %v1335 = vadd.f32 %v1214, %v1303
        %v1336 = vadd.f32 %v1215, %v1306
        %v1337 = vadd.f32 %v1216, %v1308
        %v1338 = vadd.f32 %v1217, %v1311
        %v1339 = vadd.f32 %v1218, %v1313
        %v1340 = vadd.f32 %v1219, %v1316
        %v1341 = vadd.f32 %v1220, %v1318
        %v1342 = vadd.f32 %v1221, %v1321
        %v1343 = vadd.f32 %v1222, %v1323
        %v1344 = vadd.f32 %v1223, %v1326
        %v1345 = vadd.f32 %v1224, %v1328
        %v1346 = vld [vmem:[%s2] sm:$0x1]
        %v1348 = vperm.slane %v1346, 0
        %v1350 = vadd.f32 %v1330, %v1348
        %v1351 = vadd.f32 %v1331, %v1348
        %v1352 = vadd.f32 %v1332, %v1348
        %v1353 = vadd.f32 %v1333, %v1348
        %v1354 = vadd.f32 %v1334, %v1348
        %v1355 = vadd.f32 %v1335, %v1348
        %v1356 = vadd.f32 %v1336, %v1348
        %v1357 = vadd.f32 %v1337, %v1348
        %v1358 = vadd.f32 %v1338, %v1348
        %v1359 = vadd.f32 %v1339, %v1348
        %v1360 = vadd.f32 %v1340, %v1348
        %v1361 = vadd.f32 %v1341, %v1348
        %v1362 = vadd.f32 %v1342, %v1348
        %v1363 = vadd.f32 %v1343, %v1348
        %v1364 = vadd.f32 %v1344, %v1348
        %v1365 = vadd.f32 %v1345, %v1348
        %v1366 = vmax.f32 %v1350, 0.0
        %v1367 = vmax.f32 %v1351, 0.0
        %v1368 = vmax.f32 %v1352, 0.0
        %v1369 = vmax.f32 %v1353, 0.0
        %v1370 = vmax.f32 %v1354, 0.0
        %v1371 = vmax.f32 %v1355, 0.0
        %v1372 = vmax.f32 %v1356, 0.0
        %v1373 = vmax.f32 %v1357, 0.0
        %v1374 = vmax.f32 %v1358, 0.0
        %v1375 = vmax.f32 %v1359, 0.0
        %v1376 = vmax.f32 %v1360, 0.0
        %v1377 = vmax.f32 %v1361, 0.0
        %v1378 = vmax.f32 %v1362, 0.0
        %v1379 = vmax.f32 %v1363, 0.0
        %v1380 = vmax.f32 %v1364, 0.0
        %v1381 = vmax.f32 %v1365, 0.0
        %s1382 = scalar_lea.vmem [#allocation2], 272
        %1383 = vst.msk [vmem:[%s1382] sm:$0xff] %vm445, %v1366
        %1384 = vst.msk [vmem:[%s1382 + $0x10] sm:$0xff] %vm445, %v1367
        %1385 = vst.msk [vmem:[%s1382 + $0x20] sm:$0xff] %vm445, %v1368
        %1386 = vst.msk [vmem:[%s1382 + $0x30] sm:$0xff] %vm445, %v1369
        %1387 = vst.msk [vmem:[%s1382 + $0x40] sm:$0xff] %vm445, %v1370
        %1388 = vst.msk [vmem:[%s1382 + $0x50] sm:$0xff] %vm445, %v1371
        %1389 = vst.msk [vmem:[%s1382 + $0x60] sm:$0xff] %vm445, %v1372
        %1390 = vst.msk [vmem:[%s1382 + $0x70] sm:$0xff] %vm445, %v1373
        %1391 = vst.msk [vmem:[%s1382 + $0x80] sm:$0xff] %vm445, %v1374
        %1392 = vst.msk [vmem:[%s1382 + $0x90] sm:$0xff] %vm445, %v1375
        %1393 = vst.msk [vmem:[%s1382 + $0xa0] sm:$0xff] %vm445, %v1376
        %1394 = vst.msk [vmem:[%s1382 + $0xb0] sm:$0xff] %vm445, %v1377
        %1395 = vst.msk [vmem:[%s1382 + $0xc0] sm:$0xff] %vm445, %v1378
        %1396 = vst.msk [vmem:[%s1382 + $0xd0] sm:$0xff] %vm445, %v1379
        %1397 = vst.msk [vmem:[%s1382 + $0xe0] sm:$0xff] %vm445, %v1380
        %1398 = vst.msk [vmem:[%s1382 + $0xf0] sm:$0xff] %vm445, %v1381
        %s1399 = scalar_lea.vmem [#allocation2], 256
        %1400 = vst.msk [vmem:[%s1399] sm:$0xff] %vm445, 0.0
        %vm1401 = vcmask 122880
        %1402 = vst.msk [vmem:[%s1399 + $0x8] sm:$0x1] %vm1401, 0.0
        %1403 = vst.msk [vmem:[%s1399 + $0x110] sm:$0xff] %vm445, 0.0
        %1404 = vst.msk [vmem:[%s1399 + $0x118] sm:$0x1] %vm1401, 0.0
        %1405 = vst.msk [vmem:[#allocation2 + $0x8] sm:$0x1] %vm1401, 0.0
        %1406 = vst.msk [vmem:[#allocation2 + $0x18] sm:$0x1] %vm1401, 0.0
        %1407 = vst.msk [vmem:[#allocation2 + $0x28] sm:$0x1] %vm1401, 0.0
        %1408 = vst.msk [vmem:[#allocation2 + $0x38] sm:$0x1] %vm1401, 0.0
        %1409 = vst.msk [vmem:[#allocation2 + $0x48] sm:$0x1] %vm1401, 0.0
        %1410 = vst.msk [vmem:[#allocation2 + $0x58] sm:$0x1] %vm1401, 0.0
        %1411 = vst.msk [vmem:[#allocation2 + $0x68] sm:$0x1] %vm1401, 0.0
        %1412 = vst.msk [vmem:[#allocation2 + $0x78] sm:$0x1] %vm1401, 0.0
        %1413 = vst.msk [vmem:[#allocation2 + $0x88] sm:$0x1] %vm1401, 0.0
        %1414 = vst.msk [vmem:[#allocation2 + $0x98] sm:$0x1] %vm1401, 0.0
        %1415 = vst.msk [vmem:[#allocation2 + $0xa8] sm:$0x1] %vm1401, 0.0
        %1416 = vst.msk [vmem:[#allocation2 + $0xb8] sm:$0x1] %vm1401, 0.0
        %1417 = vst.msk [vmem:[#allocation2 + $0xc8] sm:$0x1] %vm1401, 0.0
        %1418 = vst.msk [vmem:[#allocation2 + $0xd8] sm:$0x1] %vm1401, 0.0
        %1419 = vst.msk [vmem:[#allocation2 + $0xe8] sm:$0x1] %vm1401, 0.0
        %1420 = vst.msk [vmem:[#allocation2 + $0xf8] sm:$0x1] %vm1401, 0.0
        %1421 = vst.msk [vmem:[#allocation2 + $0x108] sm:$0x1] %vm1401, 0.0
        %1422 = vst.msk [vmem:[#allocation2 + $0x118] sm:$0x1] %vm1401, 0.0
        %1423 = vst.msk [vmem:[#allocation2 + $0x128] sm:$0x1] %vm1401, 0.0
        %1424 = vst.msk [vmem:[#allocation2 + $0x138] sm:$0x1] %vm1401, 0.0
        %1425 = vst.msk [vmem:[#allocation2 + $0x148] sm:$0x1] %vm1401, 0.0
        %1426 = vst.msk [vmem:[#allocation2 + $0x158] sm:$0x1] %vm1401, 0.0
        %1427 = vst.msk [vmem:[#allocation2 + $0x168] sm:$0x1] %vm1401, 0.0
        %1428 = vst.msk [vmem:[#allocation2 + $0x178] sm:$0x1] %vm1401, 0.0
        %1429 = vst.msk [vmem:[#allocation2 + $0x188] sm:$0x1] %vm1401, 0.0
        %1430 = vst.msk [vmem:[#allocation2 + $0x198] sm:$0x1] %vm1401, 0.0
        %1431 = vst.msk [vmem:[#allocation2 + $0x1a8] sm:$0x1] %vm1401, 0.0
        %1432 = vst.msk [vmem:[#allocation2 + $0x1b8] sm:$0x1] %vm1401, 0.0
        %1433 = vst.msk [vmem:[#allocation2 + $0x1c8] sm:$0x1] %vm1401, 0.0
        %1434 = vst.msk [vmem:[#allocation2 + $0x1d8] sm:$0x1] %vm1401, 0.0
        %1435 = vst.msk [vmem:[#allocation2 + $0x1e8] sm:$0x1] %vm1401, 0.0
        %1436 = vst.msk [vmem:[#allocation2 + $0x1f8] sm:$0x1] %vm1401, 0.0
        %1437 = vst.msk [vmem:[#allocation2 + $0x208] sm:$0x1] %vm1401, 0.0
        %1438 = vst.msk [vmem:[#allocation2 + $0x218] sm:$0x1] %vm1401, 0.0
        %v1439 = vld [vmem:[#allocation2] sm:$0xff]
        %v1440 = vld [vmem:[#allocation2 + $0x10] sm:$0xff]
        %v1441 = vld [vmem:[#allocation2 + $0x20] sm:$0xff]
        %v1442 = vld [vmem:[#allocation2 + $0x30] sm:$0xff]
        %v1443 = vld [vmem:[#allocation2 + $0x40] sm:$0xff]
        %v1444 = vld [vmem:[#allocation2 + $0x50] sm:$0xff]
        %v1445 = vld [vmem:[#allocation2 + $0x60] sm:$0xff]
        %v1446 = vld [vmem:[#allocation2 + $0x70] sm:$0xff]
        %v1447 = vld [vmem:[#allocation2 + $0x80] sm:$0xff]
        %v1448 = vld [vmem:[#allocation2 + $0x90] sm:$0xff]
        %v1449 = vld [vmem:[#allocation2 + $0xa0] sm:$0xff]
        %v1450 = vld [vmem:[#allocation2 + $0xb0] sm:$0xff]
        %v1451 = vld [vmem:[#allocation2 + $0xc0] sm:$0xff]
        %v1452 = vld [vmem:[#allocation2 + $0xd0] sm:$0xff]
        %v1453 = vld [vmem:[#allocation2 + $0xe0] sm:$0xff]
        %v1454 = vld [vmem:[#allocation2 + $0xf0] sm:$0xff]
        %v1455 = vpack.c.bf16 %v1440, %v1439
        %v1456 = vpack.c.bf16 %v1442, %v1441
        %v1457 = vpack.c.bf16 %v1444, %v1443
        %v1458 = vpack.c.bf16 %v1446, %v1445
        %v1459 = vpack.c.bf16 %v1448, %v1447
        %v1460 = vpack.c.bf16 %v1450, %v1449
        %v1461 = vpack.c.bf16 %v1452, %v1451
        %v1462 = vpack.c.bf16 %v1454, %v1453
        %v1463 = vld [vmem:[%s3] sm:$0xf]
        %v1464 = vld [vmem:[%s3 + $0x4] sm:$0xf]
        %v1465 = vld [vmem:[%s1382] sm:$0xff]
        %v1466 = vld [vmem:[%s1382 + $0x10] sm:$0xff]
        %v1467 = vld [vmem:[%s1382 + $0x20] sm:$0xff]
        %v1468 = vld [vmem:[%s1382 + $0x30] sm:$0xff]
        %v1469 = vld [vmem:[%s1382 + $0x40] sm:$0xff]
        %v1470 = vld [vmem:[%s1382 + $0x50] sm:$0xff]
        %v1471 = vld [vmem:[%s1382 + $0x60] sm:$0xff]
        %v1472 = vld [vmem:[%s1382 + $0x70] sm:$0xff]
        %v1473 = vld [vmem:[%s1382 + $0x80] sm:$0xff]
        %v1474 = vld [vmem:[%s1382 + $0x90] sm:$0xff]
        %v1475 = vld [vmem:[%s1382 + $0xa0] sm:$0xff]
        %v1476 = vld [vmem:[%s1382 + $0xb0] sm:$0xff]
        %v1477 = vld [vmem:[%s1382 + $0xc0] sm:$0xff]
        %v1478 = vld [vmem:[%s1382 + $0xd0] sm:$0xff]
        %v1479 = vld [vmem:[%s1382 + $0xe0] sm:$0xff]
        %v1480 = vld [vmem:[%s1382 + $0xf0] sm:$0xff]
        %v1481 = vpack.c.bf16 %v1466, %v1465
        %v1482 = vpack.c.bf16 %v1468, %v1467
        %v1483 = vpack.c.bf16 %v1470, %v1469
        %v1484 = vpack.c.bf16 %v1472, %v1471
        %v1485 = vpack.c.bf16 %v1474, %v1473
        %v1486 = vpack.c.bf16 %v1476, %v1475
        %v1487 = vpack.c.bf16 %v1478, %v1477
        %v1488 = vpack.c.bf16 %v1480, %v1479
        %v1489 = vld [vmem:[%s3 + $0x8] sm:$0xf]
        %v1490 = vld [vmem:[%s3 + $0xc] sm:$0xf]
        %v1493 = vunpack.c.l.b16 %v1489
        %v1494 = vunpack.c.l.b16 %v1490
        %v1495 = vpack.c.b16 %v1494, %v1493
        %v1498 = vsel %vm445, %v1481, 0
        %v1501 = vsel %vm445, %v1482, 0
        %v1504 = vsel %vm445, %v1483, 0
        %v1507 = vsel %vm445, %v1484, 0
        %v1510 = vsel %vm445, %v1485, 0
        %v1513 = vsel %vm445, %v1486, 0
        %v1516 = vsel %vm445, %v1487, 0
        %v1519 = vsel %vm445, %v1488, 0
        %1521 = vmatpush.bf16.msra.mxu0 0
        %1522 = vmatpush.bf16.msra.mxu0 0
        %1523 = vmatpush.bf16.msra.mxu0 0
        %1524 = vmatpush.bf16.msra.mxu0 0
        %1525 = vmatpush.bf16.msra.mxu0 0
        %1526 = vmatpush.bf16.msra.mxu0 0
        %1527 = vmatpush.bf16.msra.mxu0 0
        %1528 = vmatpush.bf16.msra.mxu0 %v1495
        %1529 = vmatmul.bf16.gmra.mxu0 %v1498
        %v1530 = vpop.f32.mrf.mxu0
        %v1531 = vadd.f32 0.0, %v1530
        %v1532 = vpop.f32.mrf.mxu0
        %v1533 = vadd.f32 0.0, %v1532
        %1534 = vmatmul.bf16.gmra.mxu0 %v1501
        %v1535 = vpop.f32.mrf.mxu0
        %v1536 = vadd.f32 0.0, %v1535
        %v1537 = vpop.f32.mrf.mxu0
        %v1538 = vadd.f32 0.0, %v1537
        %1539 = vmatmul.bf16.gmra.mxu0 %v1504
        %v1540 = vpop.f32.mrf.mxu0
        %v1541 = vadd.f32 0.0, %v1540
        %v1542 = vpop.f32.mrf.mxu0
        %v1543 = vadd.f32 0.0, %v1542
        %1544 = vmatmul.bf16.gmra.mxu0 %v1507
        %v1545 = vpop.f32.mrf.mxu0
        %v1546 = vadd.f32 0.0, %v1545
        %v1547 = vpop.f32.mrf.mxu0
        %v1548 = vadd.f32 0.0, %v1547
        %1549 = vmatmul.bf16.gmra.mxu0 %v1510
        %v1550 = vpop.f32.mrf.mxu0
        %v1551 = vadd.f32 0.0, %v1550
        %v1552 = vpop.f32.mrf.mxu0
        %v1553 = vadd.f32 0.0, %v1552
        %1554 = vmatmul.bf16.gmra.mxu0 %v1513
        %v1555 = vpop.f32.mrf.mxu0
        %v1556 = vadd.f32 0.0, %v1555
        %v1557 = vpop.f32.mrf.mxu0
        %v1558 = vadd.f32 0.0, %v1557
        %1559 = vmatmul.bf16.gmra.mxu0 %v1516
        %v1560 = vpop.f32.mrf.mxu0
        %v1561 = vadd.f32 0.0, %v1560
        %v1562 = vpop.f32.mrf.mxu0
        %v1563 = vadd.f32 0.0, %v1562
        %1564 = vmatmul.bf16.gmra.mxu0 %v1519
        %v1565 = vpop.f32.mrf.mxu0
        %v1566 = vadd.f32 0.0, %v1565
        %v1567 = vpop.f32.mrf.mxu0
        %v1568 = vadd.f32 0.0, %v1567
        %1569 = vdwg.mxu0
        %v1572 = vunpack.c.l.b16 %v1463
        %v1573 = vunpack.c.l.b16 %v1464
        %v1574 = vpack.c.b16 %v1573, %v1572
        %v1577 = vsel %vm445, %v1455, 0
        %v1580 = vsel %vm445, %v1456, 0
        %v1583 = vsel %vm445, %v1457, 0
        %v1586 = vsel %vm445, %v1458, 0
        %v1589 = vsel %vm445, %v1459, 0
        %v1592 = vsel %vm445, %v1460, 0
        %v1595 = vsel %vm445, %v1461, 0
        %v1598 = vsel %vm445, %v1462, 0
        %1600 = vmatpush.bf16.msra.mxu0 0
        %1601 = vmatpush.bf16.msra.mxu0 0
        %1602 = vmatpush.bf16.msra.mxu0 0
        %1603 = vmatpush.bf16.msra.mxu0 0
        %1604 = vmatpush.bf16.msra.mxu0 0
        %1605 = vmatpush.bf16.msra.mxu0 0
        %1606 = vmatpush.bf16.msra.mxu0 0
        %1607 = vmatpush.bf16.msra.mxu0 %v1574
        %1608 = vmatmul.bf16.gmra.mxu0 %v1577
        %v1609 = vpop.f32.mrf.mxu0
        %v1610 = vadd.f32 %v1531, %v1609
        %v1611 = vpop.f32.mrf.mxu0
        %v1612 = vadd.f32 %v1533, %v1611
        %1613 = vmatmul.bf16.gmra.mxu0 %v1580
        %v1614 = vpop.f32.mrf.mxu0
        %v1615 = vadd.f32 %v1536, %v1614
        %v1616 = vpop.f32.mrf.mxu0
        %v1617 = vadd.f32 %v1538, %v1616
        %1618 = vmatmul.bf16.gmra.mxu0 %v1583
        %v1619 = vpop.f32.mrf.mxu0
        %v1620 = vadd.f32 %v1541, %v1619
        %v1621 = vpop.f32.mrf.mxu0
        %v1622 = vadd.f32 %v1543, %v1621
        %1623 = vmatmul.bf16.gmra.mxu0 %v1586
        %v1624 = vpop.f32.mrf.mxu0
        %v1625 = vadd.f32 %v1546, %v1624
        %v1626 = vpop.f32.mrf.mxu0
        %v1627 = vadd.f32 %v1548, %v1626
        %1628 = vmatmul.bf16.gmra.mxu0 %v1589
        %v1629 = vpop.f32.mrf.mxu0
        %v1630 = vadd.f32 %v1551, %v1629
        %v1631 = vpop.f32.mrf.mxu0
        %v1632 = vadd.f32 %v1553, %v1631
        %1633 = vmatmul.bf16.gmra.mxu0 %v1592
        %v1634 = vpop.f32.mrf.mxu0
        %v1635 = vadd.f32 %v1556, %v1634
        %v1636 = vpop.f32.mrf.mxu0
        %v1637 = vadd.f32 %v1558, %v1636
        %1638 = vmatmul.bf16.gmra.mxu0 %v1595
        %v1639 = vpop.f32.mrf.mxu0
        %v1640 = vadd.f32 %v1561, %v1639
        %v1641 = vpop.f32.mrf.mxu0
        %v1642 = vadd.f32 %v1563, %v1641
        %1643 = vmatmul.bf16.gmra.mxu0 %v1598
        %v1644 = vpop.f32.mrf.mxu0
        %v1645 = vadd.f32 %v1566, %v1644
        %v1646 = vpop.f32.mrf.mxu0
        %v1647 = vadd.f32 %v1568, %v1646
        %1648 = vdwg.mxu0
        %s1649 = scalar_lea.vmem [#allocation2], 16
        %v1650 = vld [vmem:[%s1649] sm:$0xff]
        %v1651 = vld [vmem:[%s1649 + $0x10] sm:$0xff]
        %v1652 = vld [vmem:[%s1649 + $0x20] sm:$0xff]
        %v1653 = vld [vmem:[%s1649 + $0x30] sm:$0xff]
        %v1654 = vld [vmem:[%s1649 + $0x40] sm:$0xff]
        %v1655 = vld [vmem:[%s1649 + $0x50] sm:$0xff]
        %v1656 = vld [vmem:[%s1649 + $0x60] sm:$0xff]
        %v1657 = vld [vmem:[%s1649 + $0x70] sm:$0xff]
        %v1658 = vld [vmem:[%s1649 + $0x80] sm:$0xff]
        %v1659 = vld [vmem:[%s1649 + $0x90] sm:$0xff]
        %v1660 = vld [vmem:[%s1649 + $0xa0] sm:$0xff]
        %v1661 = vld [vmem:[%s1649 + $0xb0] sm:$0xff]
        %v1662 = vld [vmem:[%s1649 + $0xc0] sm:$0xff]
        %v1663 = vld [vmem:[%s1649 + $0xd0] sm:$0xff]
        %v1664 = vld [vmem:[%s1649 + $0xe0] sm:$0xff]
        %v1665 = vld [vmem:[%s1649 + $0xf0] sm:$0xff]
        %v1666 = vpack.c.bf16 %v1651, %v1650
        %v1667 = vpack.c.bf16 %v1653, %v1652
        %v1668 = vpack.c.bf16 %v1655, %v1654
        %v1669 = vpack.c.bf16 %v1657, %v1656
        %v1670 = vpack.c.bf16 %v1659, %v1658
        %v1671 = vpack.c.bf16 %v1661, %v1660
        %v1672 = vpack.c.bf16 %v1663, %v1662
        %v1673 = vpack.c.bf16 %v1665, %v1664
        %v1674 = vld [vmem:[%s3 + $0x10] sm:$0xf]
        %v1675 = vld [vmem:[%s3 + $0x14] sm:$0xf]
        %v1678 = vunpack.c.l.b16 %v1674
        %v1679 = vunpack.c.l.b16 %v1675
        %v1680 = vpack.c.b16 %v1679, %v1678
        %v1683 = vsel %vm445, %v1666, 0
        %v1686 = vsel %vm445, %v1667, 0
        %v1689 = vsel %vm445, %v1668, 0
        %v1692 = vsel %vm445, %v1669, 0
        %v1695 = vsel %vm445, %v1670, 0
        %v1698 = vsel %vm445, %v1671, 0
        %v1701 = vsel %vm445, %v1672, 0
        %v1704 = vsel %vm445, %v1673, 0
        %1706 = vmatpush.bf16.msra.mxu0 0
        %1707 = vmatpush.bf16.msra.mxu0 0
        %1708 = vmatpush.bf16.msra.mxu0 0
        %1709 = vmatpush.bf16.msra.mxu0 0
        %1710 = vmatpush.bf16.msra.mxu0 0
        %1711 = vmatpush.bf16.msra.mxu0 0
        %1712 = vmatpush.bf16.msra.mxu0 0
        %1713 = vmatpush.bf16.msra.mxu0 %v1680
        %1714 = vmatmul.bf16.gmra.mxu0 %v1683
        %v1715 = vpop.f32.mrf.mxu0
        %v1716 = vadd.f32 0.0, %v1715
        %v1717 = vpop.f32.mrf.mxu0
        %v1718 = vadd.f32 0.0, %v1717
        %1719 = vmatmul.bf16.gmra.mxu0 %v1686
        %v1720 = vpop.f32.mrf.mxu0
        %v1721 = vadd.f32 0.0, %v1720
        %v1722 = vpop.f32.mrf.mxu0
        %v1723 = vadd.f32 0.0, %v1722
        %1724 = vmatmul.bf16.gmra.mxu0 %v1689
        %v1725 = vpop.f32.mrf.mxu0
        %v1726 = vadd.f32 0.0, %v1725
        %v1727 = vpop.f32.mrf.mxu0
        %v1728 = vadd.f32 0.0, %v1727
        %1729 = vmatmul.bf16.gmra.mxu0 %v1692
        %v1730 = vpop.f32.mrf.mxu0
        %v1731 = vadd.f32 0.0, %v1730
        %v1732 = vpop.f32.mrf.mxu0
        %v1733 = vadd.f32 0.0, %v1732
        %1734 = vmatmul.bf16.gmra.mxu0 %v1695
        %v1735 = vpop.f32.mrf.mxu0
        %v1736 = vadd.f32 0.0, %v1735
        %v1737 = vpop.f32.mrf.mxu0
        %v1738 = vadd.f32 0.0, %v1737
        %1739 = vmatmul.bf16.gmra.mxu0 %v1698
        %v1740 = vpop.f32.mrf.mxu0
        %v1741 = vadd.f32 0.0, %v1740
        %v1742 = vpop.f32.mrf.mxu0
        %v1743 = vadd.f32 0.0, %v1742
        %1744 = vmatmul.bf16.gmra.mxu0 %v1701
        %v1745 = vpop.f32.mrf.mxu0
        %v1746 = vadd.f32 0.0, %v1745
        %v1747 = vpop.f32.mrf.mxu0
        %v1748 = vadd.f32 0.0, %v1747
        %1749 = vmatmul.bf16.gmra.mxu0 %v1704
        %v1750 = vpop.f32.mrf.mxu0
        %v1751 = vadd.f32 0.0, %v1750
        %v1752 = vpop.f32.mrf.mxu0
        %v1753 = vadd.f32 0.0, %v1752
        %1754 = vdwg.mxu0
        %v1755 = vadd.f32 %v1610, %v1716
        %v1756 = vadd.f32 %v1612, %v1718
        %v1757 = vadd.f32 %v1615, %v1721
        %v1758 = vadd.f32 %v1617, %v1723
        %v1759 = vadd.f32 %v1620, %v1726
        %v1760 = vadd.f32 %v1622, %v1728
        %v1761 = vadd.f32 %v1625, %v1731
        %v1762 = vadd.f32 %v1627, %v1733
        %v1763 = vadd.f32 %v1630, %v1736
        %v1764 = vadd.f32 %v1632, %v1738
        %v1765 = vadd.f32 %v1635, %v1741
        %v1766 = vadd.f32 %v1637, %v1743
        %v1767 = vadd.f32 %v1640, %v1746
        %v1768 = vadd.f32 %v1642, %v1748
        %v1769 = vadd.f32 %v1645, %v1751
        %v1770 = vadd.f32 %v1647, %v1753
        %s1771 = scalar_lea.vmem [#allocation2], 288
        %v1772 = vld [vmem:[%s1771] sm:$0xff]
        %v1773 = vld [vmem:[%s1771 + $0x10] sm:$0xff]
        %v1774 = vld [vmem:[%s1771 + $0x20] sm:$0xff]
        %v1775 = vld [vmem:[%s1771 + $0x30] sm:$0xff]
        %v1776 = vld [vmem:[%s1771 + $0x40] sm:$0xff]
        %v1777 = vld [vmem:[%s1771 + $0x50] sm:$0xff]
        %v1778 = vld [vmem:[%s1771 + $0x60] sm:$0xff]
        %v1779 = vld [vmem:[%s1771 + $0x70] sm:$0xff]
        %v1780 = vld [vmem:[%s1771 + $0x80] sm:$0xff]
        %v1781 = vld [vmem:[%s1771 + $0x90] sm:$0xff]
        %v1782 = vld [vmem:[%s1771 + $0xa0] sm:$0xff]
        %v1783 = vld [vmem:[%s1771 + $0xb0] sm:$0xff]
        %v1784 = vld [vmem:[%s1771 + $0xc0] sm:$0xff]
        %v1785 = vld [vmem:[%s1771 + $0xd0] sm:$0xff]
        %v1786 = vld [vmem:[%s1771 + $0xe0] sm:$0xff]
        %v1787 = vld [vmem:[%s1771 + $0xf0] sm:$0xff]
        %v1788 = vpack.c.bf16 %v1773, %v1772
        %v1789 = vpack.c.bf16 %v1775, %v1774
        %v1790 = vpack.c.bf16 %v1777, %v1776
        %v1791 = vpack.c.bf16 %v1779, %v1778
        %v1792 = vpack.c.bf16 %v1781, %v1780
        %v1793 = vpack.c.bf16 %v1783, %v1782
        %v1794 = vpack.c.bf16 %v1785, %v1784
        %v1795 = vpack.c.bf16 %v1787, %v1786
        %v1796 = vld [vmem:[%s3 + $0x18] sm:$0xf]
        %v1797 = vld [vmem:[%s3 + $0x1c] sm:$0xf]
        %v1800 = vunpack.c.l.b16 %v1796
        %v1801 = vunpack.c.l.b16 %v1797
        %v1802 = vpack.c.b16 %v1801, %v1800
        %v1805 = vsel %vm445, %v1788, 0
        %v1808 = vsel %vm445, %v1789, 0
        %v1811 = vsel %vm445, %v1790, 0
        %v1814 = vsel %vm445, %v1791, 0
        %v1817 = vsel %vm445, %v1792, 0
        %v1820 = vsel %vm445, %v1793, 0
        %v1823 = vsel %vm445, %v1794, 0
        %v1826 = vsel %vm445, %v1795, 0
        %1828 = vmatpush.bf16.msra.mxu0 0
        %1829 = vmatpush.bf16.msra.mxu0 0
        %1830 = vmatpush.bf16.msra.mxu0 0
        %1831 = vmatpush.bf16.msra.mxu0 0
        %1832 = vmatpush.bf16.msra.mxu0 0
        %1833 = vmatpush.bf16.msra.mxu0 0
        %1834 = vmatpush.bf16.msra.mxu0 0
        %1835 = vmatpush.bf16.msra.mxu0 %v1802
        %1836 = vmatmul.bf16.gmra.mxu0 %v1805
        %v1837 = vpop.f32.mrf.mxu0
        %v1838 = vadd.f32 0.0, %v1837
        %v1839 = vpop.f32.mrf.mxu0
        %v1840 = vadd.f32 0.0, %v1839
        %1841 = vmatmul.bf16.gmra.mxu0 %v1808
        %v1842 = vpop.f32.mrf.mxu0
        %v1843 = vadd.f32 0.0, %v1842
        %v1844 = vpop.f32.mrf.mxu0
        %v1845 = vadd.f32 0.0, %v1844
        %1846 = vmatmul.bf16.gmra.mxu0 %v1811
        %v1847 = vpop.f32.mrf.mxu0
        %v1848 = vadd.f32 0.0, %v1847
        %v1849 = vpop.f32.mrf.mxu0
        %v1850 = vadd.f32 0.0, %v1849
        %1851 = vmatmul.bf16.gmra.mxu0 %v1814
        %v1852 = vpop.f32.mrf.mxu0
        %v1853 = vadd.f32 0.0, %v1852
        %v1854 = vpop.f32.mrf.mxu0
        %v1855 = vadd.f32 0.0, %v1854
        %1856 = vmatmul.bf16.gmra.mxu0 %v1817
        %v1857 = vpop.f32.mrf.mxu0
        %v1858 = vadd.f32 0.0, %v1857
        %v1859 = vpop.f32.mrf.mxu0
        %v1860 = vadd.f32 0.0, %v1859
        %1861 = vmatmul.bf16.gmra.mxu0 %v1820
        %v1862 = vpop.f32.mrf.mxu0
        %v1863 = vadd.f32 0.0, %v1862
        %v1864 = vpop.f32.mrf.mxu0
        %v1865 = vadd.f32 0.0, %v1864
        %1866 = vmatmul.bf16.gmra.mxu0 %v1823
        %v1867 = vpop.f32.mrf.mxu0
        %v1868 = vadd.f32 0.0, %v1867
        %v1869 = vpop.f32.mrf.mxu0
        %v1870 = vadd.f32 0.0, %v1869
        %1871 = vmatmul.bf16.gmra.mxu0 %v1826
        %v1872 = vpop.f32.mrf.mxu0
        %v1873 = vadd.f32 0.0, %v1872
        %v1874 = vpop.f32.mrf.mxu0
        %v1875 = vadd.f32 0.0, %v1874
        %1876 = vdwg.mxu0
        %v1877 = vadd.f32 %v1755, %v1838
        %v1878 = vadd.f32 %v1756, %v1840
        %v1879 = vadd.f32 %v1757, %v1843
        %v1880 = vadd.f32 %v1758, %v1845
        %v1881 = vadd.f32 %v1759, %v1848
        %v1882 = vadd.f32 %v1760, %v1850
        %v1883 = vadd.f32 %v1761, %v1853
        %v1884 = vadd.f32 %v1762, %v1855
        %v1885 = vadd.f32 %v1763, %v1858
        %v1886 = vadd.f32 %v1764, %v1860
        %v1887 = vadd.f32 %v1765, %v1863
        %v1888 = vadd.f32 %v1766, %v1865
        %v1889 = vadd.f32 %v1767, %v1868
        %v1890 = vadd.f32 %v1768, %v1870
        %v1891 = vadd.f32 %v1769, %v1873
        %v1892 = vadd.f32 %v1770, %v1875
        %v1893 = vld [vmem:[%s4] sm:$0x1]
        %v1895 = vperm.slane %v1893, 0
        %v1897 = vadd.f32 %v1877, %v1895
        %v1898 = vadd.f32 %v1878, %v1895
        %v1899 = vadd.f32 %v1879, %v1895
        %v1900 = vadd.f32 %v1880, %v1895
        %v1901 = vadd.f32 %v1881, %v1895
        %v1902 = vadd.f32 %v1882, %v1895
        %v1903 = vadd.f32 %v1883, %v1895
        %v1904 = vadd.f32 %v1884, %v1895
        %v1905 = vadd.f32 %v1885, %v1895
        %v1906 = vadd.f32 %v1886, %v1895
        %v1907 = vadd.f32 %v1887, %v1895
        %v1908 = vadd.f32 %v1888, %v1895
        %v1909 = vadd.f32 %v1889, %v1895
        %v1910 = vadd.f32 %v1890, %v1895
        %v1911 = vadd.f32 %v1891, %v1895
        %v1912 = vadd.f32 %v1892, %v1895
        %v1913 = vmax.f32 %v1897, 0.0
        %v1914 = vmax.f32 %v1898, 0.0
        %v1915 = vmax.f32 %v1899, 0.0
        %v1916 = vmax.f32 %v1900, 0.0
        %v1917 = vmax.f32 %v1901, 0.0
        %v1918 = vmax.f32 %v1902, 0.0
        %v1919 = vmax.f32 %v1903, 0.0
        %v1920 = vmax.f32 %v1904, 0.0
        %v1921 = vmax.f32 %v1905, 0.0
        %v1922 = vmax.f32 %v1906, 0.0
        %v1923 = vmax.f32 %v1907, 0.0
        %v1924 = vmax.f32 %v1908, 0.0
        %v1925 = vmax.f32 %v1909, 0.0
        %v1926 = vmax.f32 %v1910, 0.0
        %v1927 = vmax.f32 %v1911, 0.0
        %v1928 = vmax.f32 %v1912, 0.0
        %vm1929 = vcmask 64512
        %1930 = vst.msk [vmem:[#allocation3] sm:$0xff] %vm1929, %v1913
        %1931 = vst.msk [vmem:[#allocation3 + $0x10] sm:$0xff] %vm1929, %v1914
        %1932 = vst.msk [vmem:[#allocation3 + $0x20] sm:$0xff] %vm1929, %v1915
        %1933 = vst.msk [vmem:[#allocation3 + $0x30] sm:$0xff] %vm1929, %v1916
        %1934 = vst.msk [vmem:[#allocation3 + $0x40] sm:$0xff] %vm1929, %v1917
        %1935 = vst.msk [vmem:[#allocation3 + $0x50] sm:$0xff] %vm1929, %v1918
        %1936 = vst.msk [vmem:[#allocation3 + $0x60] sm:$0xff] %vm1929, %v1919
        %1937 = vst.msk [vmem:[#allocation3 + $0x70] sm:$0xff] %vm1929, %v1920
        %1938 = vst.msk [vmem:[#allocation3 + $0x80] sm:$0xff] %vm1929, %v1921
        %1939 = vst.msk [vmem:[#allocation3 + $0x90] sm:$0xff] %vm1929, %v1922
        %1940 = vst.msk [vmem:[#allocation3 + $0xa0] sm:$0xff] %vm1929, %v1923
        %1941 = vst.msk [vmem:[#allocation3 + $0xb0] sm:$0xff] %vm1929, %v1924
        %1942 = vst.msk [vmem:[#allocation3 + $0xc0] sm:$0xff] %vm1929, %v1925
        %1943 = vst.msk [vmem:[#allocation3 + $0xd0] sm:$0xff] %vm1929, %v1926
        %1944 = vst.msk [vmem:[#allocation3 + $0xe0] sm:$0xff] %vm1929, %v1927
        %1945 = vst.msk [vmem:[#allocation3 + $0xf0] sm:$0xff] %vm1929, %v1928
        %v1946 = vld [vmem:[%s1382] sm:$0xff]
        %v1947 = vld [vmem:[%s1382 + $0x10] sm:$0xff]
        %v1948 = vld [vmem:[%s1382 + $0x20] sm:$0xff]
        %v1949 = vld [vmem:[%s1382 + $0x30] sm:$0xff]
        %v1950 = vld [vmem:[%s1382 + $0x40] sm:$0xff]
        %v1951 = vld [vmem:[%s1382 + $0x50] sm:$0xff]
        %v1952 = vld [vmem:[%s1382 + $0x60] sm:$0xff]
        %v1953 = vld [vmem:[%s1382 + $0x70] sm:$0xff]
        %v1954 = vld [vmem:[%s1382 + $0x80] sm:$0xff]
        %v1955 = vld [vmem:[%s1382 + $0x90] sm:$0xff]
        %v1956 = vld [vmem:[%s1382 + $0xa0] sm:$0xff]
        %v1957 = vld [vmem:[%s1382 + $0xb0] sm:$0xff]
        %v1958 = vld [vmem:[%s1382 + $0xc0] sm:$0xff]
        %v1959 = vld [vmem:[%s1382 + $0xd0] sm:$0xff]
        %v1960 = vld [vmem:[%s1382 + $0xe0] sm:$0xff]
        %v1961 = vld [vmem:[%s1382 + $0xf0] sm:$0xff]
        %v1962 = vpack.c.bf16 %v1947, %v1946
        %v1963 = vpack.c.bf16 %v1949, %v1948
        %v1964 = vpack.c.bf16 %v1951, %v1950
        %v1965 = vpack.c.bf16 %v1953, %v1952
        %v1966 = vpack.c.bf16 %v1955, %v1954
        %v1967 = vpack.c.bf16 %v1957, %v1956
        %v1968 = vpack.c.bf16 %v1959, %v1958
        %v1969 = vpack.c.bf16 %v1961, %v1960
        %v1970 = vld [vmem:[%s3] sm:$0xf]
        %v1971 = vld [vmem:[%s3 + $0x4] sm:$0xf]
        %v1972 = vld [vmem:[#allocation2 + $0x1] sm:$0xff]
        %v1973 = vld [vmem:[#allocation2 + $0x11] sm:$0xff]
        %v1974 = vld [vmem:[#allocation2 + $0x21] sm:$0xff]
        %v1975 = vld [vmem:[#allocation2 + $0x31] sm:$0xff]
        %v1976 = vld [vmem:[#allocation2 + $0x41] sm:$0xff]
        %v1977 = vld [vmem:[#allocation2 + $0x51] sm:$0xff]
        %v1978 = vld [vmem:[#allocation2 + $0x61] sm:$0xff]
        %v1979 = vld [vmem:[#allocation2 + $0x71] sm:$0xff]
        %v1980 = vld [vmem:[#allocation2 + $0x81] sm:$0xff]
        %v1981 = vld [vmem:[#allocation2 + $0x91] sm:$0xff]
        %v1982 = vld [vmem:[#allocation2 + $0xa1] sm:$0xff]
        %v1983 = vld [vmem:[#allocation2 + $0xb1] sm:$0xff]
        %v1984 = vld [vmem:[#allocation2 + $0xc1] sm:$0xff]
        %v1985 = vld [vmem:[#allocation2 + $0xd1] sm:$0xff]
        %v1986 = vld [vmem:[#allocation2 + $0xe1] sm:$0xff]
        %v1987 = vld [vmem:[#allocation2 + $0xf1] sm:$0xff]
        %v1988 = vpack.c.bf16 %v1973, %v1972
        %v1989 = vpack.c.bf16 %v1975, %v1974
        %v1990 = vpack.c.bf16 %v1977, %v1976
        %v1991 = vpack.c.bf16 %v1979, %v1978
        %v1992 = vpack.c.bf16 %v1981, %v1980
        %v1993 = vpack.c.bf16 %v1983, %v1982
        %v1994 = vpack.c.bf16 %v1985, %v1984
        %v1995 = vpack.c.bf16 %v1987, %v1986
        %v1996 = vld [vmem:[%s3 + $0x8] sm:$0xf]
        %v1997 = vld [vmem:[%s3 + $0xc] sm:$0xf]
        %v2000 = vunpack.c.l.b16 %v1996
        %v2001 = vunpack.c.l.b16 %v1997
        %v2002 = vpack.c.b16 %v2001, %v2000
        %v2005 = vsel %vm445, %v1988, 0
        %v2008 = vsel %vm445, %v1989, 0
        %v2011 = vsel %vm445, %v1990, 0
        %v2014 = vsel %vm445, %v1991, 0
        %v2017 = vsel %vm445, %v1992, 0
        %v2020 = vsel %vm445, %v1993, 0
        %v2023 = vsel %vm445, %v1994, 0
        %v2026 = vsel %vm445, %v1995, 0
        %2028 = vmatpush.bf16.msra.mxu0 0
        %2029 = vmatpush.bf16.msra.mxu0 0
        %2030 = vmatpush.bf16.msra.mxu0 0
        %2031 = vmatpush.bf16.msra.mxu0 0
        %2032 = vmatpush.bf16.msra.mxu0 0
        %2033 = vmatpush.bf16.msra.mxu0 0
        %2034 = vmatpush.bf16.msra.mxu0 0
        %2035 = vmatpush.bf16.msra.mxu0 %v2002
        %2036 = vmatmul.bf16.gmra.mxu0 %v2005
        %v2037 = vpop.f32.mrf.mxu0
        %v2038 = vadd.f32 0.0, %v2037
        %v2039 = vpop.f32.mrf.mxu0
        %v2040 = vadd.f32 0.0, %v2039
        %2041 = vmatmul.bf16.gmra.mxu0 %v2008
        %v2042 = vpop.f32.mrf.mxu0
        %v2043 = vadd.f32 0.0, %v2042
        %v2044 = vpop.f32.mrf.mxu0
        %v2045 = vadd.f32 0.0, %v2044
        %2046 = vmatmul.bf16.gmra.mxu0 %v2011
        %v2047 = vpop.f32.mrf.mxu0
        %v2048 = vadd.f32 0.0, %v2047
        %v2049 = vpop.f32.mrf.mxu0
        %v2050 = vadd.f32 0.0, %v2049
        %2051 = vmatmul.bf16.gmra.mxu0 %v2014
        %v2052 = vpop.f32.mrf.mxu0
        %v2053 = vadd.f32 0.0, %v2052
        %v2054 = vpop.f32.mrf.mxu0
        %v2055 = vadd.f32 0.0, %v2054
        %2056 = vmatmul.bf16.gmra.mxu0 %v2017
        %v2057 = vpop.f32.mrf.mxu0
        %v2058 = vadd.f32 0.0, %v2057
        %v2059 = vpop.f32.mrf.mxu0
        %v2060 = vadd.f32 0.0, %v2059
        %2061 = vmatmul.bf16.gmra.mxu0 %v2020
        %v2062 = vpop.f32.mrf.mxu0
        %v2063 = vadd.f32 0.0, %v2062
        %v2064 = vpop.f32.mrf.mxu0
        %v2065 = vadd.f32 0.0, %v2064
        %2066 = vmatmul.bf16.gmra.mxu0 %v2023
        %v2067 = vpop.f32.mrf.mxu0
        %v2068 = vadd.f32 0.0, %v2067
        %v2069 = vpop.f32.mrf.mxu0
        %v2070 = vadd.f32 0.0, %v2069
        %2071 = vmatmul.bf16.gmra.mxu0 %v2026
        %v2072 = vpop.f32.mrf.mxu0
        %v2073 = vadd.f32 0.0, %v2072
        %v2074 = vpop.f32.mrf.mxu0
        %v2075 = vadd.f32 0.0, %v2074
        %2076 = vdwg.mxu0
        %v2079 = vunpack.c.l.b16 %v1970
        %v2080 = vunpack.c.l.b16 %v1971
        %v2081 = vpack.c.b16 %v2080, %v2079
        %v2084 = vsel %vm445, %v1962, 0
        %v2087 = vsel %vm445, %v1963, 0
        %v2090 = vsel %vm445, %v1964, 0
        %v2093 = vsel %vm445, %v1965, 0
        %v2096 = vsel %vm445, %v1966, 0
        %v2099 = vsel %vm445, %v1967, 0
        %v2102 = vsel %vm445, %v1968, 0
        %v2105 = vsel %vm445, %v1969, 0
        %2107 = vmatpush.bf16.msra.mxu0 0
        %2108 = vmatpush.bf16.msra.mxu0 0
        %2109 = vmatpush.bf16.msra.mxu0 0
        %2110 = vmatpush.bf16.msra.mxu0 0
        %2111 = vmatpush.bf16.msra.mxu0 0
        %2112 = vmatpush.bf16.msra.mxu0 0
        %2113 = vmatpush.bf16.msra.mxu0 0
        %2114 = vmatpush.bf16.msra.mxu0 %v2081
        %2115 = vmatmul.bf16.gmra.mxu0 %v2084
        %v2116 = vpop.f32.mrf.mxu0
        %v2117 = vadd.f32 %v2038, %v2116
        %v2118 = vpop.f32.mrf.mxu0
        %v2119 = vadd.f32 %v2040, %v2118
        %2120 = vmatmul.bf16.gmra.mxu0 %v2087
        %v2121 = vpop.f32.mrf.mxu0
        %v2122 = vadd.f32 %v2043, %v2121
        %v2123 = vpop.f32.mrf.mxu0
        %v2124 = vadd.f32 %v2045, %v2123
        %2125 = vmatmul.bf16.gmra.mxu0 %v2090
        %v2126 = vpop.f32.mrf.mxu0
        %v2127 = vadd.f32 %v2048, %v2126
        %v2128 = vpop.f32.mrf.mxu0
        %v2129 = vadd.f32 %v2050, %v2128
        %2130 = vmatmul.bf16.gmra.mxu0 %v2093
        %v2131 = vpop.f32.mrf.mxu0
        %v2132 = vadd.f32 %v2053, %v2131
        %v2133 = vpop.f32.mrf.mxu0
        %v2134 = vadd.f32 %v2055, %v2133
        %2135 = vmatmul.bf16.gmra.mxu0 %v2096
        %v2136 = vpop.f32.mrf.mxu0
        %v2137 = vadd.f32 %v2058, %v2136
        %v2138 = vpop.f32.mrf.mxu0
        %v2139 = vadd.f32 %v2060, %v2138
        %2140 = vmatmul.bf16.gmra.mxu0 %v2099
        %v2141 = vpop.f32.mrf.mxu0
        %v2142 = vadd.f32 %v2063, %v2141
        %v2143 = vpop.f32.mrf.mxu0
        %v2144 = vadd.f32 %v2065, %v2143
        %2145 = vmatmul.bf16.gmra.mxu0 %v2102
        %v2146 = vpop.f32.mrf.mxu0
        %v2147 = vadd.f32 %v2068, %v2146
        %v2148 = vpop.f32.mrf.mxu0
        %v2149 = vadd.f32 %v2070, %v2148
        %2150 = vmatmul.bf16.gmra.mxu0 %v2105
        %v2151 = vpop.f32.mrf.mxu0
        %v2152 = vadd.f32 %v2073, %v2151
        %v2153 = vpop.f32.mrf.mxu0
        %v2154 = vadd.f32 %v2075, %v2153
        %2155 = vdwg.mxu0
        %v2156 = vld [vmem:[%s1771] sm:$0xff]
        %v2157 = vld [vmem:[%s1771 + $0x10] sm:$0xff]
        %v2158 = vld [vmem:[%s1771 + $0x20] sm:$0xff]
        %v2159 = vld [vmem:[%s1771 + $0x30] sm:$0xff]
        %v2160 = vld [vmem:[%s1771 + $0x40] sm:$0xff]
        %v2161 = vld [vmem:[%s1771 + $0x50] sm:$0xff]
        %v2162 = vld [vmem:[%s1771 + $0x60] sm:$0xff]
        %v2163 = vld [vmem:[%s1771 + $0x70] sm:$0xff]
        %v2164 = vld [vmem:[%s1771 + $0x80] sm:$0xff]
        %v2165 = vld [vmem:[%s1771 + $0x90] sm:$0xff]
        %v2166 = vld [vmem:[%s1771 + $0xa0] sm:$0xff]
        %v2167 = vld [vmem:[%s1771 + $0xb0] sm:$0xff]
        %v2168 = vld [vmem:[%s1771 + $0xc0] sm:$0xff]
        %v2169 = vld [vmem:[%s1771 + $0xd0] sm:$0xff]
        %v2170 = vld [vmem:[%s1771 + $0xe0] sm:$0xff]
        %v2171 = vld [vmem:[%s1771 + $0xf0] sm:$0xff]
        %v2172 = vpack.c.bf16 %v2157, %v2156
        %v2173 = vpack.c.bf16 %v2159, %v2158
        %v2174 = vpack.c.bf16 %v2161, %v2160
        %v2175 = vpack.c.bf16 %v2163, %v2162
        %v2176 = vpack.c.bf16 %v2165, %v2164
        %v2177 = vpack.c.bf16 %v2167, %v2166
        %v2178 = vpack.c.bf16 %v2169, %v2168
        %v2179 = vpack.c.bf16 %v2171, %v2170
        %v2180 = vld [vmem:[%s3 + $0x10] sm:$0xf]
        %v2181 = vld [vmem:[%s3 + $0x14] sm:$0xf]
        %v2184 = vunpack.c.l.b16 %v2180
        %v2185 = vunpack.c.l.b16 %v2181
        %v2186 = vpack.c.b16 %v2185, %v2184
        %v2189 = vsel %vm445, %v2172, 0
        %v2192 = vsel %vm445, %v2173, 0
        %v2195 = vsel %vm445, %v2174, 0
        %v2198 = vsel %vm445, %v2175, 0
        %v2201 = vsel %vm445, %v2176, 0
        %v2204 = vsel %vm445, %v2177, 0
        %v2207 = vsel %vm445, %v2178, 0
        %v2210 = vsel %vm445, %v2179, 0
        %2212 = vmatpush.bf16.msra.mxu0 0
        %2213 = vmatpush.bf16.msra.mxu0 0
        %2214 = vmatpush.bf16.msra.mxu0 0
        %2215 = vmatpush.bf16.msra.mxu0 0
        %2216 = vmatpush.bf16.msra.mxu0 0
        %2217 = vmatpush.bf16.msra.mxu0 0
        %2218 = vmatpush.bf16.msra.mxu0 0
        %2219 = vmatpush.bf16.msra.mxu0 %v2186
        %2220 = vmatmul.bf16.gmra.mxu0 %v2189
        %v2221 = vpop.f32.mrf.mxu0
        %v2222 = vadd.f32 0.0, %v2221
        %v2223 = vpop.f32.mrf.mxu0
        %v2224 = vadd.f32 0.0, %v2223
        %2225 = vmatmul.bf16.gmra.mxu0 %v2192
        %v2226 = vpop.f32.mrf.mxu0
        %v2227 = vadd.f32 0.0, %v2226
        %v2228 = vpop.f32.mrf.mxu0
        %v2229 = vadd.f32 0.0, %v2228
        %2230 = vmatmul.bf16.gmra.mxu0 %v2195
        %v2231 = vpop.f32.mrf.mxu0
        %v2232 = vadd.f32 0.0, %v2231
        %v2233 = vpop.f32.mrf.mxu0
        %v2234 = vadd.f32 0.0, %v2233
        %2235 = vmatmul.bf16.gmra.mxu0 %v2198
        %v2236 = vpop.f32.mrf.mxu0
        %v2237 = vadd.f32 0.0, %v2236
        %v2238 = vpop.f32.mrf.mxu0
        %v2239 = vadd.f32 0.0, %v2238
        %2240 = vmatmul.bf16.gmra.mxu0 %v2201
        %v2241 = vpop.f32.mrf.mxu0
        %v2242 = vadd.f32 0.0, %v2241
        %v2243 = vpop.f32.mrf.mxu0
        %v2244 = vadd.f32 0.0, %v2243
        %2245 = vmatmul.bf16.gmra.mxu0 %v2204
        %v2246 = vpop.f32.mrf.mxu0
        %v2247 = vadd.f32 0.0, %v2246
        %v2248 = vpop.f32.mrf.mxu0
        %v2249 = vadd.f32 0.0, %v2248
        %2250 = vmatmul.bf16.gmra.mxu0 %v2207
        %v2251 = vpop.f32.mrf.mxu0
        %v2252 = vadd.f32 0.0, %v2251
        %v2253 = vpop.f32.mrf.mxu0
        %v2254 = vadd.f32 0.0, %v2253
        %2255 = vmatmul.bf16.gmra.mxu0 %v2210
        %v2256 = vpop.f32.mrf.mxu0
        %v2257 = vadd.f32 0.0, %v2256
        %v2258 = vpop.f32.mrf.mxu0
        %v2259 = vadd.f32 0.0, %v2258
        %2260 = vdwg.mxu0
        %v2261 = vadd.f32 %v2117, %v2222
        %v2262 = vadd.f32 %v2119, %v2224
        %v2263 = vadd.f32 %v2122, %v2227
        %v2264 = vadd.f32 %v2124, %v2229
        %v2265 = vadd.f32 %v2127, %v2232
        %v2266 = vadd.f32 %v2129, %v2234
        %v2267 = vadd.f32 %v2132, %v2237
        %v2268 = vadd.f32 %v2134, %v2239
        %v2269 = vadd.f32 %v2137, %v2242
        %v2270 = vadd.f32 %v2139, %v2244
        %v2271 = vadd.f32 %v2142, %v2247
        %v2272 = vadd.f32 %v2144, %v2249
        %v2273 = vadd.f32 %v2147, %v2252
        %v2274 = vadd.f32 %v2149, %v2254
        %v2275 = vadd.f32 %v2152, %v2257
        %v2276 = vadd.f32 %v2154, %v2259
        %v2277 = vld [vmem:[%s1649 + $0x1] sm:$0xff]
        %v2278 = vld [vmem:[%s1649 + $0x11] sm:$0xff]
        %v2279 = vld [vmem:[%s1649 + $0x21] sm:$0xff]
        %v2280 = vld [vmem:[%s1649 + $0x31] sm:$0xff]
        %v2281 = vld [vmem:[%s1649 + $0x41] sm:$0xff]
        %v2282 = vld [vmem:[%s1649 + $0x51] sm:$0xff]
        %v2283 = vld [vmem:[%s1649 + $0x61] sm:$0xff]
        %v2284 = vld [vmem:[%s1649 + $0x71] sm:$0xff]
        %v2285 = vld [vmem:[%s1649 + $0x81] sm:$0xff]
        %v2286 = vld [vmem:[%s1649 + $0x91] sm:$0xff]
        %v2287 = vld [vmem:[%s1649 + $0xa1] sm:$0xff]
        %v2288 = vld [vmem:[%s1649 + $0xb1] sm:$0xff]
        %v2289 = vld [vmem:[%s1649 + $0xc1] sm:$0xff]
        %v2290 = vld [vmem:[%s1649 + $0xd1] sm:$0xff]
        %v2291 = vld [vmem:[%s1649 + $0xe1] sm:$0xff]
        %v2292 = vld [vmem:[%s1649 + $0xf1] sm:$0xff]
        %v2293 = vpack.c.bf16 %v2278, %v2277
        %v2294 = vpack.c.bf16 %v2280, %v2279
        %v2295 = vpack.c.bf16 %v2282, %v2281
        %v2296 = vpack.c.bf16 %v2284, %v2283
        %v2297 = vpack.c.bf16 %v2286, %v2285
        %v2298 = vpack.c.bf16 %v2288, %v2287
        %v2299 = vpack.c.bf16 %v2290, %v2289
        %v2300 = vpack.c.bf16 %v2292, %v2291
        %v2301 = vld [vmem:[%s3 + $0x18] sm:$0xf]
        %v2302 = vld [vmem:[%s3 + $0x1c] sm:$0xf]
        %v2305 = vunpack.c.l.b16 %v2301
        %v2306 = vunpack.c.l.b16 %v2302
        %v2307 = vpack.c.b16 %v2306, %v2305
        %v2310 = vsel %vm445, %v2293, 0
        %v2313 = vsel %vm445, %v2294, 0
        %v2316 = vsel %vm445, %v2295, 0
        %v2319 = vsel %vm445, %v2296, 0
        %v2322 = vsel %vm445, %v2297, 0
        %v2325 = vsel %vm445, %v2298, 0
        %v2328 = vsel %vm445, %v2299, 0
        %v2331 = vsel %vm445, %v2300, 0
        %2333 = vmatpush.bf16.msra.mxu0 0
        %2334 = vmatpush.bf16.msra.mxu0 0
        %2335 = vmatpush.bf16.msra.mxu0 0
        %2336 = vmatpush.bf16.msra.mxu0 0
        %2337 = vmatpush.bf16.msra.mxu0 0
        %2338 = vmatpush.bf16.msra.mxu0 0
        %2339 = vmatpush.bf16.msra.mxu0 0
        %2340 = vmatpush.bf16.msra.mxu0 %v2307
        %2341 = vmatmul.bf16.gmra.mxu0 %v2310
        %v2342 = vpop.f32.mrf.mxu0
        %v2343 = vadd.f32 0.0, %v2342
        %v2344 = vpop.f32.mrf.mxu0
        %v2345 = vadd.f32 0.0, %v2344
        %2346 = vmatmul.bf16.gmra.mxu0 %v2313
        %v2347 = vpop.f32.mrf.mxu0
        %v2348 = vadd.f32 0.0, %v2347
        %v2349 = vpop.f32.mrf.mxu0
        %v2350 = vadd.f32 0.0, %v2349
        %2351 = vmatmul.bf16.gmra.mxu0 %v2316
        %v2352 = vpop.f32.mrf.mxu0
        %v2353 = vadd.f32 0.0, %v2352
        %v2354 = vpop.f32.mrf.mxu0
        %v2355 = vadd.f32 0.0, %v2354
        %2356 = vmatmul.bf16.gmra.mxu0 %v2319
        %v2357 = vpop.f32.mrf.mxu0
        %v2358 = vadd.f32 0.0, %v2357
        %v2359 = vpop.f32.mrf.mxu0
        %v2360 = vadd.f32 0.0, %v2359
        %2361 = vmatmul.bf16.gmra.mxu0 %v2322
        %v2362 = vpop.f32.mrf.mxu0
        %v2363 = vadd.f32 0.0, %v2362
        %v2364 = vpop.f32.mrf.mxu0
        %v2365 = vadd.f32 0.0, %v2364
        %2366 = vmatmul.bf16.gmra.mxu0 %v2325
        %v2367 = vpop.f32.mrf.mxu0
        %v2368 = vadd.f32 0.0, %v2367
        %v2369 = vpop.f32.mrf.mxu0
        %v2370 = vadd.f32 0.0, %v2369
        %2371 = vmatmul.bf16.gmra.mxu0 %v2328
        %v2372 = vpop.f32.mrf.mxu0
        %v2373 = vadd.f32 0.0, %v2372
        %v2374 = vpop.f32.mrf.mxu0
        %v2375 = vadd.f32 0.0, %v2374
        %2376 = vmatmul.bf16.gmra.mxu0 %v2331
        %v2377 = vpop.f32.mrf.mxu0
        %v2378 = vadd.f32 0.0, %v2377
        %v2379 = vpop.f32.mrf.mxu0
        %v2380 = vadd.f32 0.0, %v2379
        %2381 = vdwg.mxu0
        %v2382 = vadd.f32 %v2261, %v2343
        %v2383 = vadd.f32 %v2262, %v2345
        %v2384 = vadd.f32 %v2263, %v2348
        %v2385 = vadd.f32 %v2264, %v2350
        %v2386 = vadd.f32 %v2265, %v2353
        %v2387 = vadd.f32 %v2266, %v2355
        %v2388 = vadd.f32 %v2267, %v2358
        %v2389 = vadd.f32 %v2268, %v2360
        %v2390 = vadd.f32 %v2269, %v2363
        %v2391 = vadd.f32 %v2270, %v2365
        %v2392 = vadd.f32 %v2271, %v2368
        %v2393 = vadd.f32 %v2272, %v2370
        %v2394 = vadd.f32 %v2273, %v2373
        %v2395 = vadd.f32 %v2274, %v2375
        %v2396 = vadd.f32 %v2275, %v2378
        %v2397 = vadd.f32 %v2276, %v2380
        %v2398 = vld [vmem:[%s4] sm:$0x1]
        %v2400 = vperm.slane %v2398, 0
        %v2402 = vadd.f32 %v2382, %v2400
        %v2403 = vadd.f32 %v2383, %v2400
        %v2404 = vadd.f32 %v2384, %v2400
        %v2405 = vadd.f32 %v2385, %v2400
        %v2406 = vadd.f32 %v2386, %v2400
        %v2407 = vadd.f32 %v2387, %v2400
        %v2408 = vadd.f32 %v2388, %v2400
        %v2409 = vadd.f32 %v2389, %v2400
        %v2410 = vadd.f32 %v2390, %v2400
        %v2411 = vadd.f32 %v2391, %v2400
        %v2412 = vadd.f32 %v2392, %v2400
        %v2413 = vadd.f32 %v2393, %v2400
        %v2414 = vadd.f32 %v2394, %v2400
        %v2415 = vadd.f32 %v2395, %v2400
        %v2416 = vadd.f32 %v2396, %v2400
        %v2417 = vadd.f32 %v2397, %v2400
        %v2418 = vmax.f32 %v2402, 0.0
        %v2419 = vmax.f32 %v2403, 0.0
        %v2420 = vmax.f32 %v2404, 0.0
        %v2421 = vmax.f32 %v2405, 0.0
        %v2422 = vmax.f32 %v2406, 0.0
        %v2423 = vmax.f32 %v2407, 0.0
        %v2424 = vmax.f32 %v2408, 0.0
        %v2425 = vmax.f32 %v2409, 0.0
        %v2426 = vmax.f32 %v2410, 0.0
        %v2427 = vmax.f32 %v2411, 0.0
        %v2428 = vmax.f32 %v2412, 0.0
        %v2429 = vmax.f32 %v2413, 0.0
        %v2430 = vmax.f32 %v2414, 0.0
        %v2431 = vmax.f32 %v2415, 0.0
        %v2432 = vmax.f32 %v2416, 0.0
        %v2433 = vmax.f32 %v2417, 0.0
        %s2434 = scalar_lea.vmem [#allocation3], 272
        %2435 = vst.msk [vmem:[%s2434] sm:$0xff] %vm1929, %v2418
        %2436 = vst.msk [vmem:[%s2434 + $0x10] sm:$0xff] %vm1929, %v2419
        %2437 = vst.msk [vmem:[%s2434 + $0x20] sm:$0xff] %vm1929, %v2420
        %2438 = vst.msk [vmem:[%s2434 + $0x30] sm:$0xff] %vm1929, %v2421
        %2439 = vst.msk [vmem:[%s2434 + $0x40] sm:$0xff] %vm1929, %v2422
        %2440 = vst.msk [vmem:[%s2434 + $0x50] sm:$0xff] %vm1929, %v2423
        %2441 = vst.msk [vmem:[%s2434 + $0x60] sm:$0xff] %vm1929, %v2424
        %2442 = vst.msk [vmem:[%s2434 + $0x70] sm:$0xff] %vm1929, %v2425
        %2443 = vst.msk [vmem:[%s2434 + $0x80] sm:$0xff] %vm1929, %v2426
        %2444 = vst.msk [vmem:[%s2434 + $0x90] sm:$0xff] %vm1929, %v2427
        %2445 = vst.msk [vmem:[%s2434 + $0xa0] sm:$0xff] %vm1929, %v2428
        %2446 = vst.msk [vmem:[%s2434 + $0xb0] sm:$0xff] %vm1929, %v2429
        %2447 = vst.msk [vmem:[%s2434 + $0xc0] sm:$0xff] %vm1929, %v2430
        %2448 = vst.msk [vmem:[%s2434 + $0xd0] sm:$0xff] %vm1929, %v2431
        %2449 = vst.msk [vmem:[%s2434 + $0xe0] sm:$0xff] %vm1929, %v2432
        %2450 = vst.msk [vmem:[%s2434 + $0xf0] sm:$0xff] %vm1929, %v2433
        %s2451 = scalar_lea.vmem [#allocation3], 256
        %2452 = vst.msk [vmem:[%s2451] sm:$0xff] %vm1929, 0.0
        %vm2453 = vcmask 57344
        %2454 = vst.msk [vmem:[%s2451 + $0x8] sm:$0x1] %vm2453, 0.0
        %2455 = vst.msk [vmem:[%s2451 + $0x110] sm:$0xff] %vm1929, 0.0
        %2456 = vst.msk [vmem:[%s2451 + $0x118] sm:$0x1] %vm2453, 0.0
        %2457 = vst.msk [vmem:[#allocation3 + $0x8] sm:$0x1] %vm2453, 0.0
        %2458 = vst.msk [vmem:[#allocation3 + $0x18] sm:$0x1] %vm2453, 0.0
        %2459 = vst.msk [vmem:[#allocation3 + $0x28] sm:$0x1] %vm2453, 0.0
        %2460 = vst.msk [vmem:[#allocation3 + $0x38] sm:$0x1] %vm2453, 0.0
        %2461 = vst.msk [vmem:[#allocation3 + $0x48] sm:$0x1] %vm2453, 0.0
        %2462 = vst.msk [vmem:[#allocation3 + $0x58] sm:$0x1] %vm2453, 0.0
        %2463 = vst.msk [vmem:[#allocation3 + $0x68] sm:$0x1] %vm2453, 0.0
        %2464 = vst.msk [vmem:[#allocation3 + $0x78] sm:$0x1] %vm2453, 0.0
        %2465 = vst.msk [vmem:[#allocation3 + $0x88] sm:$0x1] %vm2453, 0.0
        %2466 = vst.msk [vmem:[#allocation3 + $0x98] sm:$0x1] %vm2453, 0.0
        %2467 = vst.msk [vmem:[#allocation3 + $0xa8] sm:$0x1] %vm2453, 0.0
        %2468 = vst.msk [vmem:[#allocation3 + $0xb8] sm:$0x1] %vm2453, 0.0
        %2469 = vst.msk [vmem:[#allocation3 + $0xc8] sm:$0x1] %vm2453, 0.0
        %2470 = vst.msk [vmem:[#allocation3 + $0xd8] sm:$0x1] %vm2453, 0.0
        %2471 = vst.msk [vmem:[#allocation3 + $0xe8] sm:$0x1] %vm2453, 0.0
        %2472 = vst.msk [vmem:[#allocation3 + $0xf8] sm:$0x1] %vm2453, 0.0
        %2473 = vst.msk [vmem:[#allocation3 + $0x108] sm:$0x1] %vm2453, 0.0
        %2474 = vst.msk [vmem:[#allocation3 + $0x118] sm:$0x1] %vm2453, 0.0
        %2475 = vst.msk [vmem:[#allocation3 + $0x128] sm:$0x1] %vm2453, 0.0
        %2476 = vst.msk [vmem:[#allocation3 + $0x138] sm:$0x1] %vm2453, 0.0
        %2477 = vst.msk [vmem:[#allocation3 + $0x148] sm:$0x1] %vm2453, 0.0
        %2478 = vst.msk [vmem:[#allocation3 + $0x158] sm:$0x1] %vm2453, 0.0
        %2479 = vst.msk [vmem:[#allocation3 + $0x168] sm:$0x1] %vm2453, 0.0
        %2480 = vst.msk [vmem:[#allocation3 + $0x178] sm:$0x1] %vm2453, 0.0
        %2481 = vst.msk [vmem:[#allocation3 + $0x188] sm:$0x1] %vm2453, 0.0
        %2482 = vst.msk [vmem:[#allocation3 + $0x198] sm:$0x1] %vm2453, 0.0
        %2483 = vst.msk [vmem:[#allocation3 + $0x1a8] sm:$0x1] %vm2453, 0.0
        %2484 = vst.msk [vmem:[#allocation3 + $0x1b8] sm:$0x1] %vm2453, 0.0
        %2485 = vst.msk [vmem:[#allocation3 + $0x1c8] sm:$0x1] %vm2453, 0.0
        %2486 = vst.msk [vmem:[#allocation3 + $0x1d8] sm:$0x1] %vm2453, 0.0
        %2487 = vst.msk [vmem:[#allocation3 + $0x1e8] sm:$0x1] %vm2453, 0.0
        %2488 = vst.msk [vmem:[#allocation3 + $0x1f8] sm:$0x1] %vm2453, 0.0
        %2489 = vst.msk [vmem:[#allocation3 + $0x208] sm:$0x1] %vm2453, 0.0
        %2490 = vst.msk [vmem:[#allocation3 + $0x218] sm:$0x1] %vm2453, 0.0
        %v2491 = vld [vmem:[#allocation3] sm:$0xff]
        %v2492 = vld [vmem:[#allocation3 + $0x10] sm:$0xff]
        %v2493 = vld [vmem:[#allocation3 + $0x20] sm:$0xff]
        %v2494 = vld [vmem:[#allocation3 + $0x30] sm:$0xff]
        %v2495 = vld [vmem:[#allocation3 + $0x40] sm:$0xff]
        %v2496 = vld [vmem:[#allocation3 + $0x50] sm:$0xff]
        %v2497 = vld [vmem:[#allocation3 + $0x60] sm:$0xff]
        %v2498 = vld [vmem:[#allocation3 + $0x70] sm:$0xff]
        %v2499 = vld [vmem:[#allocation3 + $0x80] sm:$0xff]
        %v2500 = vld [vmem:[#allocation3 + $0x90] sm:$0xff]
        %v2501 = vld [vmem:[#allocation3 + $0xa0] sm:$0xff]
        %v2502 = vld [vmem:[#allocation3 + $0xb0] sm:$0xff]
        %v2503 = vld [vmem:[#allocation3 + $0xc0] sm:$0xff]
        %v2504 = vld [vmem:[#allocation3 + $0xd0] sm:$0xff]
        %v2505 = vld [vmem:[#allocation3 + $0xe0] sm:$0xff]
        %v2506 = vld [vmem:[#allocation3 + $0xf0] sm:$0xff]
        %v2507 = vpack.c.bf16 %v2492, %v2491
        %v2508 = vpack.c.bf16 %v2494, %v2493
        %v2509 = vpack.c.bf16 %v2496, %v2495
        %v2510 = vpack.c.bf16 %v2498, %v2497
        %v2511 = vpack.c.bf16 %v2500, %v2499
        %v2512 = vpack.c.bf16 %v2502, %v2501
        %v2513 = vpack.c.bf16 %v2504, %v2503
        %v2514 = vpack.c.bf16 %v2506, %v2505
        %v2515 = vld [vmem:[%s5] sm:$0xf]
        %v2516 = vld [vmem:[%s2434] sm:$0xff]
        %v2517 = vld [vmem:[%s2434 + $0x10] sm:$0xff]
        %v2518 = vld [vmem:[%s2434 + $0x20] sm:$0xff]
        %v2519 = vld [vmem:[%s2434 + $0x30] sm:$0xff]
        %v2520 = vld [vmem:[%s2434 + $0x40] sm:$0xff]
        %v2521 = vld [vmem:[%s2434 + $0x50] sm:$0xff]
        %v2522 = vld [vmem:[%s2434 + $0x60] sm:$0xff]
        %v2523 = vld [vmem:[%s2434 + $0x70] sm:$0xff]
        %v2524 = vld [vmem:[%s2434 + $0x80] sm:$0xff]
        %v2525 = vld [vmem:[%s2434 + $0x90] sm:$0xff]
        %v2526 = vld [vmem:[%s2434 + $0xa0] sm:$0xff]
        %v2527 = vld [vmem:[%s2434 + $0xb0] sm:$0xff]
        %v2528 = vld [vmem:[%s2434 + $0xc0] sm:$0xff]
        %v2529 = vld [vmem:[%s2434 + $0xd0] sm:$0xff]
        %v2530 = vld [vmem:[%s2434 + $0xe0] sm:$0xff]
        %v2531 = vld [vmem:[%s2434 + $0xf0] sm:$0xff]
        %v2532 = vpack.c.bf16 %v2517, %v2516
        %v2533 = vpack.c.bf16 %v2519, %v2518
        %v2534 = vpack.c.bf16 %v2521, %v2520
        %v2535 = vpack.c.bf16 %v2523, %v2522
        %v2536 = vpack.c.bf16 %v2525, %v2524
        %v2537 = vpack.c.bf16 %v2527, %v2526
        %v2538 = vpack.c.bf16 %v2529, %v2528
        %v2539 = vpack.c.bf16 %v2531, %v2530
        %v2540 = vld [vmem:[%s5 + $0x4] sm:$0xf]
        %v2542 = vsel %vm1929, %v2532, 0
        %v2545 = vsel %vm1929, %v2533, 0
        %v2548 = vsel %vm1929, %v2534, 0
        %v2551 = vsel %vm1929, %v2535, 0
        %v2554 = vsel %vm1929, %v2536, 0
        %v2557 = vsel %vm1929, %v2537, 0
        %v2560 = vsel %vm1929, %v2538, 0
        %v2563 = vsel %vm1929, %v2539, 0
        %vm2565 = vcmask 1043456
        %v2567 = vsel %vm2565, %v2540, 0
        %2569 = vmatpush.bf16.msra.mxu0 0
        %2570 = vmatpush.bf16.msra.mxu0 0
        %2571 = vmatpush.bf16.msra.mxu0 0
        %2572 = vmatpush.bf16.msra.mxu0 0
        %2573 = vmatpush.bf16.msra.mxu0 0
        %2574 = vmatpush.bf16.msra.mxu0 0
        %2575 = vmatpush.bf16.msra.mxu0 0
        %2576 = vmatpush.bf16.msra.mxu0 %v2567
        %2577 = vmatmul.bf16.gmra.mxu0 %v2542
        %v2578 = vpop.f32.mrf.mxu0
        %v2579 = vadd.f32 0.0, %v2578
        %v2580 = vpop.f32.mrf.mxu0
        %v2581 = vadd.f32 0.0, %v2580
        %2582 = vmatmul.bf16.gmra.mxu0 %v2545
        %v2583 = vpop.f32.mrf.mxu0
        %v2584 = vadd.f32 0.0, %v2583
        %v2585 = vpop.f32.mrf.mxu0
        %v2586 = vadd.f32 0.0, %v2585
        %2587 = vmatmul.bf16.gmra.mxu0 %v2548
        %v2588 = vpop.f32.mrf.mxu0
        %v2589 = vadd.f32 0.0, %v2588
        %v2590 = vpop.f32.mrf.mxu0
        %v2591 = vadd.f32 0.0, %v2590
        %2592 = vmatmul.bf16.gmra.mxu0 %v2551
        %v2593 = vpop.f32.mrf.mxu0
        %v2594 = vadd.f32 0.0, %v2593
        %v2595 = vpop.f32.mrf.mxu0
        %v2596 = vadd.f32 0.0, %v2595
        %2597 = vmatmul.bf16.gmra.mxu0 %v2554
        %v2598 = vpop.f32.mrf.mxu0
        %v2599 = vadd.f32 0.0, %v2598
        %v2600 = vpop.f32.mrf.mxu0
        %v2601 = vadd.f32 0.0, %v2600
        %2602 = vmatmul.bf16.gmra.mxu0 %v2557
        %v2603 = vpop.f32.mrf.mxu0
        %v2604 = vadd.f32 0.0, %v2603
        %v2605 = vpop.f32.mrf.mxu0
        %v2606 = vadd.f32 0.0, %v2605
        %2607 = vmatmul.bf16.gmra.mxu0 %v2560
        %v2608 = vpop.f32.mrf.mxu0
        %v2609 = vadd.f32 0.0, %v2608
        %v2610 = vpop.f32.mrf.mxu0
        %v2611 = vadd.f32 0.0, %v2610
        %2612 = vmatmul.bf16.gmra.mxu0 %v2563
        %v2613 = vpop.f32.mrf.mxu0
        %v2614 = vadd.f32 0.0, %v2613
        %v2615 = vpop.f32.mrf.mxu0
        %v2616 = vadd.f32 0.0, %v2615
        %2617 = vdwg.mxu0
        %v2619 = vsel %vm1929, %v2507, 0
        %v2622 = vsel %vm1929, %v2508, 0
        %v2625 = vsel %vm1929, %v2509, 0
        %v2628 = vsel %vm1929, %v2510, 0
        %v2631 = vsel %vm1929, %v2511, 0
        %v2634 = vsel %vm1929, %v2512, 0
        %v2637 = vsel %vm1929, %v2513, 0
        %v2640 = vsel %vm1929, %v2514, 0
        %v2643 = vsel %vm2565, %v2515, 0
        %2645 = vmatpush.bf16.msra.mxu0 0
        %2646 = vmatpush.bf16.msra.mxu0 0
        %2647 = vmatpush.bf16.msra.mxu0 0
        %2648 = vmatpush.bf16.msra.mxu0 0
        %2649 = vmatpush.bf16.msra.mxu0 0
        %2650 = vmatpush.bf16.msra.mxu0 0
        %2651 = vmatpush.bf16.msra.mxu0 0
        %2652 = vmatpush.bf16.msra.mxu0 %v2643
        %2653 = vmatmul.bf16.gmra.mxu0 %v2619
        %v2654 = vpop.f32.mrf.mxu0
        %v2655 = vadd.f32 %v2579, %v2654
        %v2656 = vpop.f32.mrf.mxu0
        %v2657 = vadd.f32 %v2581, %v2656
        %2658 = vmatmul.bf16.gmra.mxu0 %v2622
        %v2659 = vpop.f32.mrf.mxu0
        %v2660 = vadd.f32 %v2584, %v2659
        %v2661 = vpop.f32.mrf.mxu0
        %v2662 = vadd.f32 %v2586, %v2661
        %2663 = vmatmul.bf16.gmra.mxu0 %v2625
        %v2664 = vpop.f32.mrf.mxu0
        %v2665 = vadd.f32 %v2589, %v2664
        %v2666 = vpop.f32.mrf.mxu0
        %v2667 = vadd.f32 %v2591, %v2666
        %2668 = vmatmul.bf16.gmra.mxu0 %v2628
        %v2669 = vpop.f32.mrf.mxu0
        %v2670 = vadd.f32 %v2594, %v2669
        %v2671 = vpop.f32.mrf.mxu0
        %v2672 = vadd.f32 %v2596, %v2671
        %2673 = vmatmul.bf16.gmra.mxu0 %v2631
        %v2674 = vpop.f32.mrf.mxu0
        %v2675 = vadd.f32 %v2599, %v2674
        %v2676 = vpop.f32.mrf.mxu0
        %v2677 = vadd.f32 %v2601, %v2676
        %2678 = vmatmul.bf16.gmra.mxu0 %v2634
        %v2679 = vpop.f32.mrf.mxu0
        %v2680 = vadd.f32 %v2604, %v2679
        %v2681 = vpop.f32.mrf.mxu0
        %v2682 = vadd.f32 %v2606, %v2681
        %2683 = vmatmul.bf16.gmra.mxu0 %v2637
        %v2684 = vpop.f32.mrf.mxu0
        %v2685 = vadd.f32 %v2609, %v2684
        %v2686 = vpop.f32.mrf.mxu0
        %v2687 = vadd.f32 %v2611, %v2686
        %2688 = vmatmul.bf16.gmra.mxu0 %v2640
        %v2689 = vpop.f32.mrf.mxu0
        %v2690 = vadd.f32 %v2614, %v2689
        %v2691 = vpop.f32.mrf.mxu0
        %v2692 = vadd.f32 %v2616, %v2691
        %2693 = vdwg.mxu0
        %s2694 = scalar_lea.vmem [#allocation3], 16
        %v2695 = vld [vmem:[%s2694] sm:$0xff]
        %v2696 = vld [vmem:[%s2694 + $0x10] sm:$0xff]
        %v2697 = vld [vmem:[%s2694 + $0x20] sm:$0xff]
        %v2698 = vld [vmem:[%s2694 + $0x30] sm:$0xff]
        %v2699 = vld [vmem:[%s2694 + $0x40] sm:$0xff]
        %v2700 = vld [vmem:[%s2694 + $0x50] sm:$0xff]
        %v2701 = vld [vmem:[%s2694 + $0x60] sm:$0xff]
        %v2702 = vld [vmem:[%s2694 + $0x70] sm:$0xff]
        %v2703 = vld [vmem:[%s2694 + $0x80] sm:$0xff]
        %v2704 = vld [vmem:[%s2694 + $0x90] sm:$0xff]
        %v2705 = vld [vmem:[%s2694 + $0xa0] sm:$0xff]
        %v2706 = vld [vmem:[%s2694 + $0xb0] sm:$0xff]
        %v2707 = vld [vmem:[%s2694 + $0xc0] sm:$0xff]
        %v2708 = vld [vmem:[%s2694 + $0xd0] sm:$0xff]
        %v2709 = vld [vmem:[%s2694 + $0xe0] sm:$0xff]
        %v2710 = vld [vmem:[%s2694 + $0xf0] sm:$0xff]
        %v2711 = vpack.c.bf16 %v2696, %v2695
        %v2712 = vpack.c.bf16 %v2698, %v2697
        %v2713 = vpack.c.bf16 %v2700, %v2699
        %v2714 = vpack.c.bf16 %v2702, %v2701
        %v2715 = vpack.c.bf16 %v2704, %v2703
        %v2716 = vpack.c.bf16 %v2706, %v2705
        %v2717 = vpack.c.bf16 %v2708, %v2707
        %v2718 = vpack.c.bf16 %v2710, %v2709
        %v2719 = vld [vmem:[%s5 + $0x8] sm:$0xf]
        %v2721 = vsel %vm1929, %v2711, 0
        %v2724 = vsel %vm1929, %v2712, 0
        %v2727 = vsel %vm1929, %v2713, 0
        %v2730 = vsel %vm1929, %v2714, 0
        %v2733 = vsel %vm1929, %v2715, 0
        %v2736 = vsel %vm1929, %v2716, 0
        %v2739 = vsel %vm1929, %v2717, 0
        %v2742 = vsel %vm1929, %v2718, 0
        %v2745 = vsel %vm2565, %v2719, 0
        %2747 = vmatpush.bf16.msra.mxu0 0
        %2748 = vmatpush.bf16.msra.mxu0 0
        %2749 = vmatpush.bf16.msra.mxu0 0
        %2750 = vmatpush.bf16.msra.mxu0 0
        %2751 = vmatpush.bf16.msra.mxu0 0
        %2752 = vmatpush.bf16.msra.mxu0 0
        %2753 = vmatpush.bf16.msra.mxu0 0
        %2754 = vmatpush.bf16.msra.mxu0 %v2745
        %2755 = vmatmul.bf16.gmra.mxu0 %v2721
        %v2756 = vpop.f32.mrf.mxu0
        %v2757 = vadd.f32 0.0, %v2756
        %v2758 = vpop.f32.mrf.mxu0
        %v2759 = vadd.f32 0.0, %v2758
        %2760 = vmatmul.bf16.gmra.mxu0 %v2724
        %v2761 = vpop.f32.mrf.mxu0
        %v2762 = vadd.f32 0.0, %v2761
        %v2763 = vpop.f32.mrf.mxu0
        %v2764 = vadd.f32 0.0, %v2763
        %2765 = vmatmul.bf16.gmra.mxu0 %v2727
        %v2766 = vpop.f32.mrf.mxu0
        %v2767 = vadd.f32 0.0, %v2766
        %v2768 = vpop.f32.mrf.mxu0
        %v2769 = vadd.f32 0.0, %v2768
        %2770 = vmatmul.bf16.gmra.mxu0 %v2730
        %v2771 = vpop.f32.mrf.mxu0
        %v2772 = vadd.f32 0.0, %v2771
        %v2773 = vpop.f32.mrf.mxu0
        %v2774 = vadd.f32 0.0, %v2773
        %2775 = vmatmul.bf16.gmra.mxu0 %v2733
        %v2776 = vpop.f32.mrf.mxu0
        %v2777 = vadd.f32 0.0, %v2776
        %v2778 = vpop.f32.mrf.mxu0
        %v2779 = vadd.f32 0.0, %v2778
        %2780 = vmatmul.bf16.gmra.mxu0 %v2736
        %v2781 = vpop.f32.mrf.mxu0
        %v2782 = vadd.f32 0.0, %v2781
        %v2783 = vpop.f32.mrf.mxu0
        %v2784 = vadd.f32 0.0, %v2783
        %2785 = vmatmul.bf16.gmra.mxu0 %v2739
        %v2786 = vpop.f32.mrf.mxu0
        %v2787 = vadd.f32 0.0, %v2786
        %v2788 = vpop.f32.mrf.mxu0
        %v2789 = vadd.f32 0.0, %v2788
        %2790 = vmatmul.bf16.gmra.mxu0 %v2742
        %v2791 = vpop.f32.mrf.mxu0
        %v2792 = vadd.f32 0.0, %v2791
        %v2793 = vpop.f32.mrf.mxu0
        %v2794 = vadd.f32 0.0, %v2793
        %2795 = vdwg.mxu0
        %v2796 = vadd.f32 %v2655, %v2757
        %v2797 = vadd.f32 %v2657, %v2759
        %v2798 = vadd.f32 %v2660, %v2762
        %v2799 = vadd.f32 %v2662, %v2764
        %v2800 = vadd.f32 %v2665, %v2767
        %v2801 = vadd.f32 %v2667, %v2769
        %v2802 = vadd.f32 %v2670, %v2772
        %v2803 = vadd.f32 %v2672, %v2774
        %v2804 = vadd.f32 %v2675, %v2777
        %v2805 = vadd.f32 %v2677, %v2779
        %v2806 = vadd.f32 %v2680, %v2782
        %v2807 = vadd.f32 %v2682, %v2784
        %v2808 = vadd.f32 %v2685, %v2787
        %v2809 = vadd.f32 %v2687, %v2789
        %v2810 = vadd.f32 %v2690, %v2792
        %v2811 = vadd.f32 %v2692, %v2794
        %s2812 = scalar_lea.vmem [#allocation3], 288
        %v2813 = vld [vmem:[%s2812] sm:$0xff]
        %v2814 = vld [vmem:[%s2812 + $0x10] sm:$0xff]
        %v2815 = vld [vmem:[%s2812 + $0x20] sm:$0xff]
        %v2816 = vld [vmem:[%s2812 + $0x30] sm:$0xff]
        %v2817 = vld [vmem:[%s2812 + $0x40] sm:$0xff]
        %v2818 = vld [vmem:[%s2812 + $0x50] sm:$0xff]
        %v2819 = vld [vmem:[%s2812 + $0x60] sm:$0xff]
        %v2820 = vld [vmem:[%s2812 + $0x70] sm:$0xff]
        %v2821 = vld [vmem:[%s2812 + $0x80] sm:$0xff]
        %v2822 = vld [vmem:[%s2812 + $0x90] sm:$0xff]
        %v2823 = vld [vmem:[%s2812 + $0xa0] sm:$0xff]
        %v2824 = vld [vmem:[%s2812 + $0xb0] sm:$0xff]
        %v2825 = vld [vmem:[%s2812 + $0xc0] sm:$0xff]
        %v2826 = vld [vmem:[%s2812 + $0xd0] sm:$0xff]
        %v2827 = vld [vmem:[%s2812 + $0xe0] sm:$0xff]
        %v2828 = vld [vmem:[%s2812 + $0xf0] sm:$0xff]
        %v2829 = vpack.c.bf16 %v2814, %v2813
        %v2830 = vpack.c.bf16 %v2816, %v2815
        %v2831 = vpack.c.bf16 %v2818, %v2817
        %v2832 = vpack.c.bf16 %v2820, %v2819
        %v2833 = vpack.c.bf16 %v2822, %v2821
        %v2834 = vpack.c.bf16 %v2824, %v2823
        %v2835 = vpack.c.bf16 %v2826, %v2825
        %v2836 = vpack.c.bf16 %v2828, %v2827
        %v2837 = vld [vmem:[%s5 + $0xc] sm:$0xf]
        %v2839 = vsel %vm1929, %v2829, 0
        %v2842 = vsel %vm1929, %v2830, 0
        %v2845 = vsel %vm1929, %v2831, 0
        %v2848 = vsel %vm1929, %v2832, 0
        %v2851 = vsel %vm1929, %v2833, 0
        %v2854 = vsel %vm1929, %v2834, 0
        %v2857 = vsel %vm1929, %v2835, 0
        %v2860 = vsel %vm1929, %v2836, 0
        %v2863 = vsel %vm2565, %v2837, 0
        %2865 = vmatpush.bf16.msra.mxu0 0
        %2866 = vmatpush.bf16.msra.mxu0 0
        %2867 = vmatpush.bf16.msra.mxu0 0
        %2868 = vmatpush.bf16.msra.mxu0 0
        %2869 = vmatpush.bf16.msra.mxu0 0
        %2870 = vmatpush.bf16.msra.mxu0 0
        %2871 = vmatpush.bf16.msra.mxu0 0
        %2872 = vmatpush.bf16.msra.mxu0 %v2863
        %2873 = vmatmul.bf16.gmra.mxu0 %v2839
        %v2874 = vpop.f32.mrf.mxu0
        %v2875 = vadd.f32 0.0, %v2874
        %v2876 = vpop.f32.mrf.mxu0
        %v2877 = vadd.f32 0.0, %v2876
        %2878 = vmatmul.bf16.gmra.mxu0 %v2842
        %v2879 = vpop.f32.mrf.mxu0
        %v2880 = vadd.f32 0.0, %v2879
        %v2881 = vpop.f32.mrf.mxu0
        %v2882 = vadd.f32 0.0, %v2881
        %2883 = vmatmul.bf16.gmra.mxu0 %v2845
        %v2884 = vpop.f32.mrf.mxu0
        %v2885 = vadd.f32 0.0, %v2884
        %v2886 = vpop.f32.mrf.mxu0
        %v2887 = vadd.f32 0.0, %v2886
        %2888 = vmatmul.bf16.gmra.mxu0 %v2848
        %v2889 = vpop.f32.mrf.mxu0
        %v2890 = vadd.f32 0.0, %v2889
        %v2891 = vpop.f32.mrf.mxu0
        %v2892 = vadd.f32 0.0, %v2891
        %2893 = vmatmul.bf16.gmra.mxu0 %v2851
        %v2894 = vpop.f32.mrf.mxu0
        %v2895 = vadd.f32 0.0, %v2894
        %v2896 = vpop.f32.mrf.mxu0
        %v2897 = vadd.f32 0.0, %v2896
        %2898 = vmatmul.bf16.gmra.mxu0 %v2854
        %v2899 = vpop.f32.mrf.mxu0
        %v2900 = vadd.f32 0.0, %v2899
        %v2901 = vpop.f32.mrf.mxu0
        %v2902 = vadd.f32 0.0, %v2901
        %2903 = vmatmul.bf16.gmra.mxu0 %v2857
        %v2904 = vpop.f32.mrf.mxu0
        %v2905 = vadd.f32 0.0, %v2904
        %v2906 = vpop.f32.mrf.mxu0
        %v2907 = vadd.f32 0.0, %v2906
        %2908 = vmatmul.bf16.gmra.mxu0 %v2860
        %v2909 = vpop.f32.mrf.mxu0
        %v2910 = vadd.f32 0.0, %v2909
        %v2911 = vpop.f32.mrf.mxu0
        %v2912 = vadd.f32 0.0, %v2911
        %2913 = vdwg.mxu0
        %v2914 = vadd.f32 %v2796, %v2875
        %v2915 = vadd.f32 %v2797, %v2877
        %v2916 = vadd.f32 %v2798, %v2880
        %v2917 = vadd.f32 %v2799, %v2882
        %v2918 = vadd.f32 %v2800, %v2885
        %v2919 = vadd.f32 %v2801, %v2887
        %v2920 = vadd.f32 %v2802, %v2890
        %v2921 = vadd.f32 %v2803, %v2892
        %v2922 = vadd.f32 %v2804, %v2895
        %v2923 = vadd.f32 %v2805, %v2897
        %v2924 = vadd.f32 %v2806, %v2900
        %v2925 = vadd.f32 %v2807, %v2902
        %v2926 = vadd.f32 %v2808, %v2905
        %v2927 = vadd.f32 %v2809, %v2907
        %v2928 = vadd.f32 %v2810, %v2910
        %v2929 = vadd.f32 %v2811, %v2912
        %v2930 = vld [vmem:[%s6] sm:$0x1]
        %v2932 = vperm.slane %v2930, 0
        %v2934 = vadd.f32 %v2914, %v2932
        %v2935 = vadd.f32 %v2915, %v2932
        %v2936 = vadd.f32 %v2916, %v2932
        %v2937 = vadd.f32 %v2917, %v2932
        %v2938 = vadd.f32 %v2918, %v2932
        %v2939 = vadd.f32 %v2919, %v2932
        %v2940 = vadd.f32 %v2920, %v2932
        %v2941 = vadd.f32 %v2921, %v2932
        %v2942 = vadd.f32 %v2922, %v2932
        %v2943 = vadd.f32 %v2923, %v2932
        %v2944 = vadd.f32 %v2924, %v2932
        %v2945 = vadd.f32 %v2925, %v2932
        %v2946 = vadd.f32 %v2926, %v2932
        %v2947 = vadd.f32 %v2927, %v2932
        %v2948 = vadd.f32 %v2928, %v2932
        %v2949 = vadd.f32 %v2929, %v2932
        %v2950 = vmax.f32 %v2934, 0.0
        %v2951 = vmax.f32 %v2935, 0.0
        %v2952 = vmax.f32 %v2936, 0.0
        %v2953 = vmax.f32 %v2937, 0.0
        %v2954 = vmax.f32 %v2938, 0.0
        %v2955 = vmax.f32 %v2939, 0.0
        %v2956 = vmax.f32 %v2940, 0.0
        %v2957 = vmax.f32 %v2941, 0.0
        %v2958 = vmax.f32 %v2942, 0.0
        %v2959 = vmax.f32 %v2943, 0.0
        %v2960 = vmax.f32 %v2944, 0.0
        %v2961 = vmax.f32 %v2945, 0.0
        %v2962 = vmax.f32 %v2946, 0.0
        %v2963 = vmax.f32 %v2947, 0.0
        %v2964 = vmax.f32 %v2948, 0.0
        %v2965 = vmax.f32 %v2949, 0.0
        %v2966 = vld [vmem:[#allocation2] sm:$0xff]
        %v2967 = vld [vmem:[#allocation2 + $0x10] sm:$0xff]
        %v2968 = vld [vmem:[#allocation2 + $0x20] sm:$0xff]
        %v2969 = vld [vmem:[#allocation2 + $0x30] sm:$0xff]
        %v2970 = vld [vmem:[#allocation2 + $0x40] sm:$0xff]
        %v2971 = vld [vmem:[#allocation2 + $0x50] sm:$0xff]
        %v2972 = vld [vmem:[#allocation2 + $0x60] sm:$0xff]
        %v2973 = vld [vmem:[#allocation2 + $0x70] sm:$0xff]
        %v2974 = vld [vmem:[#allocation2 + $0x80] sm:$0xff]
        %v2975 = vld [vmem:[#allocation2 + $0x90] sm:$0xff]
        %v2976 = vld [vmem:[#allocation2 + $0xa0] sm:$0xff]
        %v2977 = vld [vmem:[#allocation2 + $0xb0] sm:$0xff]
        %v2978 = vld [vmem:[#allocation2 + $0xc0] sm:$0xff]
        %v2979 = vld [vmem:[#allocation2 + $0xd0] sm:$0xff]
        %v2980 = vld [vmem:[#allocation2 + $0xe0] sm:$0xff]
        %v2981 = vld [vmem:[#allocation2 + $0xf0] sm:$0xff]
        %v2982 = vld [vmem:[%s1382] sm:$0xff]
        %v2983 = vld [vmem:[%s1382 + $0x10] sm:$0xff]
        %v2984 = vld [vmem:[%s1382 + $0x20] sm:$0xff]
        %v2985 = vld [vmem:[%s1382 + $0x30] sm:$0xff]
        %v2986 = vld [vmem:[%s1382 + $0x40] sm:$0xff]
        %v2987 = vld [vmem:[%s1382 + $0x50] sm:$0xff]
        %v2988 = vld [vmem:[%s1382 + $0x60] sm:$0xff]
        %v2989 = vld [vmem:[%s1382 + $0x70] sm:$0xff]
        %v2990 = vld [vmem:[%s1382 + $0x80] sm:$0xff]
        %v2991 = vld [vmem:[%s1382 + $0x90] sm:$0xff]
        %v2992 = vld [vmem:[%s1382 + $0xa0] sm:$0xff]
        %v2993 = vld [vmem:[%s1382 + $0xb0] sm:$0xff]
        %v2994 = vld [vmem:[%s1382 + $0xc0] sm:$0xff]
        %v2995 = vld [vmem:[%s1382 + $0xd0] sm:$0xff]
        %v2996 = vld [vmem:[%s1382 + $0xe0] sm:$0xff]
        %v2997 = vld [vmem:[%s1382 + $0xf0] sm:$0xff]
        %v2998 = vmax.f32 %v2966, %v2982
        %v2999 = vmax.f32 %v2967, %v2983
        %v3000 = vmax.f32 %v2968, %v2984
        %v3001 = vmax.f32 %v2969, %v2985
        %v3002 = vmax.f32 %v2970, %v2986
        %v3003 = vmax.f32 %v2971, %v2987
        %v3004 = vmax.f32 %v2972, %v2988
        %v3005 = vmax.f32 %v2973, %v2989
        %v3006 = vmax.f32 %v2974, %v2990
        %v3007 = vmax.f32 %v2975, %v2991
        %v3008 = vmax.f32 %v2976, %v2992
        %v3009 = vmax.f32 %v2977, %v2993
        %v3010 = vmax.f32 %v2978, %v2994
        %v3011 = vmax.f32 %v2979, %v2995
        %v3012 = vmax.f32 %v2980, %v2996
        %v3013 = vmax.f32 %v2981, %v2997
        %v3014 = vld [vmem:[%s1649] sm:$0xff]
        %v3015 = vld [vmem:[%s1649 + $0x10] sm:$0xff]
        %v3016 = vld [vmem:[%s1649 + $0x20] sm:$0xff]
        %v3017 = vld [vmem:[%s1649 + $0x30] sm:$0xff]
        %v3018 = vld [vmem:[%s1649 + $0x40] sm:$0xff]
        %v3019 = vld [vmem:[%s1649 + $0x50] sm:$0xff]
        %v3020 = vld [vmem:[%s1649 + $0x60] sm:$0xff]
        %v3021 = vld [vmem:[%s1649 + $0x70] sm:$0xff]
        %v3022 = vld [vmem:[%s1649 + $0x80] sm:$0xff]
        %v3023 = vld [vmem:[%s1649 + $0x90] sm:$0xff]
        %v3024 = vld [vmem:[%s1649 + $0xa0] sm:$0xff]
        %v3025 = vld [vmem:[%s1649 + $0xb0] sm:$0xff]
        %v3026 = vld [vmem:[%s1649 + $0xc0] sm:$0xff]
        %v3027 = vld [vmem:[%s1649 + $0xd0] sm:$0xff]
        %v3028 = vld [vmem:[%s1649 + $0xe0] sm:$0xff]
        %v3029 = vld [vmem:[%s1649 + $0xf0] sm:$0xff]
        %v3030 = vmax.f32 %v2998, %v3014
        %v3031 = vmax.f32 %v2999, %v3015
        %v3032 = vmax.f32 %v3000, %v3016
        %v3033 = vmax.f32 %v3001, %v3017
        %v3034 = vmax.f32 %v3002, %v3018
        %v3035 = vmax.f32 %v3003, %v3019
        %v3036 = vmax.f32 %v3004, %v3020
        %v3037 = vmax.f32 %v3005, %v3021
        %v3038 = vmax.f32 %v3006, %v3022
        %v3039 = vmax.f32 %v3007, %v3023
        %v3040 = vmax.f32 %v3008, %v3024
        %v3041 = vmax.f32 %v3009, %v3025
        %v3042 = vmax.f32 %v3010, %v3026
        %v3043 = vmax.f32 %v3011, %v3027
        %v3044 = vmax.f32 %v3012, %v3028
        %v3045 = vmax.f32 %v3013, %v3029
        %v3046 = vld [vmem:[%s1771] sm:$0xff]
        %v3047 = vld [vmem:[%s1771 + $0x10] sm:$0xff]
        %v3048 = vld [vmem:[%s1771 + $0x20] sm:$0xff]
        %v3049 = vld [vmem:[%s1771 + $0x30] sm:$0xff]
        %v3050 = vld [vmem:[%s1771 + $0x40] sm:$0xff]
        %v3051 = vld [vmem:[%s1771 + $0x50] sm:$0xff]
        %v3052 = vld [vmem:[%s1771 + $0x60] sm:$0xff]
        %v3053 = vld [vmem:[%s1771 + $0x70] sm:$0xff]
        %v3054 = vld [vmem:[%s1771 + $0x80] sm:$0xff]
        %v3055 = vld [vmem:[%s1771 + $0x90] sm:$0xff]
        %v3056 = vld [vmem:[%s1771 + $0xa0] sm:$0xff]
        %v3057 = vld [vmem:[%s1771 + $0xb0] sm:$0xff]
        %v3058 = vld [vmem:[%s1771 + $0xc0] sm:$0xff]
        %v3059 = vld [vmem:[%s1771 + $0xd0] sm:$0xff]
        %v3060 = vld [vmem:[%s1771 + $0xe0] sm:$0xff]
        %v3061 = vld [vmem:[%s1771 + $0xf0] sm:$0xff]
        %v3062 = vmax.f32 %v3030, %v3046
        %v3063 = vmax.f32 %v3031, %v3047
        %v3064 = vmax.f32 %v3032, %v3048
        %v3065 = vmax.f32 %v3033, %v3049
        %v3066 = vmax.f32 %v3034, %v3050
        %v3067 = vmax.f32 %v3035, %v3051
        %v3068 = vmax.f32 %v3036, %v3052
        %v3069 = vmax.f32 %v3037, %v3053
        %v3070 = vmax.f32 %v3038, %v3054
        %v3071 = vmax.f32 %v3039, %v3055
        %v3072 = vmax.f32 %v3040, %v3056
        %v3073 = vmax.f32 %v3041, %v3057
        %v3074 = vmax.f32 %v3042, %v3058
        %v3075 = vmax.f32 %v3043, %v3059
        %v3076 = vmax.f32 %v3044, %v3060
        %v3077 = vmax.f32 %v3045, %v3061
        %3094 = vrot.lane.b32.xlu0 %v2950, 16
        %v3095 = vpop.permute.xlu0 %3094
        %3096 = vrot.lane.b32.xlu0 %v2951, 16
        %v3097 = vpop.permute.xlu0 %3096
        %3098 = vrot.lane.b32.xlu0 %v2952, 16
        %v3099 = vpop.permute.xlu0 %3098
        %3100 = vrot.lane.b32.xlu0 %v2953, 16
        %v3101 = vpop.permute.xlu0 %3100
        %3102 = vrot.lane.b32.xlu0 %v2954, 16
        %v3103 = vpop.permute.xlu0 %3102
        %3104 = vrot.lane.b32.xlu0 %v2955, 16
        %v3105 = vpop.permute.xlu0 %3104
        %3106 = vrot.lane.b32.xlu0 %v2956, 16
        %v3107 = vpop.permute.xlu0 %3106
        %3108 = vrot.lane.b32.xlu0 %v2957, 16
        %v3109 = vpop.permute.xlu0 %3108
        %3110 = vrot.lane.b32.xlu0 %v2958, 16
        %v3111 = vpop.permute.xlu0 %3110
        %3112 = vrot.lane.b32.xlu0 %v2959, 16
        %v3113 = vpop.permute.xlu0 %3112
        %3114 = vrot.lane.b32.xlu0 %v2960, 16
        %v3115 = vpop.permute.xlu0 %3114
        %3116 = vrot.lane.b32.xlu0 %v2961, 16
        %v3117 = vpop.permute.xlu0 %3116
        %3118 = vrot.lane.b32.xlu0 %v2962, 16
        %v3119 = vpop.permute.xlu0 %3118
        %3120 = vrot.lane.b32.xlu0 %v2963, 16
        %v3121 = vpop.permute.xlu0 %3120
        %3122 = vrot.lane.b32.xlu0 %v2964, 16
        %v3123 = vpop.permute.xlu0 %3122
        %3124 = vrot.lane.b32.xlu0 %v2965, 16
        %v3125 = vpop.permute.xlu0 %3124
        %v3142 = vsel %vm445, %v3062, %v3095
        %v3143 = vsel %vm445, %v3063, %v3097
        %v3144 = vsel %vm445, %v3064, %v3099
        %v3145 = vsel %vm445, %v3065, %v3101
        %v3146 = vsel %vm445, %v3066, %v3103
        %v3147 = vsel %vm445, %v3067, %v3105
        %v3148 = vsel %vm445, %v3068, %v3107
        %v3149 = vsel %vm445, %v3069, %v3109
        %v3150 = vsel %vm445, %v3070, %v3111
        %v3151 = vsel %vm445, %v3071, %v3113
        %v3152 = vsel %vm445, %v3072, %v3115
        %v3153 = vsel %vm445, %v3073, %v3117
        %v3154 = vsel %vm445, %v3074, %v3119
        %v3155 = vsel %vm445, %v3075, %v3121
        %v3156 = vsel %vm445, %v3076, %v3123
        %v3157 = vsel %vm445, %v3077, %v3125
        %vm3158 = vcmask 261120
        %3159 = vst.msk [vmem:[#allocation4] sm:$0xff] %vm3158, %v3142
        %3160 = vst.msk [vmem:[#allocation4 + $0x10] sm:$0xff] %vm3158, %v3144
        %3161 = vst.msk [vmem:[#allocation4 + $0x20] sm:$0xff] %vm3158, %v3146
        %3162 = vst.msk [vmem:[#allocation4 + $0x30] sm:$0xff] %vm3158, %v3148
        %3163 = vst.msk [vmem:[#allocation4 + $0x40] sm:$0xff] %vm3158, %v3150
        %3164 = vst.msk [vmem:[#allocation4 + $0x50] sm:$0xff] %vm3158, %v3152
        %3165 = vst.msk [vmem:[#allocation4 + $0x60] sm:$0xff] %vm3158, %v3154
        %3166 = vst.msk [vmem:[#allocation4 + $0x70] sm:$0xff] %vm3158, %v3156
        %s3167 = scalar_lea.vmem [#allocation4], 304
        %3168 = vst.msk [vmem:[%s3167] sm:$0xff] %vm3158, %v3143
        %3169 = vst.msk [vmem:[%s3167 + $0x10] sm:$0xff] %vm3158, %v3145
        %3170 = vst.msk [vmem:[%s3167 + $0x20] sm:$0xff] %vm3158, %v3147
        %3171 = vst.msk [vmem:[%s3167 + $0x30] sm:$0xff] %vm3158, %v3149
        %3172 = vst.msk [vmem:[%s3167 + $0x40] sm:$0xff] %vm3158, %v3151
        %3173 = vst.msk [vmem:[%s3167 + $0x50] sm:$0xff] %vm3158, %v3153
        %3174 = vst.msk [vmem:[%s3167 + $0x60] sm:$0xff] %vm3158, %v3155
        %3175 = vst.msk [vmem:[%s3167 + $0x70] sm:$0xff] %vm3158, %v3157
        %v3176 = vld [vmem:[%s2434] sm:$0xff]
        %v3177 = vld [vmem:[%s2434 + $0x10] sm:$0xff]
        %v3178 = vld [vmem:[%s2434 + $0x20] sm:$0xff]
        %v3179 = vld [vmem:[%s2434 + $0x30] sm:$0xff]
        %v3180 = vld [vmem:[%s2434 + $0x40] sm:$0xff]
        %v3181 = vld [vmem:[%s2434 + $0x50] sm:$0xff]
        %v3182 = vld [vmem:[%s2434 + $0x60] sm:$0xff]
        %v3183 = vld [vmem:[%s2434 + $0x70] sm:$0xff]
        %v3184 = vld [vmem:[%s2434 + $0x80] sm:$0xff]
        %v3185 = vld [vmem:[%s2434 + $0x90] sm:$0xff]
        %v3186 = vld [vmem:[%s2434 + $0xa0] sm:$0xff]
        %v3187 = vld [vmem:[%s2434 + $0xb0] sm:$0xff]
        %v3188 = vld [vmem:[%s2434 + $0xc0] sm:$0xff]
        %v3189 = vld [vmem:[%s2434 + $0xd0] sm:$0xff]
        %v3190 = vld [vmem:[%s2434 + $0xe0] sm:$0xff]
        %v3191 = vld [vmem:[%s2434 + $0xf0] sm:$0xff]
        %v3192 = vpack.c.bf16 %v3177, %v3176
        %v3193 = vpack.c.bf16 %v3179, %v3178
        %v3194 = vpack.c.bf16 %v3181, %v3180
        %v3195 = vpack.c.bf16 %v3183, %v3182
        %v3196 = vpack.c.bf16 %v3185, %v3184
        %v3197 = vpack.c.bf16 %v3187, %v3186
        %v3198 = vpack.c.bf16 %v3189, %v3188
        %v3199 = vpack.c.bf16 %v3191, %v3190
        %v3200 = vld [vmem:[%s5] sm:$0xf]
        %v3201 = vld [vmem:[#allocation3 + $0x1] sm:$0xff]
        %v3202 = vld [vmem:[#allocation3 + $0x11] sm:$0xff]
        %v3203 = vld [vmem:[#allocation3 + $0x21] sm:$0xff]
        %v3204 = vld [vmem:[#allocation3 + $0x31] sm:$0xff]
        %v3205 = vld [vmem:[#allocation3 + $0x41] sm:$0xff]
        %v3206 = vld [vmem:[#allocation3 + $0x51] sm:$0xff]
        %v3207 = vld [vmem:[#allocation3 + $0x61] sm:$0xff]
        %v3208 = vld [vmem:[#allocation3 + $0x71] sm:$0xff]
        %v3209 = vld [vmem:[#allocation3 + $0x81] sm:$0xff]
        %v3210 = vld [vmem:[#allocation3 + $0x91] sm:$0xff]
        %v3211 = vld [vmem:[#allocation3 + $0xa1] sm:$0xff]
        %v3212 = vld [vmem:[#allocation3 + $0xb1] sm:$0xff]
        %v3213 = vld [vmem:[#allocation3 + $0xc1] sm:$0xff]
        %v3214 = vld [vmem:[#allocation3 + $0xd1] sm:$0xff]
        %v3215 = vld [vmem:[#allocation3 + $0xe1] sm:$0xff]
        %v3216 = vld [vmem:[#allocation3 + $0xf1] sm:$0xff]
        %v3217 = vpack.c.bf16 %v3202, %v3201
        %v3218 = vpack.c.bf16 %v3204, %v3203
        %v3219 = vpack.c.bf16 %v3206, %v3205
        %v3220 = vpack.c.bf16 %v3208, %v3207
        %v3221 = vpack.c.bf16 %v3210, %v3209
        %v3222 = vpack.c.bf16 %v3212, %v3211
        %v3223 = vpack.c.bf16 %v3214, %v3213
        %v3224 = vpack.c.bf16 %v3216, %v3215
        %v3225 = vld [vmem:[%s5 + $0x4] sm:$0xf]
        %v3227 = vsel %vm1929, %v3217, 0
        %v3230 = vsel %vm1929, %v3218, 0
        %v3233 = vsel %vm1929, %v3219, 0
        %v3236 = vsel %vm1929, %v3220, 0
        %v3239 = vsel %vm1929, %v3221, 0
        %v3242 = vsel %vm1929, %v3222, 0
        %v3245 = vsel %vm1929, %v3223, 0
        %v3248 = vsel %vm1929, %v3224, 0
        %v3251 = vsel %vm2565, %v3225, 0
        %3253 = vmatpush.bf16.msra.mxu0 0
        %3254 = vmatpush.bf16.msra.mxu0 0
        %3255 = vmatpush.bf16.msra.mxu0 0
        %3256 = vmatpush.bf16.msra.mxu0 0
        %3257 = vmatpush.bf16.msra.mxu0 0
        %3258 = vmatpush.bf16.msra.mxu0 0
        %3259 = vmatpush.bf16.msra.mxu0 0
        %3260 = vmatpush.bf16.msra.mxu0 %v3251
        %3261 = vmatmul.bf16.gmra.mxu0 %v3227
        %v3262 = vpop.f32.mrf.mxu0
        %v3263 = vadd.f32 0.0, %v3262
        %v3264 = vpop.f32.mrf.mxu0
        %v3265 = vadd.f32 0.0, %v3264
        %3266 = vmatmul.bf16.gmra.mxu0 %v3230
        %v3267 = vpop.f32.mrf.mxu0
        %v3268 = vadd.f32 0.0, %v3267
        %v3269 = vpop.f32.mrf.mxu0
        %v3270 = vadd.f32 0.0, %v3269
        %3271 = vmatmul.bf16.gmra.mxu0 %v3233
        %v3272 = vpop.f32.mrf.mxu0
        %v3273 = vadd.f32 0.0, %v3272
        %v3274 = vpop.f32.mrf.mxu0
        %v3275 = vadd.f32 0.0, %v3274
        %3276 = vmatmul.bf16.gmra.mxu0 %v3236
        %v3277 = vpop.f32.mrf.mxu0
        %v3278 = vadd.f32 0.0, %v3277
        %v3279 = vpop.f32.mrf.mxu0
        %v3280 = vadd.f32 0.0, %v3279
        %3281 = vmatmul.bf16.gmra.mxu0 %v3239
        %v3282 = vpop.f32.mrf.mxu0
        %v3283 = vadd.f32 0.0, %v3282
        %v3284 = vpop.f32.mrf.mxu0
        %v3285 = vadd.f32 0.0, %v3284
        %3286 = vmatmul.bf16.gmra.mxu0 %v3242
        %v3287 = vpop.f32.mrf.mxu0
        %v3288 = vadd.f32 0.0, %v3287
        %v3289 = vpop.f32.mrf.mxu0
        %v3290 = vadd.f32 0.0, %v3289
        %3291 = vmatmul.bf16.gmra.mxu0 %v3245
        %v3292 = vpop.f32.mrf.mxu0
        %v3293 = vadd.f32 0.0, %v3292
        %v3294 = vpop.f32.mrf.mxu0
        %v3295 = vadd.f32 0.0, %v3294
        %3296 = vmatmul.bf16.gmra.mxu0 %v3248
        %v3297 = vpop.f32.mrf.mxu0
        %v3298 = vadd.f32 0.0, %v3297
        %v3299 = vpop.f32.mrf.mxu0
        %v3300 = vadd.f32 0.0, %v3299
        %3301 = vdwg.mxu0
        %v3303 = vsel %vm1929, %v3192, 0
        %v3306 = vsel %vm1929, %v3193, 0
        %v3309 = vsel %vm1929, %v3194, 0
        %v3312 = vsel %vm1929, %v3195, 0
        %v3315 = vsel %vm1929, %v3196, 0
        %v3318 = vsel %vm1929, %v3197, 0
        %v3321 = vsel %vm1929, %v3198, 0
        %v3324 = vsel %vm1929, %v3199, 0
        %v3327 = vsel %vm2565, %v3200, 0
        %3329 = vmatpush.bf16.msra.mxu0 0
        %3330 = vmatpush.bf16.msra.mxu0 0
        %3331 = vmatpush.bf16.msra.mxu0 0
        %3332 = vmatpush.bf16.msra.mxu0 0
        %3333 = vmatpush.bf16.msra.mxu0 0
        %3334 = vmatpush.bf16.msra.mxu0 0
        %3335 = vmatpush.bf16.msra.mxu0 0
        %3336 = vmatpush.bf16.msra.mxu0 %v3327
        %3337 = vmatmul.bf16.gmra.mxu0 %v3303
        %v3338 = vpop.f32.mrf.mxu0
        %v3339 = vadd.f32 %v3263, %v3338
        %v3340 = vpop.f32.mrf.mxu0
        %v3341 = vadd.f32 %v3265, %v3340
        %3342 = vmatmul.bf16.gmra.mxu0 %v3306
        %v3343 = vpop.f32.mrf.mxu0
        %v3344 = vadd.f32 %v3268, %v3343
        %v3345 = vpop.f32.mrf.mxu0
        %v3346 = vadd.f32 %v3270, %v3345
        %3347 = vmatmul.bf16.gmra.mxu0 %v3309
        %v3348 = vpop.f32.mrf.mxu0
        %v3349 = vadd.f32 %v3273, %v3348
        %v3350 = vpop.f32.mrf.mxu0
        %v3351 = vadd.f32 %v3275, %v3350
        %3352 = vmatmul.bf16.gmra.mxu0 %v3312
        %v3353 = vpop.f32.mrf.mxu0
        %v3354 = vadd.f32 %v3278, %v3353
        %v3355 = vpop.f32.mrf.mxu0
        %v3356 = vadd.f32 %v3280, %v3355
        %3357 = vmatmul.bf16.gmra.mxu0 %v3315
        %v3358 = vpop.f32.mrf.mxu0
        %v3359 = vadd.f32 %v3283, %v3358
        %v3360 = vpop.f32.mrf.mxu0
        %v3361 = vadd.f32 %v3285, %v3360
        %3362 = vmatmul.bf16.gmra.mxu0 %v3318
        %v3363 = vpop.f32.mrf.mxu0
        %v3364 = vadd.f32 %v3288, %v3363
        %v3365 = vpop.f32.mrf.mxu0
        %v3366 = vadd.f32 %v3290, %v3365
        %3367 = vmatmul.bf16.gmra.mxu0 %v3321
        %v3368 = vpop.f32.mrf.mxu0
        %v3369 = vadd.f32 %v3293, %v3368
        %v3370 = vpop.f32.mrf.mxu0
        %v3371 = vadd.f32 %v3295, %v3370
        %3372 = vmatmul.bf16.gmra.mxu0 %v3324
        %v3373 = vpop.f32.mrf.mxu0
        %v3374 = vadd.f32 %v3298, %v3373
        %v3375 = vpop.f32.mrf.mxu0
        %v3376 = vadd.f32 %v3300, %v3375
        %3377 = vdwg.mxu0
        %v3378 = vld [vmem:[%s2812] sm:$0xff]
        %v3379 = vld [vmem:[%s2812 + $0x10] sm:$0xff]
        %v3380 = vld [vmem:[%s2812 + $0x20] sm:$0xff]
        %v3381 = vld [vmem:[%s2812 + $0x30] sm:$0xff]
        %v3382 = vld [vmem:[%s2812 + $0x40] sm:$0xff]
        %v3383 = vld [vmem:[%s2812 + $0x50] sm:$0xff]
        %v3384 = vld [vmem:[%s2812 + $0x60] sm:$0xff]
        %v3385 = vld [vmem:[%s2812 + $0x70] sm:$0xff]
        %v3386 = vld [vmem:[%s2812 + $0x80] sm:$0xff]
        %v3387 = vld [vmem:[%s2812 + $0x90] sm:$0xff]
        %v3388 = vld [vmem:[%s2812 + $0xa0] sm:$0xff]
        %v3389 = vld [vmem:[%s2812 + $0xb0] sm:$0xff]
        %v3390 = vld [vmem:[%s2812 + $0xc0] sm:$0xff]
        %v3391 = vld [vmem:[%s2812 + $0xd0] sm:$0xff]
        %v3392 = vld [vmem:[%s2812 + $0xe0] sm:$0xff]
        %v3393 = vld [vmem:[%s2812 + $0xf0] sm:$0xff]
        %v3394 = vpack.c.bf16 %v3379, %v3378
        %v3395 = vpack.c.bf16 %v3381, %v3380
        %v3396 = vpack.c.bf16 %v3383, %v3382
        %v3397 = vpack.c.bf16 %v3385, %v3384
        %v3398 = vpack.c.bf16 %v3387, %v3386
        %v3399 = vpack.c.bf16 %v3389, %v3388
        %v3400 = vpack.c.bf16 %v3391, %v3390
        %v3401 = vpack.c.bf16 %v3393, %v3392
        %v3402 = vld [vmem:[%s5 + $0x8] sm:$0xf]
        %v3404 = vsel %vm1929, %v3394, 0
        %v3407 = vsel %vm1929, %v3395, 0
        %v3410 = vsel %vm1929, %v3396, 0
        %v3413 = vsel %vm1929, %v3397, 0
        %v3416 = vsel %vm1929, %v3398, 0
        %v3419 = vsel %vm1929, %v3399, 0
        %v3422 = vsel %vm1929, %v3400, 0
        %v3425 = vsel %vm1929, %v3401, 0
        %v3428 = vsel %vm2565, %v3402, 0
        %3430 = vmatpush.bf16.msra.mxu0 0
        %3431 = vmatpush.bf16.msra.mxu0 0
        %3432 = vmatpush.bf16.msra.mxu0 0
        %3433 = vmatpush.bf16.msra.mxu0 0
        %3434 = vmatpush.bf16.msra.mxu0 0
        %3435 = vmatpush.bf16.msra.mxu0 0
        %3436 = vmatpush.bf16.msra.mxu0 0
        %3437 = vmatpush.bf16.msra.mxu0 %v3428
        %3438 = vmatmul.bf16.gmra.mxu0 %v3404
        %v3439 = vpop.f32.mrf.mxu0
        %v3440 = vadd.f32 0.0, %v3439
        %v3441 = vpop.f32.mrf.mxu0
        %v3442 = vadd.f32 0.0, %v3441
        %3443 = vmatmul.bf16.gmra.mxu0 %v3407
        %v3444 = vpop.f32.mrf.mxu0
        %v3445 = vadd.f32 0.0, %v3444
        %v3446 = vpop.f32.mrf.mxu0
        %v3447 = vadd.f32 0.0, %v3446
        %3448 = vmatmul.bf16.gmra.mxu0 %v3410
        %v3449 = vpop.f32.mrf.mxu0
        %v3450 = vadd.f32 0.0, %v3449
        %v3451 = vpop.f32.mrf.mxu0
        %v3452 = vadd.f32 0.0, %v3451
        %3453 = vmatmul.bf16.gmra.mxu0 %v3413
        %v3454 = vpop.f32.mrf.mxu0
        %v3455 = vadd.f32 0.0, %v3454
        %v3456 = vpop.f32.mrf.mxu0
        %v3457 = vadd.f32 0.0, %v3456
        %3458 = vmatmul.bf16.gmra.mxu0 %v3416
        %v3459 = vpop.f32.mrf.mxu0
        %v3460 = vadd.f32 0.0, %v3459
        %v3461 = vpop.f32.mrf.mxu0
        %v3462 = vadd.f32 0.0, %v3461
        %3463 = vmatmul.bf16.gmra.mxu0 %v3419
        %v3464 = vpop.f32.mrf.mxu0
        %v3465 = vadd.f32 0.0, %v3464
        %v3466 = vpop.f32.mrf.mxu0
        %v3467 = vadd.f32 0.0, %v3466
        %3468 = vmatmul.bf16.gmra.mxu0 %v3422
        %v3469 = vpop.f32.mrf.mxu0
        %v3470 = vadd.f32 0.0, %v3469
        %v3471 = vpop.f32.mrf.mxu0
        %v3472 = vadd.f32 0.0, %v3471
        %3473 = vmatmul.bf16.gmra.mxu0 %v3425
        %v3474 = vpop.f32.mrf.mxu0
        %v3475 = vadd.f32 0.0, %v3474
        %v3476 = vpop.f32.mrf.mxu0
        %v3477 = vadd.f32 0.0, %v3476
        %3478 = vdwg.mxu0
        %v3479 = vadd.f32 %v3339, %v3440
        %v3480 = vadd.f32 %v3341, %v3442
        %v3481 = vadd.f32 %v3344, %v3445
        %v3482 = vadd.f32 %v3346, %v3447
        %v3483 = vadd.f32 %v3349, %v3450
        %v3484 = vadd.f32 %v3351, %v3452
        %v3485 = vadd.f32 %v3354, %v3455
        %v3486 = vadd.f32 %v3356, %v3457
        %v3487 = vadd.f32 %v3359, %v3460
        %v3488 = vadd.f32 %v3361, %v3462
        %v3489 = vadd.f32 %v3364, %v3465
        %v3490 = vadd.f32 %v3366, %v3467
        %v3491 = vadd.f32 %v3369, %v3470
        %v3492 = vadd.f32 %v3371, %v3472
        %v3493 = vadd.f32 %v3374, %v3475
        %v3494 = vadd.f32 %v3376, %v3477
        %v3495 = vld [vmem:[%s2694 + $0x1] sm:$0xff]
        %v3496 = vld [vmem:[%s2694 + $0x11] sm:$0xff]
        %v3497 = vld [vmem:[%s2694 + $0x21] sm:$0xff]
        %v3498 = vld [vmem:[%s2694 + $0x31] sm:$0xff]
        %v3499 = vld [vmem:[%s2694 + $0x41] sm:$0xff]
        %v3500 = vld [vmem:[%s2694 + $0x51] sm:$0xff]
        %v3501 = vld [vmem:[%s2694 + $0x61] sm:$0xff]
        %v3502 = vld [vmem:[%s2694 + $0x71] sm:$0xff]
        %v3503 = vld [vmem:[%s2694 + $0x81] sm:$0xff]
        %v3504 = vld [vmem:[%s2694 + $0x91] sm:$0xff]
        %v3505 = vld [vmem:[%s2694 + $0xa1] sm:$0xff]
        %v3506 = vld [vmem:[%s2694 + $0xb1] sm:$0xff]
        %v3507 = vld [vmem:[%s2694 + $0xc1] sm:$0xff]
        %v3508 = vld [vmem:[%s2694 + $0xd1] sm:$0xff]
        %v3509 = vld [vmem:[%s2694 + $0xe1] sm:$0xff]
        %v3510 = vld [vmem:[%s2694 + $0xf1] sm:$0xff]
        %v3511 = vpack.c.bf16 %v3496, %v3495
        %v3512 = vpack.c.bf16 %v3498, %v3497
        %v3513 = vpack.c.bf16 %v3500, %v3499
        %v3514 = vpack.c.bf16 %v3502, %v3501
        %v3515 = vpack.c.bf16 %v3504, %v3503
        %v3516 = vpack.c.bf16 %v3506, %v3505
        %v3517 = vpack.c.bf16 %v3508, %v3507
        %v3518 = vpack.c.bf16 %v3510, %v3509
        %v3519 = vld [vmem:[%s5 + $0xc] sm:$0xf]
        %v3521 = vsel %vm1929, %v3511, 0
        %v3524 = vsel %vm1929, %v3512, 0
        %v3527 = vsel %vm1929, %v3513, 0
        %v3530 = vsel %vm1929, %v3514, 0
        %v3533 = vsel %vm1929, %v3515, 0
        %v3536 = vsel %vm1929, %v3516, 0
        %v3539 = vsel %vm1929, %v3517, 0
        %v3542 = vsel %vm1929, %v3518, 0
        %v3545 = vsel %vm2565, %v3519, 0
        %3547 = vmatpush.bf16.msra.mxu0 0
        %3548 = vmatpush.bf16.msra.mxu0 0
        %3549 = vmatpush.bf16.msra.mxu0 0
        %3550 = vmatpush.bf16.msra.mxu0 0
        %3551 = vmatpush.bf16.msra.mxu0 0
        %3552 = vmatpush.bf16.msra.mxu0 0
        %3553 = vmatpush.bf16.msra.mxu0 0
        %3554 = vmatpush.bf16.msra.mxu0 %v3545
        %3555 = vmatmul.bf16.gmra.mxu0 %v3521
        %v3556 = vpop.f32.mrf.mxu0
        %v3557 = vadd.f32 0.0, %v3556
        %v3558 = vpop.f32.mrf.mxu0
        %v3559 = vadd.f32 0.0, %v3558
        %3560 = vmatmul.bf16.gmra.mxu0 %v3524
        %v3561 = vpop.f32.mrf.mxu0
        %v3562 = vadd.f32 0.0, %v3561
        %v3563 = vpop.f32.mrf.mxu0
        %v3564 = vadd.f32 0.0, %v3563
        %3565 = vmatmul.bf16.gmra.mxu0 %v3527
        %v3566 = vpop.f32.mrf.mxu0
        %v3567 = vadd.f32 0.0, %v3566
        %v3568 = vpop.f32.mrf.mxu0
        %v3569 = vadd.f32 0.0, %v3568
        %3570 = vmatmul.bf16.gmra.mxu0 %v3530
        %v3571 = vpop.f32.mrf.mxu0
        %v3572 = vadd.f32 0.0, %v3571
        %v3573 = vpop.f32.mrf.mxu0
        %v3574 = vadd.f32 0.0, %v3573
        %3575 = vmatmul.bf16.gmra.mxu0 %v3533
        %v3576 = vpop.f32.mrf.mxu0
        %v3577 = vadd.f32 0.0, %v3576
        %v3578 = vpop.f32.mrf.mxu0
        %v3579 = vadd.f32 0.0, %v3578
        %3580 = vmatmul.bf16.gmra.mxu0 %v3536
        %v3581 = vpop.f32.mrf.mxu0
        %v3582 = vadd.f32 0.0, %v3581
        %v3583 = vpop.f32.mrf.mxu0
        %v3584 = vadd.f32 0.0, %v3583
        %3585 = vmatmul.bf16.gmra.mxu0 %v3539
        %v3586 = vpop.f32.mrf.mxu0
        %v3587 = vadd.f32 0.0, %v3586
        %v3588 = vpop.f32.mrf.mxu0
        %v3589 = vadd.f32 0.0, %v3588
        %3590 = vmatmul.bf16.gmra.mxu0 %v3542
        %v3591 = vpop.f32.mrf.mxu0
        %v3592 = vadd.f32 0.0, %v3591
        %v3593 = vpop.f32.mrf.mxu0
        %v3594 = vadd.f32 0.0, %v3593
        %3595 = vdwg.mxu0
        %v3596 = vadd.f32 %v3479, %v3557
        %v3597 = vadd.f32 %v3480, %v3559
        %v3598 = vadd.f32 %v3481, %v3562
        %v3599 = vadd.f32 %v3482, %v3564
        %v3600 = vadd.f32 %v3483, %v3567
        %v3601 = vadd.f32 %v3484, %v3569
        %v3602 = vadd.f32 %v3485, %v3572
        %v3603 = vadd.f32 %v3486, %v3574
        %v3604 = vadd.f32 %v3487, %v3577
        %v3605 = vadd.f32 %v3488, %v3579
        %v3606 = vadd.f32 %v3489, %v3582
        %v3607 = vadd.f32 %v3490, %v3584
        %v3608 = vadd.f32 %v3491, %v3587
        %v3609 = vadd.f32 %v3492, %v3589
        %v3610 = vadd.f32 %v3493, %v3592
        %v3611 = vadd.f32 %v3494, %v3594
        %v3612 = vld [vmem:[%s6] sm:$0x1]
        %v3614 = vperm.slane %v3612, 0
        %v3616 = vadd.f32 %v3596, %v3614
        %v3617 = vadd.f32 %v3597, %v3614
        %v3618 = vadd.f32 %v3598, %v3614
        %v3619 = vadd.f32 %v3599, %v3614
        %v3620 = vadd.f32 %v3600, %v3614
        %v3621 = vadd.f32 %v3601, %v3614
        %v3622 = vadd.f32 %v3602, %v3614
        %v3623 = vadd.f32 %v3603, %v3614
        %v3624 = vadd.f32 %v3604, %v3614
        %v3625 = vadd.f32 %v3605, %v3614
        %v3626 = vadd.f32 %v3606, %v3614
        %v3627 = vadd.f32 %v3607, %v3614
        %v3628 = vadd.f32 %v3608, %v3614
        %v3629 = vadd.f32 %v3609, %v3614
        %v3630 = vadd.f32 %v3610, %v3614
        %v3631 = vadd.f32 %v3611, %v3614
        %v3632 = vmax.f32 %v3616, 0.0
        %v3633 = vmax.f32 %v3617, 0.0
        %v3634 = vmax.f32 %v3618, 0.0
        %v3635 = vmax.f32 %v3619, 0.0
        %v3636 = vmax.f32 %v3620, 0.0
        %v3637 = vmax.f32 %v3621, 0.0
        %v3638 = vmax.f32 %v3622, 0.0
        %v3639 = vmax.f32 %v3623, 0.0
        %v3640 = vmax.f32 %v3624, 0.0
        %v3641 = vmax.f32 %v3625, 0.0
        %v3642 = vmax.f32 %v3626, 0.0
        %v3643 = vmax.f32 %v3627, 0.0
        %v3644 = vmax.f32 %v3628, 0.0
        %v3645 = vmax.f32 %v3629, 0.0
        %v3646 = vmax.f32 %v3630, 0.0
        %v3647 = vmax.f32 %v3631, 0.0
        %v3648 = vld [vmem:[%s1382] sm:$0xff]
        %v3649 = vld [vmem:[%s1382 + $0x10] sm:$0xff]
        %v3650 = vld [vmem:[%s1382 + $0x20] sm:$0xff]
        %v3651 = vld [vmem:[%s1382 + $0x30] sm:$0xff]
        %v3652 = vld [vmem:[%s1382 + $0x40] sm:$0xff]
        %v3653 = vld [vmem:[%s1382 + $0x50] sm:$0xff]
        %v3654 = vld [vmem:[%s1382 + $0x60] sm:$0xff]
        %v3655 = vld [vmem:[%s1382 + $0x70] sm:$0xff]
        %v3656 = vld [vmem:[%s1382 + $0x80] sm:$0xff]
        %v3657 = vld [vmem:[%s1382 + $0x90] sm:$0xff]
        %v3658 = vld [vmem:[%s1382 + $0xa0] sm:$0xff]
        %v3659 = vld [vmem:[%s1382 + $0xb0] sm:$0xff]
        %v3660 = vld [vmem:[%s1382 + $0xc0] sm:$0xff]
        %v3661 = vld [vmem:[%s1382 + $0xd0] sm:$0xff]
        %v3662 = vld [vmem:[%s1382 + $0xe0] sm:$0xff]
        %v3663 = vld [vmem:[%s1382 + $0xf0] sm:$0xff]
        %v3664 = vld [vmem:[#allocation2 + $0x1] sm:$0xff]
        %v3665 = vld [vmem:[#allocation2 + $0x11] sm:$0xff]
        %v3666 = vld [vmem:[#allocation2 + $0x21] sm:$0xff]
        %v3667 = vld [vmem:[#allocation2 + $0x31] sm:$0xff]
        %v3668 = vld [vmem:[#allocation2 + $0x41] sm:$0xff]
        %v3669 = vld [vmem:[#allocation2 + $0x51] sm:$0xff]
        %v3670 = vld [vmem:[#allocation2 + $0x61] sm:$0xff]
        %v3671 = vld [vmem:[#allocation2 + $0x71] sm:$0xff]
        %v3672 = vld [vmem:[#allocation2 + $0x81] sm:$0xff]
        %v3673 = vld [vmem:[#allocation2 + $0x91] sm:$0xff]
        %v3674 = vld [vmem:[#allocation2 + $0xa1] sm:$0xff]
        %v3675 = vld [vmem:[#allocation2 + $0xb1] sm:$0xff]
        %v3676 = vld [vmem:[#allocation2 + $0xc1] sm:$0xff]
        %v3677 = vld [vmem:[#allocation2 + $0xd1] sm:$0xff]
        %v3678 = vld [vmem:[#allocation2 + $0xe1] sm:$0xff]
        %v3679 = vld [vmem:[#allocation2 + $0xf1] sm:$0xff]
        %v3680 = vmax.f32 %v3648, %v3664
        %v3681 = vmax.f32 %v3649, %v3665
        %v3682 = vmax.f32 %v3650, %v3666
        %v3683 = vmax.f32 %v3651, %v3667
        %v3684 = vmax.f32 %v3652, %v3668
        %v3685 = vmax.f32 %v3653, %v3669
        %v3686 = vmax.f32 %v3654, %v3670
        %v3687 = vmax.f32 %v3655, %v3671
        %v3688 = vmax.f32 %v3656, %v3672
        %v3689 = vmax.f32 %v3657, %v3673
        %v3690 = vmax.f32 %v3658, %v3674
        %v3691 = vmax.f32 %v3659, %v3675
        %v3692 = vmax.f32 %v3660, %v3676
        %v3693 = vmax.f32 %v3661, %v3677
        %v3694 = vmax.f32 %v3662, %v3678
        %v3695 = vmax.f32 %v3663, %v3679
        %v3696 = vld [vmem:[%s1771] sm:$0xff]
        %v3697 = vld [vmem:[%s1771 + $0x10] sm:$0xff]
        %v3698 = vld [vmem:[%s1771 + $0x20] sm:$0xff]
        %v3699 = vld [vmem:[%s1771 + $0x30] sm:$0xff]
        %v3700 = vld [vmem:[%s1771 + $0x40] sm:$0xff]
        %v3701 = vld [vmem:[%s1771 + $0x50] sm:$0xff]
        %v3702 = vld [vmem:[%s1771 + $0x60] sm:$0xff]
        %v3703 = vld [vmem:[%s1771 + $0x70] sm:$0xff]
        %v3704 = vld [vmem:[%s1771 + $0x80] sm:$0xff]
        %v3705 = vld [vmem:[%s1771 + $0x90] sm:$0xff]
        %v3706 = vld [vmem:[%s1771 + $0xa0] sm:$0xff]
        %v3707 = vld [vmem:[%s1771 + $0xb0] sm:$0xff]
        %v3708 = vld [vmem:[%s1771 + $0xc0] sm:$0xff]
        %v3709 = vld [vmem:[%s1771 + $0xd0] sm:$0xff]
        %v3710 = vld [vmem:[%s1771 + $0xe0] sm:$0xff]
        %v3711 = vld [vmem:[%s1771 + $0xf0] sm:$0xff]
        %v3712 = vmax.f32 %v3680, %v3696
        %v3713 = vmax.f32 %v3681, %v3697
        %v3714 = vmax.f32 %v3682, %v3698
        %v3715 = vmax.f32 %v3683, %v3699
        %v3716 = vmax.f32 %v3684, %v3700
        %v3717 = vmax.f32 %v3685, %v3701
        %v3718 = vmax.f32 %v3686, %v3702
        %v3719 = vmax.f32 %v3687, %v3703
        %v3720 = vmax.f32 %v3688, %v3704
        %v3721 = vmax.f32 %v3689, %v3705
        %v3722 = vmax.f32 %v3690, %v3706
        %v3723 = vmax.f32 %v3691, %v3707
        %v3724 = vmax.f32 %v3692, %v3708
        %v3725 = vmax.f32 %v3693, %v3709
        %v3726 = vmax.f32 %v3694, %v3710
        %v3727 = vmax.f32 %v3695, %v3711
        %v3728 = vld [vmem:[%s1649 + $0x1] sm:$0xff]
        %v3729 = vld [vmem:[%s1649 + $0x11] sm:$0xff]
        %v3730 = vld [vmem:[%s1649 + $0x21] sm:$0xff]
        %v3731 = vld [vmem:[%s1649 + $0x31] sm:$0xff]
        %v3732 = vld [vmem:[%s1649 + $0x41] sm:$0xff]
        %v3733 = vld [vmem:[%s1649 + $0x51] sm:$0xff]
        %v3734 = vld [vmem:[%s1649 + $0x61] sm:$0xff]
        %v3735 = vld [vmem:[%s1649 + $0x71] sm:$0xff]
        %v3736 = vld [vmem:[%s1649 + $0x81] sm:$0xff]
        %v3737 = vld [vmem:[%s1649 + $0x91] sm:$0xff]
        %v3738 = vld [vmem:[%s1649 + $0xa1] sm:$0xff]
        %v3739 = vld [vmem:[%s1649 + $0xb1] sm:$0xff]
        %v3740 = vld [vmem:[%s1649 + $0xc1] sm:$0xff]
        %v3741 = vld [vmem:[%s1649 + $0xd1] sm:$0xff]
        %v3742 = vld [vmem:[%s1649 + $0xe1] sm:$0xff]
        %v3743 = vld [vmem:[%s1649 + $0xf1] sm:$0xff]
        %v3744 = vmax.f32 %v3712, %v3728
        %v3745 = vmax.f32 %v3713, %v3729
        %v3746 = vmax.f32 %v3714, %v3730
        %v3747 = vmax.f32 %v3715, %v3731
        %v3748 = vmax.f32 %v3716, %v3732
        %v3749 = vmax.f32 %v3717, %v3733
        %v3750 = vmax.f32 %v3718, %v3734
        %v3751 = vmax.f32 %v3719, %v3735
        %v3752 = vmax.f32 %v3720, %v3736
        %v3753 = vmax.f32 %v3721, %v3737
        %v3754 = vmax.f32 %v3722, %v3738
        %v3755 = vmax.f32 %v3723, %v3739
        %v3756 = vmax.f32 %v3724, %v3740
        %v3757 = vmax.f32 %v3725, %v3741
        %v3758 = vmax.f32 %v3726, %v3742
        %v3759 = vmax.f32 %v3727, %v3743
        %3776 = vrot.lane.b32.xlu0 %v3632, 16
        %v3777 = vpop.permute.xlu0 %3776
        %3778 = vrot.lane.b32.xlu0 %v3633, 16
        %v3779 = vpop.permute.xlu0 %3778
        %3780 = vrot.lane.b32.xlu0 %v3634, 16
        %v3781 = vpop.permute.xlu0 %3780
        %3782 = vrot.lane.b32.xlu0 %v3635, 16
        %v3783 = vpop.permute.xlu0 %3782
        %3784 = vrot.lane.b32.xlu0 %v3636, 16
        %v3785 = vpop.permute.xlu0 %3784
        %3786 = vrot.lane.b32.xlu0 %v3637, 16
        %v3787 = vpop.permute.xlu0 %3786
        %3788 = vrot.lane.b32.xlu0 %v3638, 16
        %v3789 = vpop.permute.xlu0 %3788
        %3790 = vrot.lane.b32.xlu0 %v3639, 16
        %v3791 = vpop.permute.xlu0 %3790
        %3792 = vrot.lane.b32.xlu0 %v3640, 16
        %v3793 = vpop.permute.xlu0 %3792
        %3794 = vrot.lane.b32.xlu0 %v3641, 16
        %v3795 = vpop.permute.xlu0 %3794
        %3796 = vrot.lane.b32.xlu0 %v3642, 16
        %v3797 = vpop.permute.xlu0 %3796
        %3798 = vrot.lane.b32.xlu0 %v3643, 16
        %v3799 = vpop.permute.xlu0 %3798
        %3800 = vrot.lane.b32.xlu0 %v3644, 16
        %v3801 = vpop.permute.xlu0 %3800
        %3802 = vrot.lane.b32.xlu0 %v3645, 16
        %v3803 = vpop.permute.xlu0 %3802
        %3804 = vrot.lane.b32.xlu0 %v3646, 16
        %v3805 = vpop.permute.xlu0 %3804
        %3806 = vrot.lane.b32.xlu0 %v3647, 16
        %v3807 = vpop.permute.xlu0 %3806
        %v3824 = vsel %vm445, %v3744, %v3777
        %v3825 = vsel %vm445, %v3745, %v3779
        %v3826 = vsel %vm445, %v3746, %v3781
        %v3827 = vsel %vm445, %v3747, %v3783
        %v3828 = vsel %vm445, %v3748, %v3785
        %v3829 = vsel %vm445, %v3749, %v3787
        %v3830 = vsel %vm445, %v3750, %v3789
        %v3831 = vsel %vm445, %v3751, %v3791
        %v3832 = vsel %vm445, %v3752, %v3793
        %v3833 = vsel %vm445, %v3753, %v3795
        %v3834 = vsel %vm445, %v3754, %v3797
        %v3835 = vsel %vm445, %v3755, %v3799
        %v3836 = vsel %vm445, %v3756, %v3801
        %v3837 = vsel %vm445, %v3757, %v3803
        %v3838 = vsel %vm445, %v3758, %v3805
        %v3839 = vsel %vm445, %v3759, %v3807
        %s3840 = scalar_lea.vmem [#allocation4], 144
        %3841 = vst.msk [vmem:[%s3840 + $0x1] sm:$0xff] %vm3158, %v3824
        %3842 = vst.msk [vmem:[%s3840 + $0x11] sm:$0xff] %vm3158, %v3826
        %3843 = vst.msk [vmem:[%s3840 + $0x21] sm:$0xff] %vm3158, %v3828
        %3844 = vst.msk [vmem:[%s3840 + $0x31] sm:$0xff] %vm3158, %v3830
        %3845 = vst.msk [vmem:[%s3840 + $0x41] sm:$0xff] %vm3158, %v3832
        %3846 = vst.msk [vmem:[%s3840 + $0x51] sm:$0xff] %vm3158, %v3834
        %3847 = vst.msk [vmem:[%s3840 + $0x61] sm:$0xff] %vm3158, %v3836
        %3848 = vst.msk [vmem:[%s3840 + $0x71] sm:$0xff] %vm3158, %v3838
        %s3849 = scalar_lea.vmem [#allocation4], 448
        %3850 = vst.msk [vmem:[%s3849 + $0x1] sm:$0xff] %vm3158, %v3825
        %3851 = vst.msk [vmem:[%s3849 + $0x11] sm:$0xff] %vm3158, %v3827
        %3852 = vst.msk [vmem:[%s3849 + $0x21] sm:$0xff] %vm3158, %v3829
        %3853 = vst.msk [vmem:[%s3849 + $0x31] sm:$0xff] %vm3158, %v3831
        %3854 = vst.msk [vmem:[%s3849 + $0x41] sm:$0xff] %vm3158, %v3833
        %3855 = vst.msk [vmem:[%s3849 + $0x51] sm:$0xff] %vm3158, %v3835
        %3856 = vst.msk [vmem:[%s3849 + $0x61] sm:$0xff] %vm3158, %v3837
        %3857 = vst.msk [vmem:[%s3849 + $0x71] sm:$0xff] %vm3158, %v3839
        %s3858 = scalar_lea.vmem [#allocation4], 288
        %3859 = vst.msk [vmem:[%s3858] sm:$0xff] %vm3158, 0.0
        %vm3860 = vcmask 253952
        %3861 = vst.msk [vmem:[%s3858 + $0x8] sm:$0x1] %vm3860, 0.0
        %3862 = vst.msk [vmem:[%s3858 + $0x90] sm:$0xff] %vm3158, 0.0
        %3863 = vst.msk [vmem:[%s3858 + $0x98] sm:$0x1] %vm3860, 0.0
        %3864 = vst.msk [vmem:[%s3840] sm:$0x1] %vm3860, 0.0
        %3865 = vst.msk [vmem:[%s3840 + $0x10] sm:$0x1] %vm3860, 0.0
        %3866 = vst.msk [vmem:[%s3840 + $0x20] sm:$0x1] %vm3860, 0.0
        %3867 = vst.msk [vmem:[%s3840 + $0x30] sm:$0x1] %vm3860, 0.0
        %3868 = vst.msk [vmem:[%s3840 + $0x40] sm:$0x1] %vm3860, 0.0
        %3869 = vst.msk [vmem:[%s3840 + $0x50] sm:$0x1] %vm3860, 0.0
        %3870 = vst.msk [vmem:[%s3840 + $0x60] sm:$0x1] %vm3860, 0.0
        %3871 = vst.msk [vmem:[%s3840 + $0x70] sm:$0x1] %vm3860, 0.0
        %3872 = vst.msk [vmem:[%s3840 + $0x80] sm:$0x1] %vm3860, 0.0
        %s3873 = scalar_lea.vmem [#allocation4], 432
        %3874 = vst.msk [vmem:[%s3873] sm:$0x1] %vm3860, 0.0
        %3875 = vst.msk [vmem:[%s3873 + $0x10] sm:$0x1] %vm3860, 0.0
        %3876 = vst.msk [vmem:[%s3873 + $0x20] sm:$0x1] %vm3860, 0.0
        %3877 = vst.msk [vmem:[%s3873 + $0x30] sm:$0x1] %vm3860, 0.0
        %3878 = vst.msk [vmem:[%s3873 + $0x40] sm:$0x1] %vm3860, 0.0
        %3879 = vst.msk [vmem:[%s3873 + $0x50] sm:$0x1] %vm3860, 0.0
        %3880 = vst.msk [vmem:[%s3873 + $0x60] sm:$0x1] %vm3860, 0.0
        %3881 = vst.msk [vmem:[%s3873 + $0x70] sm:$0x1] %vm3860, 0.0
        %3882 = vst.msk [vmem:[%s3873 + $0x80] sm:$0x1] %vm3860, 0.0
        %v3883 = vld [vmem:[%s3873] sm:$0xff]
        %v3884 = vld [vmem:[%s3873 + $0x10] sm:$0xff]
        %v3885 = vld [vmem:[%s3873 + $0x20] sm:$0xff]
        %v3886 = vld [vmem:[%s3873 + $0x30] sm:$0xff]
        %v3887 = vld [vmem:[%s3873 + $0x40] sm:$0xff]
        %v3888 = vld [vmem:[%s3873 + $0x50] sm:$0xff]
        %v3889 = vld [vmem:[%s3873 + $0x60] sm:$0xff]
        %v3890 = vld [vmem:[%s3873 + $0x70] sm:$0xff]
        %v3891 = vpack.c.bf16 %v3884, %v3883
        %v3892 = vpack.c.bf16 %v3886, %v3885
        %v3893 = vpack.c.bf16 %v3888, %v3887
        %v3894 = vpack.c.bf16 %v3890, %v3889
        %v3895 = vld [vmem:[%s7] sm:$0xf]
        %v3896 = vld [vmem:[%s7 + $0x4] sm:$0xf]
        %v3897 = vld [vmem:[%s7 + $0x8] sm:$0xf]
        %v3898 = vld [vmem:[%s7 + $0xc] sm:$0xf]
        %v3899 = vld [vmem:[%s3858] sm:$0xff]
        %v3900 = vld [vmem:[%s3858 + $0x10] sm:$0xff]
        %v3901 = vld [vmem:[%s3858 + $0x20] sm:$0xff]
        %v3902 = vld [vmem:[%s3858 + $0x30] sm:$0xff]
        %v3903 = vld [vmem:[%s3858 + $0x40] sm:$0xff]
        %v3904 = vld [vmem:[%s3858 + $0x50] sm:$0xff]
        %v3905 = vld [vmem:[%s3858 + $0x60] sm:$0xff]
        %v3906 = vld [vmem:[%s3858 + $0x70] sm:$0xff]
        %v3907 = vpack.c.bf16 %v3900, %v3899
        %v3908 = vpack.c.bf16 %v3902, %v3901
        %v3909 = vpack.c.bf16 %v3904, %v3903
        %v3910 = vpack.c.bf16 %v3906, %v3905
        %v3911 = vld [vmem:[%s7 + $0x10] sm:$0xf]
        %v3912 = vld [vmem:[%s7 + $0x14] sm:$0xf]
        %v3913 = vld [vmem:[%s7 + $0x18] sm:$0xf]
        %v3914 = vld [vmem:[%s7 + $0x1c] sm:$0xf]
        %v3919 = vunpack.c.l.b16 %v3911
        %v3920 = vunpack.c.l.b16 %v3912
        %v3921 = vunpack.c.l.b16 %v3913
        %v3922 = vunpack.c.l.b16 %v3914
        %v3923 = vpack.c.b16 %v3920, %v3919
        %v3924 = vpack.c.b16 %v3922, %v3921
        %v3928 = vsel %vm3158, %v3907, 0
        %v3931 = vsel %vm3158, %v3908, 0
        %v3934 = vsel %vm3158, %v3909, 0
        %v3937 = vsel %vm3158, %v3910, 0
        %3939 = vmatpush.bf16.msra.mxu0 0
        %3940 = vmatpush.bf16.msra.mxu0 0
        %3941 = vmatpush.bf16.msra.mxu0 0
        %3942 = vmatpush.bf16.msra.mxu0 0
        %3943 = vmatpush.bf16.msra.mxu0 0
        %3944 = vmatpush.bf16.msra.mxu0 0
        %3945 = vmatpush.bf16.msra.mxu0 %v3924
        %3946 = vmatpush.bf16.msra.mxu0 %v3923
        %3947 = vmatmul.bf16.gmra.mxu0 %v3928
        %v3948 = vpop.f32.mrf.mxu0
        %v3949 = vadd.f32 0.0, %v3948
        %v3950 = vpop.f32.mrf.mxu0
        %v3951 = vadd.f32 0.0, %v3950
        %3952 = vmatmul.bf16.gmra.mxu0 %v3931
        %v3953 = vpop.f32.mrf.mxu0
        %v3954 = vadd.f32 0.0, %v3953
        %v3955 = vpop.f32.mrf.mxu0
        %v3956 = vadd.f32 0.0, %v3955
        %3957 = vmatmul.bf16.gmra.mxu0 %v3934
        %v3958 = vpop.f32.mrf.mxu0
        %v3959 = vadd.f32 0.0, %v3958
        %v3960 = vpop.f32.mrf.mxu0
        %v3961 = vadd.f32 0.0, %v3960
        %3962 = vmatmul.bf16.gmra.mxu0 %v3937
        %v3963 = vpop.f32.mrf.mxu0
        %v3964 = vadd.f32 0.0, %v3963
        %v3965 = vpop.f32.mrf.mxu0
        %v3966 = vadd.f32 0.0, %v3965
        %3967 = vdwg.mxu0
        %v3972 = vunpack.c.l.b16 %v3895
        %v3973 = vunpack.c.l.b16 %v3896
        %v3974 = vunpack.c.l.b16 %v3897
        %v3975 = vunpack.c.l.b16 %v3898
        %v3976 = vpack.c.b16 %v3973, %v3972
        %v3977 = vpack.c.b16 %v3975, %v3974
        %v3981 = vsel %vm3158, %v3891, 0
        %v3984 = vsel %vm3158, %v3892, 0
        %v3987 = vsel %vm3158, %v3893, 0
        %v3990 = vsel %vm3158, %v3894, 0
        %3992 = vmatpush.bf16.msra.mxu0 0
        %3993 = vmatpush.bf16.msra.mxu0 0
        %3994 = vmatpush.bf16.msra.mxu0 0
        %3995 = vmatpush.bf16.msra.mxu0 0
        %3996 = vmatpush.bf16.msra.mxu0 0
        %3997 = vmatpush.bf16.msra.mxu0 0
        %3998 = vmatpush.bf16.msra.mxu0 %v3977
        %3999 = vmatpush.bf16.msra.mxu0 %v3976
        %4000 = vmatmul.bf16.gmra.mxu0 %v3981
        %v4001 = vpop.f32.mrf.mxu0
        %v4002 = vadd.f32 %v3949, %v4001
        %v4003 = vpop.f32.mrf.mxu0
        %v4004 = vadd.f32 %v3951, %v4003
        %4005 = vmatmul.bf16.gmra.mxu0 %v3984
        %v4006 = vpop.f32.mrf.mxu0
        %v4007 = vadd.f32 %v3954, %v4006
        %v4008 = vpop.f32.mrf.mxu0
        %v4009 = vadd.f32 %v3956, %v4008
        %4010 = vmatmul.bf16.gmra.mxu0 %v3987
        %v4011 = vpop.f32.mrf.mxu0
        %v4012 = vadd.f32 %v3959, %v4011
        %v4013 = vpop.f32.mrf.mxu0
        %v4014 = vadd.f32 %v3961, %v4013
        %4015 = vmatmul.bf16.gmra.mxu0 %v3990
        %v4016 = vpop.f32.mrf.mxu0
        %v4017 = vadd.f32 %v3964, %v4016
        %v4018 = vpop.f32.mrf.mxu0
        %v4019 = vadd.f32 %v3966, %v4018
        %4020 = vdwg.mxu0
        %v4021 = vld [vmem:[%s3873 + $0x1] sm:$0xff]
        %v4022 = vld [vmem:[%s3873 + $0x11] sm:$0xff]
        %v4023 = vld [vmem:[%s3873 + $0x21] sm:$0xff]
        %v4024 = vld [vmem:[%s3873 + $0x31] sm:$0xff]
        %v4025 = vld [vmem:[%s3873 + $0x41] sm:$0xff]
        %v4026 = vld [vmem:[%s3873 + $0x51] sm:$0xff]
        %v4027 = vld [vmem:[%s3873 + $0x61] sm:$0xff]
        %v4028 = vld [vmem:[%s3873 + $0x71] sm:$0xff]
        %v4029 = vpack.c.bf16 %v4022, %v4021
        %v4030 = vpack.c.bf16 %v4024, %v4023
        %v4031 = vpack.c.bf16 %v4026, %v4025
        %v4032 = vpack.c.bf16 %v4028, %v4027
        %v4033 = vld [vmem:[%s7 + $0x20] sm:$0xf]
        %v4034 = vld [vmem:[%s7 + $0x24] sm:$0xf]
        %v4035 = vld [vmem:[%s7 + $0x28] sm:$0xf]
        %v4036 = vld [vmem:[%s7 + $0x2c] sm:$0xf]
        %v4041 = vunpack.c.l.b16 %v4033
        %v4042 = vunpack.c.l.b16 %v4034
        %v4043 = vunpack.c.l.b16 %v4035
        %v4044 = vunpack.c.l.b16 %v4036
        %v4045 = vpack.c.b16 %v4042, %v4041
        %v4046 = vpack.c.b16 %v4044, %v4043
        %v4050 = vsel %vm3158, %v4029, 0
        %v4053 = vsel %vm3158, %v4030, 0
        %v4056 = vsel %vm3158, %v4031, 0
        %v4059 = vsel %vm3158, %v4032, 0
        %4061 = vmatpush.bf16.msra.mxu0 0
        %4062 = vmatpush.bf16.msra.mxu0 0
        %4063 = vmatpush.bf16.msra.mxu0 0
        %4064 = vmatpush.bf16.msra.mxu0 0
        %4065 = vmatpush.bf16.msra.mxu0 0
        %4066 = vmatpush.bf16.msra.mxu0 0
        %4067 = vmatpush.bf16.msra.mxu0 %v4046
        %4068 = vmatpush.bf16.msra.mxu0 %v4045
        %4069 = vmatmul.bf16.gmra.mxu0 %v4050
        %v4070 = vpop.f32.mrf.mxu0
        %v4071 = vadd.f32 0.0, %v4070
        %v4072 = vpop.f32.mrf.mxu0
        %v4073 = vadd.f32 0.0, %v4072
        %4074 = vmatmul.bf16.gmra.mxu0 %v4053
        %v4075 = vpop.f32.mrf.mxu0
        %v4076 = vadd.f32 0.0, %v4075
        %v4077 = vpop.f32.mrf.mxu0
        %v4078 = vadd.f32 0.0, %v4077
        %4079 = vmatmul.bf16.gmra.mxu0 %v4056
        %v4080 = vpop.f32.mrf.mxu0
        %v4081 = vadd.f32 0.0, %v4080
        %v4082 = vpop.f32.mrf.mxu0
        %v4083 = vadd.f32 0.0, %v4082
        %4084 = vmatmul.bf16.gmra.mxu0 %v4059
        %v4085 = vpop.f32.mrf.mxu0
        %v4086 = vadd.f32 0.0, %v4085
        %v4087 = vpop.f32.mrf.mxu0
        %v4088 = vadd.f32 0.0, %v4087
        %4089 = vdwg.mxu0
        %v4090 = vadd.f32 %v4002, %v4071
        %v4091 = vadd.f32 %v4004, %v4073
        %v4092 = vadd.f32 %v4007, %v4076
        %v4093 = vadd.f32 %v4009, %v4078
        %v4094 = vadd.f32 %v4012, %v4081
        %v4095 = vadd.f32 %v4014, %v4083
        %v4096 = vadd.f32 %v4017, %v4086
        %v4097 = vadd.f32 %v4019, %v4088
        %v4098 = vld [vmem:[%s3840] sm:$0xff]
        %v4099 = vld [vmem:[%s3840 + $0x10] sm:$0xff]
        %v4100 = vld [vmem:[%s3840 + $0x20] sm:$0xff]
        %v4101 = vld [vmem:[%s3840 + $0x30] sm:$0xff]
        %v4102 = vld [vmem:[%s3840 + $0x40] sm:$0xff]
        %v4103 = vld [vmem:[%s3840 + $0x50] sm:$0xff]
        %v4104 = vld [vmem:[%s3840 + $0x60] sm:$0xff]
        %v4105 = vld [vmem:[%s3840 + $0x70] sm:$0xff]
        %v4106 = vpack.c.bf16 %v4099, %v4098
        %v4107 = vpack.c.bf16 %v4101, %v4100
        %v4108 = vpack.c.bf16 %v4103, %v4102
        %v4109 = vpack.c.bf16 %v4105, %v4104
        %v4110 = vld [vmem:[%s7 + $0x30] sm:$0xf]
        %v4111 = vld [vmem:[%s7 + $0x34] sm:$0xf]
        %v4112 = vld [vmem:[%s7 + $0x38] sm:$0xf]
        %v4113 = vld [vmem:[%s7 + $0x3c] sm:$0xf]
        %v4118 = vunpack.c.l.b16 %v4110
        %v4119 = vunpack.c.l.b16 %v4111
        %v4120 = vunpack.c.l.b16 %v4112
        %v4121 = vunpack.c.l.b16 %v4113
        %v4122 = vpack.c.b16 %v4119, %v4118
        %v4123 = vpack.c.b16 %v4121, %v4120
        %v4127 = vsel %vm3158, %v4106, 0
        %v4130 = vsel %vm3158, %v4107, 0
        %v4133 = vsel %vm3158, %v4108, 0
        %v4136 = vsel %vm3158, %v4109, 0
        %4138 = vmatpush.bf16.msra.mxu0 0
        %4139 = vmatpush.bf16.msra.mxu0 0
        %4140 = vmatpush.bf16.msra.mxu0 0
        %4141 = vmatpush.bf16.msra.mxu0 0
        %4142 = vmatpush.bf16.msra.mxu0 0
        %4143 = vmatpush.bf16.msra.mxu0 0
        %4144 = vmatpush.bf16.msra.mxu0 %v4123
        %4145 = vmatpush.bf16.msra.mxu0 %v4122
        %4146 = vmatmul.bf16.gmra.mxu0 %v4127
        %v4147 = vpop.f32.mrf.mxu0
        %v4148 = vadd.f32 0.0, %v4147
        %v4149 = vpop.f32.mrf.mxu0
        %v4150 = vadd.f32 0.0, %v4149
        %4151 = vmatmul.bf16.gmra.mxu0 %v4130
        %v4152 = vpop.f32.mrf.mxu0
        %v4153 = vadd.f32 0.0, %v4152
        %v4154 = vpop.f32.mrf.mxu0
        %v4155 = vadd.f32 0.0, %v4154
        %4156 = vmatmul.bf16.gmra.mxu0 %v4133
        %v4157 = vpop.f32.mrf.mxu0
        %v4158 = vadd.f32 0.0, %v4157
        %v4159 = vpop.f32.mrf.mxu0
        %v4160 = vadd.f32 0.0, %v4159
        %4161 = vmatmul.bf16.gmra.mxu0 %v4136
        %v4162 = vpop.f32.mrf.mxu0
        %v4163 = vadd.f32 0.0, %v4162
        %v4164 = vpop.f32.mrf.mxu0
        %v4165 = vadd.f32 0.0, %v4164
        %4166 = vdwg.mxu0
        %v4167 = vadd.f32 %v4090, %v4148
        %v4168 = vadd.f32 %v4091, %v4150
        %v4169 = vadd.f32 %v4092, %v4153
        %v4170 = vadd.f32 %v4093, %v4155
        %v4171 = vadd.f32 %v4094, %v4158
        %v4172 = vadd.f32 %v4095, %v4160
        %v4173 = vadd.f32 %v4096, %v4163
        %v4174 = vadd.f32 %v4097, %v4165
        %v4175 = vld [vmem:[#allocation4] sm:$0xff]
        %v4176 = vld [vmem:[#allocation4 + $0x10] sm:$0xff]
        %v4177 = vld [vmem:[#allocation4 + $0x20] sm:$0xff]
        %v4178 = vld [vmem:[#allocation4 + $0x30] sm:$0xff]
        %v4179 = vld [vmem:[#allocation4 + $0x40] sm:$0xff]
        %v4180 = vld [vmem:[#allocation4 + $0x50] sm:$0xff]
        %v4181 = vld [vmem:[#allocation4 + $0x60] sm:$0xff]
        %v4182 = vld [vmem:[#allocation4 + $0x70] sm:$0xff]
        %v4183 = vpack.c.bf16 %v4176, %v4175
        %v4184 = vpack.c.bf16 %v4178, %v4177
        %v4185 = vpack.c.bf16 %v4180, %v4179
        %v4186 = vpack.c.bf16 %v4182, %v4181
        %v4187 = vld [vmem:[%s7 + $0x40] sm:$0xf]
        %v4188 = vld [vmem:[%s7 + $0x44] sm:$0xf]
        %v4189 = vld [vmem:[%s7 + $0x48] sm:$0xf]
        %v4190 = vld [vmem:[%s7 + $0x4c] sm:$0xf]
        %v4195 = vunpack.c.l.b16 %v4187
        %v4196 = vunpack.c.l.b16 %v4188
        %v4197 = vunpack.c.l.b16 %v4189
        %v4198 = vunpack.c.l.b16 %v4190
        %v4199 = vpack.c.b16 %v4196, %v4195
        %v4200 = vpack.c.b16 %v4198, %v4197
        %v4204 = vsel %vm3158, %v4183, 0
        %v4207 = vsel %vm3158, %v4184, 0
        %v4210 = vsel %vm3158, %v4185, 0
        %v4213 = vsel %vm3158, %v4186, 0
        %4215 = vmatpush.bf16.msra.mxu0 0
        %4216 = vmatpush.bf16.msra.mxu0 0
        %4217 = vmatpush.bf16.msra.mxu0 0
        %4218 = vmatpush.bf16.msra.mxu0 0
        %4219 = vmatpush.bf16.msra.mxu0 0
        %4220 = vmatpush.bf16.msra.mxu0 0
        %4221 = vmatpush.bf16.msra.mxu0 %v4200
        %4222 = vmatpush.bf16.msra.mxu0 %v4199
        %4223 = vmatmul.bf16.gmra.mxu0 %v4204
        %v4224 = vpop.f32.mrf.mxu0
        %v4225 = vadd.f32 0.0, %v4224
        %v4226 = vpop.f32.mrf.mxu0
        %v4227 = vadd.f32 0.0, %v4226
        %4228 = vmatmul.bf16.gmra.mxu0 %v4207
        %v4229 = vpop.f32.mrf.mxu0
        %v4230 = vadd.f32 0.0, %v4229
        %v4231 = vpop.f32.mrf.mxu0
        %v4232 = vadd.f32 0.0, %v4231
        %4233 = vmatmul.bf16.gmra.mxu0 %v4210
        %v4234 = vpop.f32.mrf.mxu0
        %v4235 = vadd.f32 0.0, %v4234
        %v4236 = vpop.f32.mrf.mxu0
        %v4237 = vadd.f32 0.0, %v4236
        %4238 = vmatmul.bf16.gmra.mxu0 %v4213
        %v4239 = vpop.f32.mrf.mxu0
        %v4240 = vadd.f32 0.0, %v4239
        %v4241 = vpop.f32.mrf.mxu0
        %v4242 = vadd.f32 0.0, %v4241
        %4243 = vdwg.mxu0
        %v4244 = vadd.f32 %v4167, %v4225
        %v4245 = vadd.f32 %v4168, %v4227
        %v4246 = vadd.f32 %v4169, %v4230
        %v4247 = vadd.f32 %v4170, %v4232
        %v4248 = vadd.f32 %v4171, %v4235
        %v4249 = vadd.f32 %v4172, %v4237
        %v4250 = vadd.f32 %v4173, %v4240
        %v4251 = vadd.f32 %v4174, %v4242
        %v4252 = vld [vmem:[%s3840 + $0x1] sm:$0xff]
        %v4253 = vld [vmem:[%s3840 + $0x11] sm:$0xff]
        %v4254 = vld [vmem:[%s3840 + $0x21] sm:$0xff]
        %v4255 = vld [vmem:[%s3840 + $0x31] sm:$0xff]
        %v4256 = vld [vmem:[%s3840 + $0x41] sm:$0xff]
        %v4257 = vld [vmem:[%s3840 + $0x51] sm:$0xff]
        %v4258 = vld [vmem:[%s3840 + $0x61] sm:$0xff]
        %v4259 = vld [vmem:[%s3840 + $0x71] sm:$0xff]
        %v4260 = vpack.c.bf16 %v4253, %v4252
        %v4261 = vpack.c.bf16 %v4255, %v4254
        %v4262 = vpack.c.bf16 %v4257, %v4256
        %v4263 = vpack.c.bf16 %v4259, %v4258
        %v4264 = vld [vmem:[%s7 + $0x50] sm:$0xf]
        %v4265 = vld [vmem:[%s7 + $0x54] sm:$0xf]
        %v4266 = vld [vmem:[%s7 + $0x58] sm:$0xf]
        %v4267 = vld [vmem:[%s7 + $0x5c] sm:$0xf]
        %v4272 = vunpack.c.l.b16 %v4264
        %v4273 = vunpack.c.l.b16 %v4265
        %v4274 = vunpack.c.l.b16 %v4266
        %v4275 = vunpack.c.l.b16 %v4267
        %v4276 = vpack.c.b16 %v4273, %v4272
        %v4277 = vpack.c.b16 %v4275, %v4274
        %v4281 = vsel %vm3158, %v4260, 0
        %v4284 = vsel %vm3158, %v4261, 0
        %v4287 = vsel %vm3158, %v4262, 0
        %v4290 = vsel %vm3158, %v4263, 0
        %4292 = vmatpush.bf16.msra.mxu0 0
        %4293 = vmatpush.bf16.msra.mxu0 0
        %4294 = vmatpush.bf16.msra.mxu0 0
        %4295 = vmatpush.bf16.msra.mxu0 0
        %4296 = vmatpush.bf16.msra.mxu0 0
        %4297 = vmatpush.bf16.msra.mxu0 0
        %4298 = vmatpush.bf16.msra.mxu0 %v4277
        %4299 = vmatpush.bf16.msra.mxu0 %v4276
        %4300 = vmatmul.bf16.gmra.mxu0 %v4281
        %v4301 = vpop.f32.mrf.mxu0
        %v4302 = vadd.f32 0.0, %v4301
        %v4303 = vpop.f32.mrf.mxu0
        %v4304 = vadd.f32 0.0, %v4303
        %4305 = vmatmul.bf16.gmra.mxu0 %v4284
        %v4306 = vpop.f32.mrf.mxu0
        %v4307 = vadd.f32 0.0, %v4306
        %v4308 = vpop.f32.mrf.mxu0
        %v4309 = vadd.f32 0.0, %v4308
        %4310 = vmatmul.bf16.gmra.mxu0 %v4287
        %v4311 = vpop.f32.mrf.mxu0
        %v4312 = vadd.f32 0.0, %v4311
        %v4313 = vpop.f32.mrf.mxu0
        %v4314 = vadd.f32 0.0, %v4313
        %4315 = vmatmul.bf16.gmra.mxu0 %v4290
        %v4316 = vpop.f32.mrf.mxu0
        %v4317 = vadd.f32 0.0, %v4316
        %v4318 = vpop.f32.mrf.mxu0
        %v4319 = vadd.f32 0.0, %v4318
        %4320 = vdwg.mxu0
        %v4321 = vadd.f32 %v4244, %v4302
        %v4322 = vadd.f32 %v4245, %v4304
        %v4323 = vadd.f32 %v4246, %v4307
        %v4324 = vadd.f32 %v4247, %v4309
        %v4325 = vadd.f32 %v4248, %v4312
        %v4326 = vadd.f32 %v4249, %v4314
        %v4327 = vadd.f32 %v4250, %v4317
        %v4328 = vadd.f32 %v4251, %v4319
        %v4329 = vld [vmem:[%s3849] sm:$0xff]
        %v4330 = vld [vmem:[%s3849 + $0x10] sm:$0xff]
        %v4331 = vld [vmem:[%s3849 + $0x20] sm:$0xff]
        %v4332 = vld [vmem:[%s3849 + $0x30] sm:$0xff]
        %v4333 = vld [vmem:[%s3849 + $0x40] sm:$0xff]
        %v4334 = vld [vmem:[%s3849 + $0x50] sm:$0xff]
        %v4335 = vld [vmem:[%s3849 + $0x60] sm:$0xff]
        %v4336 = vld [vmem:[%s3849 + $0x70] sm:$0xff]
        %v4337 = vpack.c.bf16 %v4330, %v4329
        %v4338 = vpack.c.bf16 %v4332, %v4331
        %v4339 = vpack.c.bf16 %v4334, %v4333
        %v4340 = vpack.c.bf16 %v4336, %v4335
        %v4341 = vld [vmem:[%s7 + $0x60] sm:$0xf]
        %v4342 = vld [vmem:[%s7 + $0x64] sm:$0xf]
        %v4343 = vld [vmem:[%s7 + $0x68] sm:$0xf]
        %v4344 = vld [vmem:[%s7 + $0x6c] sm:$0xf]
        %v4349 = vunpack.c.l.b16 %v4341
        %v4350 = vunpack.c.l.b16 %v4342
        %v4351 = vunpack.c.l.b16 %v4343
        %v4352 = vunpack.c.l.b16 %v4344
        %v4353 = vpack.c.b16 %v4350, %v4349
        %v4354 = vpack.c.b16 %v4352, %v4351
        %v4358 = vsel %vm3158, %v4337, 0
        %v4361 = vsel %vm3158, %v4338, 0
        %v4364 = vsel %vm3158, %v4339, 0
        %v4367 = vsel %vm3158, %v4340, 0
        %4369 = vmatpush.bf16.msra.mxu0 0
        %4370 = vmatpush.bf16.msra.mxu0 0
        %4371 = vmatpush.bf16.msra.mxu0 0
        %4372 = vmatpush.bf16.msra.mxu0 0
        %4373 = vmatpush.bf16.msra.mxu0 0
        %4374 = vmatpush.bf16.msra.mxu0 0
        %4375 = vmatpush.bf16.msra.mxu0 %v4354
        %4376 = vmatpush.bf16.msra.mxu0 %v4353
        %4377 = vmatmul.bf16.gmra.mxu0 %v4358
        %v4378 = vpop.f32.mrf.mxu0
        %v4379 = vadd.f32 0.0, %v4378
        %v4380 = vpop.f32.mrf.mxu0
        %v4381 = vadd.f32 0.0, %v4380
        %4382 = vmatmul.bf16.gmra.mxu0 %v4361
        %v4383 = vpop.f32.mrf.mxu0
        %v4384 = vadd.f32 0.0, %v4383
        %v4385 = vpop.f32.mrf.mxu0
        %v4386 = vadd.f32 0.0, %v4385
        %4387 = vmatmul.bf16.gmra.mxu0 %v4364
        %v4388 = vpop.f32.mrf.mxu0
        %v4389 = vadd.f32 0.0, %v4388
        %v4390 = vpop.f32.mrf.mxu0
        %v4391 = vadd.f32 0.0, %v4390
        %4392 = vmatmul.bf16.gmra.mxu0 %v4367
        %v4393 = vpop.f32.mrf.mxu0
        %v4394 = vadd.f32 0.0, %v4393
        %v4395 = vpop.f32.mrf.mxu0
        %v4396 = vadd.f32 0.0, %v4395
        %4397 = vdwg.mxu0
        %v4398 = vadd.f32 %v4321, %v4379
        %v4399 = vadd.f32 %v4322, %v4381
        %v4400 = vadd.f32 %v4323, %v4384
        %v4401 = vadd.f32 %v4324, %v4386
        %v4402 = vadd.f32 %v4325, %v4389
        %v4403 = vadd.f32 %v4326, %v4391
        %v4404 = vadd.f32 %v4327, %v4394
        %v4405 = vadd.f32 %v4328, %v4396
        %v4406 = vld [vmem:[%s3167] sm:$0xff]
        %v4407 = vld [vmem:[%s3167 + $0x10] sm:$0xff]
        %v4408 = vld [vmem:[%s3167 + $0x20] sm:$0xff]
        %v4409 = vld [vmem:[%s3167 + $0x30] sm:$0xff]
        %v4410 = vld [vmem:[%s3167 + $0x40] sm:$0xff]
        %v4411 = vld [vmem:[%s3167 + $0x50] sm:$0xff]
        %v4412 = vld [vmem:[%s3167 + $0x60] sm:$0xff]
        %v4413 = vld [vmem:[%s3167 + $0x70] sm:$0xff]
        %v4414 = vpack.c.bf16 %v4407, %v4406
        %v4415 = vpack.c.bf16 %v4409, %v4408
        %v4416 = vpack.c.bf16 %v4411, %v4410
        %v4417 = vpack.c.bf16 %v4413, %v4412
        %v4418 = vld [vmem:[%s7 + $0x70] sm:$0xf]
        %v4419 = vld [vmem:[%s7 + $0x74] sm:$0xf]
        %v4420 = vld [vmem:[%s7 + $0x78] sm:$0xf]
        %v4421 = vld [vmem:[%s7 + $0x7c] sm:$0xf]
        %v4426 = vunpack.c.l.b16 %v4418
        %v4427 = vunpack.c.l.b16 %v4419
        %v4428 = vunpack.c.l.b16 %v4420
        %v4429 = vunpack.c.l.b16 %v4421
        %v4430 = vpack.c.b16 %v4427, %v4426
        %v4431 = vpack.c.b16 %v4429, %v4428
        %v4435 = vsel %vm3158, %v4414, 0
        %v4438 = vsel %vm3158, %v4415, 0
        %v4441 = vsel %vm3158, %v4416, 0
        %v4444 = vsel %vm3158, %v4417, 0
        %4446 = vmatpush.bf16.msra.mxu0 0
        %4447 = vmatpush.bf16.msra.mxu0 0
        %4448 = vmatpush.bf16.msra.mxu0 0
        %4449 = vmatpush.bf16.msra.mxu0 0
        %4450 = vmatpush.bf16.msra.mxu0 0
        %4451 = vmatpush.bf16.msra.mxu0 0
        %4452 = vmatpush.bf16.msra.mxu0 %v4431
        %4453 = vmatpush.bf16.msra.mxu0 %v4430
        %4454 = vmatmul.bf16.gmra.mxu0 %v4435
        %v4455 = vpop.f32.mrf.mxu0
        %v4456 = vadd.f32 0.0, %v4455
        %v4457 = vpop.f32.mrf.mxu0
        %v4458 = vadd.f32 0.0, %v4457
        %4459 = vmatmul.bf16.gmra.mxu0 %v4438
        %v4460 = vpop.f32.mrf.mxu0
        %v4461 = vadd.f32 0.0, %v4460
        %v4462 = vpop.f32.mrf.mxu0
        %v4463 = vadd.f32 0.0, %v4462
        %4464 = vmatmul.bf16.gmra.mxu0 %v4441
        %v4465 = vpop.f32.mrf.mxu0
        %v4466 = vadd.f32 0.0, %v4465
        %v4467 = vpop.f32.mrf.mxu0
        %v4468 = vadd.f32 0.0, %v4467
        %4469 = vmatmul.bf16.gmra.mxu0 %v4444
        %v4470 = vpop.f32.mrf.mxu0
        %v4471 = vadd.f32 0.0, %v4470
        %v4472 = vpop.f32.mrf.mxu0
        %v4473 = vadd.f32 0.0, %v4472
        %4474 = vdwg.mxu0
        %v4475 = vadd.f32 %v4398, %v4456
        %v4476 = vadd.f32 %v4399, %v4458
        %v4477 = vadd.f32 %v4400, %v4461
        %v4478 = vadd.f32 %v4401, %v4463
        %v4479 = vadd.f32 %v4402, %v4466
        %v4480 = vadd.f32 %v4403, %v4468
        %v4481 = vadd.f32 %v4404, %v4471
        %v4482 = vadd.f32 %v4405, %v4473
        %v4483 = vld [vmem:[%s3849 + $0x1] sm:$0xff]
        %v4484 = vld [vmem:[%s3849 + $0x11] sm:$0xff]
        %v4485 = vld [vmem:[%s3849 + $0x21] sm:$0xff]
        %v4486 = vld [vmem:[%s3849 + $0x31] sm:$0xff]
        %v4487 = vld [vmem:[%s3849 + $0x41] sm:$0xff]
        %v4488 = vld [vmem:[%s3849 + $0x51] sm:$0xff]
        %v4489 = vld [vmem:[%s3849 + $0x61] sm:$0xff]
        %v4490 = vld [vmem:[%s3849 + $0x71] sm:$0xff]
        %v4491 = vpack.c.bf16 %v4484, %v4483
        %v4492 = vpack.c.bf16 %v4486, %v4485
        %v4493 = vpack.c.bf16 %v4488, %v4487
        %v4494 = vpack.c.bf16 %v4490, %v4489
        %v4495 = vld [vmem:[%s7 + $0x80] sm:$0xf]
        %v4496 = vld [vmem:[%s7 + $0x84] sm:$0xf]
        %v4497 = vld [vmem:[%s7 + $0x88] sm:$0xf]
        %v4498 = vld [vmem:[%s7 + $0x8c] sm:$0xf]
        %v4503 = vunpack.c.l.b16 %v4495
        %v4504 = vunpack.c.l.b16 %v4496
        %v4505 = vunpack.c.l.b16 %v4497
        %v4506 = vunpack.c.l.b16 %v4498
        %v4507 = vpack.c.b16 %v4504, %v4503
        %v4508 = vpack.c.b16 %v4506, %v4505
        %v4512 = vsel %vm3158, %v4491, 0
        %v4515 = vsel %vm3158, %v4492, 0
        %v4518 = vsel %vm3158, %v4493, 0
        %v4521 = vsel %vm3158, %v4494, 0
        %4523 = vmatpush.bf16.msra.mxu0 0
        %4524 = vmatpush.bf16.msra.mxu0 0
        %4525 = vmatpush.bf16.msra.mxu0 0
        %4526 = vmatpush.bf16.msra.mxu0 0
        %4527 = vmatpush.bf16.msra.mxu0 0
        %4528 = vmatpush.bf16.msra.mxu0 0
        %4529 = vmatpush.bf16.msra.mxu0 %v4508
        %4530 = vmatpush.bf16.msra.mxu0 %v4507
        %4531 = vmatmul.bf16.gmra.mxu0 %v4512
        %v4532 = vpop.f32.mrf.mxu0
        %v4533 = vadd.f32 0.0, %v4532
        %v4534 = vpop.f32.mrf.mxu0
        %v4535 = vadd.f32 0.0, %v4534
        %4536 = vmatmul.bf16.gmra.mxu0 %v4515
        %v4537 = vpop.f32.mrf.mxu0
        %v4538 = vadd.f32 0.0, %v4537
        %v4539 = vpop.f32.mrf.mxu0
        %v4540 = vadd.f32 0.0, %v4539
        %4541 = vmatmul.bf16.gmra.mxu0 %v4518
        %v4542 = vpop.f32.mrf.mxu0
        %v4543 = vadd.f32 0.0, %v4542
        %v4544 = vpop.f32.mrf.mxu0
        %v4545 = vadd.f32 0.0, %v4544
        %4546 = vmatmul.bf16.gmra.mxu0 %v4521
        %v4547 = vpop.f32.mrf.mxu0
        %v4548 = vadd.f32 0.0, %v4547
        %v4549 = vpop.f32.mrf.mxu0
        %v4550 = vadd.f32 0.0, %v4549
        %4551 = vdwg.mxu0
        %v4552 = vadd.f32 %v4475, %v4533
        %v4553 = vadd.f32 %v4476, %v4535
        %v4554 = vadd.f32 %v4477, %v4538
        %v4555 = vadd.f32 %v4478, %v4540
        %v4556 = vadd.f32 %v4479, %v4543
        %v4557 = vadd.f32 %v4480, %v4545
        %v4558 = vadd.f32 %v4481, %v4548
        %v4559 = vadd.f32 %v4482, %v4550
        %v4560 = vld [vmem:[%s8] sm:$0x1]
        %v4562 = vperm.slane %v4560, 0
        %v4564 = vadd.f32 %v4552, %v4562
        %v4565 = vadd.f32 %v4553, %v4562
        %v4566 = vadd.f32 %v4554, %v4562
        %v4567 = vadd.f32 %v4555, %v4562
        %v4568 = vadd.f32 %v4556, %v4562
        %v4569 = vadd.f32 %v4557, %v4562
        %v4570 = vadd.f32 %v4558, %v4562
        %v4571 = vadd.f32 %v4559, %v4562
        %v4572 = vmax.f32 %v4564, 0.0
        %v4573 = vmax.f32 %v4565, 0.0
        %v4574 = vmax.f32 %v4566, 0.0
        %v4575 = vmax.f32 %v4567, 0.0
        %v4576 = vmax.f32 %v4568, 0.0
        %v4577 = vmax.f32 %v4569, 0.0
        %v4578 = vmax.f32 %v4570, 0.0
        %v4579 = vmax.f32 %v4571, 0.0
        %v4580 = vpack.c.bf16 %v4573, %v4572
        %v4581 = vpack.c.bf16 %v4575, %v4574
        %v4582 = vpack.c.bf16 %v4577, %v4576
        %v4583 = vpack.c.bf16 %v4579, %v4578
        %v4584 = vld [vmem:[%s9] sm:$0xf]
        %v4585 = vld [vmem:[%s9 + $0x4] sm:$0xf]
        %v4586 = vld [vmem:[%s10] sm:$0x1]
        %v4588 = vperm.slane %v4586, 0
        %v4592 = vunpack.c.l.b16 %v4584
        %v4593 = vunpack.c.l.b16 %v4585
        %v4594 = vpack.c.b16 %v4593, %v4592
        %v4597 = vsel %vm445, %v4580, 0
        %v4600 = vsel %vm445, %v4581, 0
        %v4603 = vsel %vm445, %v4582, 0
        %v4606 = vsel %vm445, %v4583, 0
        %4608 = vmatpush.bf16.msra.mxu0 0
        %4609 = vmatpush.bf16.msra.mxu0 0
        %4610 = vmatpush.bf16.msra.mxu0 0
        %4611 = vmatpush.bf16.msra.mxu0 0
        %4612 = vmatpush.bf16.msra.mxu0 0
        %4613 = vmatpush.bf16.msra.mxu0 0
        %4614 = vmatpush.bf16.msra.mxu0 0
        %4615 = vmatpush.bf16.msra.mxu0 %v4594
        %4616 = vmatmul.bf16.gmra.mxu0 %v4597
        %v4617 = vpop.f32.mrf.mxu0
        %v4618 = vadd.f32 %v4588, %v4617
        %v4619 = vpop.f32.mrf.mxu0
        %v4620 = vadd.f32 %v4588, %v4619
        %4621 = vmatmul.bf16.gmra.mxu0 %v4600
        %v4622 = vpop.f32.mrf.mxu0
        %v4623 = vadd.f32 %v4588, %v4622
        %v4624 = vpop.f32.mrf.mxu0
        %v4625 = vadd.f32 %v4588, %v4624
        %4626 = vmatmul.bf16.gmra.mxu0 %v4603
        %v4627 = vpop.f32.mrf.mxu0
        %v4628 = vadd.f32 %v4588, %v4627
        %v4629 = vpop.f32.mrf.mxu0
        %v4630 = vadd.f32 %v4588, %v4629
        %4631 = vmatmul.bf16.gmra.mxu0 %v4606
        %v4632 = vpop.f32.mrf.mxu0
        %v4633 = vadd.f32 %v4588, %v4632
        %v4634 = vpop.f32.mrf.mxu0
        %v4635 = vadd.f32 %v4588, %v4634
        %4636 = vdwg.mxu0
        %v4637 = vmax.f32 %v4618, 0.0
        %v4638 = vmax.f32 %v4620, 0.0
        %v4639 = vmax.f32 %v4623, 0.0
        %v4640 = vmax.f32 %v4625, 0.0
        %v4641 = vmax.f32 %v4628, 0.0
        %v4642 = vmax.f32 %v4630, 0.0
        %v4643 = vmax.f32 %v4633, 0.0
        %v4644 = vmax.f32 %v4635, 0.0
        %4645 = vst.msk [vmem:[%s379] sm:$0xff] %vm3158, %v4637
        %4646 = vst.msk [vmem:[%s379 + $0x8] sm:$0xff] %vm3158, %v4638
        %4647 = vst.msk [vmem:[%s379 + $0x10] sm:$0xff] %vm3158, %v4639
        %4648 = vst.msk [vmem:[%s379 + $0x18] sm:$0xff] %vm3158, %v4640
        %4649 = vst.msk [vmem:[%s379 + $0x20] sm:$0xff] %vm3158, %v4641
        %4650 = vst.msk [vmem:[%s379 + $0x28] sm:$0xff] %vm3158, %v4642
        %4651 = vst.msk [vmem:[%s379 + $0x30] sm:$0xff] %vm3158, %v4643
        %4652 = vst.msk [vmem:[%s379 + $0x38] sm:$0xff] %vm3158, %v4644
        %s4653 = sand.u32 %s269, 1
        %s4654 = scalar_lea.sflag [#allocation6], %s4653
        %s4655 = sand.u32 %s269, 1
        %s4656 = smul.addr %s4655, 64
        %s4657 = scalar_lea.vmem [#allocation5], %s4656
        // Predicated region
        $region65: #{hgstem_forward.1} parent=63 // pred_check
          %p4658 = pneg %p279
        $region66: #{hgstem_forward.1} parent=63 // pred_check_branch
          %4660 = sbr.rel (%p4658) target = $region68
        $region67: #{hgstem_forward.1} parent=63 // pred_region
          %4662 = vsyncadd %s4654, 0
          %s4663 = smul.addr %s25, 8
          %s4664 = smul.addr %s4663, 8
          %s4665 = scalar_lea.hbm %s11, %s4664
          %s4666 = sshll.u32 %s4657, 4
          %s4667 = int_to_ptr.vmem [resolvable:$true] %s4666
          %s4668 = sshll.u32 %s4665, 4
          %s4669 = int_to_ptr.hbm [resolvable:$true] %s4668
          %4674 = dma.vmem_to_hbm [thread:$0]  %s4667, 1024, %s4669, %s4654, 128, 128, 8
        $region68: #{hgstem_forward.1} parent=63 // pred_fallthru
          _
      $region64: #{hgstem_forward.1} parent=5 // pred_fallthru
        _
      %p4675 = scmp.le.s32.totalorder 2, %s20
      // Predicated region
      $region69: #{hgstem_forward.1} parent=5 // pred_check
        %p4676 = pneg %p4675
      $region70: #{hgstem_forward.1} parent=5 // pred_check_branch
        %4678 = sbr.rel (%p4676) target = $region72
      $region71: #{hgstem_forward.1} parent=5 // pred_region
        %s4679 = ssub.s32 %s20, 2
        // Predicated region
        $region73: #{hgstem_forward.1} parent=71 // pred_check
          %p4680 = pneg %p285
        $region74: #{hgstem_forward.1} parent=71 // pred_check_branch
          %4682 = sbr.rel (%p4680) target = $region76
        $region75: #{hgstem_forward.1} parent=71 // pred_region
          %s4683 = sand.u32 %s270, 1
          %s4684 = scalar_lea.sflag [#allocation6], %s4683
          %s4685 = sand.u32 %s270, 1
          %s4686 = smul.addr %s4685, 64
          %s4687 = scalar_lea.vmem [#allocation5], %s4686
          %4689 = dma.done %s4684, 1024
        $region76: #{hgstem_forward.1} parent=71 // pred_fallthru
          _
      $region72: #{hgstem_forward.1} parent=5 // pred_fallthru
        _
    $region6: #{hgstem_forward.1} parent=1 // loop_footer
      %s24 = sadd.s32 1, %s20
    $region7: #{hgstem_forward.1} parent=1 // loop_footer_branch
      %19 = sbr.rel target = $region3
    $region8: #{hgstem_forward.1} parent=1 // loop_exit
      _
    %4690 = vsyncpa [#allocation6], 1
    %s4691 = scalar_lea.sflag [#allocation6], 1
    %4692 = vsyncpa %s4691, 1

</llo_original>
